<compile_context>
chip_gen: v5e
topology: v5e:2x2
jax: 0.10.0
libtpu: 0.0.40
codegen_flags: <defaults>
</compile_context>

<pallas_src>
import jax
import jax.numpy as jnp
from jax import lax
from jax.experimental import pallas as pl
from jax.experimental.pallas import tpu as pltpu


def _round_up(x, m):
    return ((x + m - 1) // m) * m


# ----------------------------------------------------------------------------
# Fused Pallas kernel (one grid step == B images)
# ----------------------------------------------------------------------------
def _make_down_conv_kernel(B, Hp, Wp, Ws, BASE, Rp, Cin, Cp):
    Mg = Hp * Ws                # GEMM rows per image (padded-width layout, incl. junk cols)
    DATA0 = BASE + Ws + 1       # first data row of the flattened padded activation (mult of 8)
    L = Mg + 2 * Ws             # wide-window length covering the 3 ky offsets

    def conv3x3_relu(ap_ref, slab_ref, w_ref, b_ref, C):
        """3x3 'same' conv + ReLU as ONE (B*Mg, 9*C) @ (9*C, Cp) MXU dot."""
        # Build the im2col slab.  Zero padding lives inside ap_ref, so every tap
        # is a contiguous row window; the kx shift is hoisted into one wide load
        # per kx, reused by the three sublane-aligned ky offsets.
        for kx in range(3):
            wide = ap_ref[:, BASE + kx:BASE + kx + L, :]            # (B, L, C)
            for ky in range(3):
                k = ky * 3 + kx
                slab_ref[:, :, k * C:(k + 1) * C] = wide[:, ky * Ws:ky * Ws + Mg, :]
        lhs = slab_ref[...].reshape(B * Mg, 9 * C)
        acc = jnp.dot(lhs, w_ref[...], preferred_element_type=jnp.float32)
        return jnp.maximum(acc + b_ref[...], 0.0)                   # (B*Mg, Cp) f32

    def kernel(x4_ref, w1_ref, b1_ref, w2_ref, b2_ref, o_ref,
               xpad_ref, hpad_ref, slab1_ref, slab2_ref):
        # ---- stage 1: 2x2 max-pool (4 taps grouped on lanes -> elementwise max)
        t = x4_ref[...].astype(jnp.float32)                         # (B, Rp, 4*Cin)
        p = jnp.maximum(jnp.maximum(t[:, :, 0:Cin], t[:, :, Cin:2 * Cin]),
                        jnp.maximum(t[:, :, 2 * Cin:3 * Cin], t[:, :, 3 * Cin:4 * Cin]))
        # Full aligned store; pad rows/cols in x4 are zero, so max()==0 there and
        # the padded pooled buffer gets its zero padding for free (no memset).
        xpad_ref[...] = p

        # ---- stage 2: conv1 + ReLU (single (B*Mg, 9*Cin) @ (9*Cin, Cp) GEMM)
        h1 = conv3x3_relu(xpad_ref, slab1_ref, w1_ref, b1_ref, Cin)

        # Junk columns (x >= Wp in the padded-width layout) land exactly on the
        # padding columns of hpad; zeroing them gives conv2 its zero padding.
        col = lax.broadcasted_iota(jnp.int32, (B * Mg, 1), 0) % Ws
        h1 = jnp.where(col < Wp, h1, 0.0)

        # Refresh only the never-written pad rows (~2*Ws rows top/bottom); the
        # data region is fully rewritten each step -> no full-buffer memset.
        hpad_ref[:, :DATA0, :] = jnp.zeros((B, DATA0, Cp), jnp.float32)
        hpad_ref[:, DATA0 + Mg:, :] = jnp.zeros((B, Rp - DATA0 - Mg, Cp), jnp.float32)
        hpad_ref[:, DATA0:DATA0 + Mg, :] = h1.reshape(B, Mg, Cp)    # aligned store

        # ---- stage 3: conv2 + ReLU (activation never leaves VMEM)
        h2 = conv3x3_relu(hpad_ref, slab2_ref, w2_ref, b2_ref, Cp)

        o_ref[...] = h2.reshape(B, Mg, Cp).astype(o_ref.dtype)

    return kernel


# ----------------------------------------------------------------------------
# Wrapper: boundary layout glue only; all compute is in the fused kernel
# ----------------------------------------------------------------------------
@jax.jit
def down_conv_forward(x, w1, b1, w2, b2):
    """DownConv.forward: MaxPool2d(2) -> Conv3x3+ReLU -> Conv3x3+ReLU (NCHW)."""
    N, Cin, H, W = x.shape
    Cout, Cin_w, KH, KW = w1.shape
    # Only kernel_size=3 / stride=1 / padding=1 is implemented (see NOTE above).
    assert (KH, KW) == (3, 3) and Cin_w == Cin, "fused kernel assumes 3x3, stride 1, pad 1"
    assert w2.shape == (Cout, Cout, 3, 3)

    Hp, Wp = H // 2, W // 2                        # MaxPool2d(2) floors odd sizes
    assert Hp >= 1 and Wp >= 1

    # Geometry of the flattened, zero-padded "padded-width" activation layout.
    Ws = _round_up(Wp + 2, 8)                      # row stride incl. pad cols (mult of 8)
    BASE = (-(Ws + 1)) % 8                         # extra top rows -> data region sublane-aligned
    Mg = Hp * Ws                                   # GEMM rows per image (incl. junk cols)
    Rp = _round_up(BASE + (Hp + 2) * Ws + 2, 8)    # buffer rows (+2 covers last-row tap overrun)

    # Channel padding: lane-dense 128 only when Cout is already large.
    Cp = _round_up(Cout, 128) if Cout >= 128 else _round_up(Cout, 8)

    # Batch folding: B images per grid step so the GEMM M dim (B*Mg) fills the MXU.
    B = min(N, max(1, pl.cdiv(256, Mg)))
    while N % B:
        B -= 1
    grid = (N // B,)

    # ---- input boundary transform: NCHW -> padded pool-tap layout (N, Rp, 4*Cin)
    xf = x.astype(jnp.float32)
    xc = xf[:, :, :2 * Hp, :2 * Wp]
    x4 = xc.reshape(N, Cin, Hp, 2, Wp, 2).transpose(0, 2, 4, 3, 5, 1)
    x4 = x4.reshape(N, Hp, Wp, 4 * Cin)                              # lanes = (dy, dx, ci)
    x4 = jnp.pad(x4, ((0, 0), (1, 1), (1, Ws - Wp - 1), (0, 0)))     # spatial zero padding
    x4 = x4.reshape(N, (Hp + 2) * Ws, 4 * Cin)
    x4 = jnp.pad(x4, ((0, 0), (BASE, Rp - BASE - (Hp + 2) * Ws), (0, 0)))

    # ---- weights as im2col GEMM matrices, rows ordered (ky, kx, ci) ----------
    w1m = jnp.transpose(w1, (2, 3, 1, 0)).reshape(9 * Cin, Cout).astype(jnp.float32)
    w1m = jnp.pad(w1m, ((0, 0), (0, Cp - Cout)))
    b1m = jnp.pad(b1.astype(jnp.float32), (0, Cp - Cout)).reshape(1, Cp)
    w2m = jnp.transpose(w2, (2, 3, 1, 0)).astype(jnp.float32)        # (3, 3, Cout, Cout)
    w2m = jnp.pad(w2m, ((0, 0), (0, 0), (0, Cp - Cout), (0, Cp - Cout)))
    w2m = w2m.reshape(9 * Cp, Cp)
    b2m = jnp.pad(b2.astype(jnp.float32), (0, Cp - Cout)).reshape(1, Cp)

    kernel = _make_down_conv_kernel(B, Hp, Wp, Ws, BASE, Rp, Cin, Cp)
    out = pl.pallas_call(
        kernel,
        out_shape=jax.ShapeDtypeStruct((N, Mg, Cp), jnp.float32),
        grid_spec=pltpu.PrefetchScalarGridSpec(
            num_scalar_prefetch=0,
            grid=grid,
            in_specs=[
                pl.BlockSpec((B, Rp, 4 * Cin), lambda n: (n, 0, 0)),   # pool taps (padded)
                pl.BlockSpec((9 * Cin, Cp), lambda n: (0, 0)),         # w1 (im2col)
                pl.BlockSpec((1, Cp), lambda n: (0, 0)),               # b1
                pl.BlockSpec((9 * Cp, Cp), lambda n: (0, 0)),          # w2 (im2col)
                pl.BlockSpec((1, Cp), lambda n: (0, 0)),               # b2
            ],
            out_specs=pl.BlockSpec((B, Mg, Cp), lambda n: (n, 0, 0)),
            scratch_shapes=[
                pltpu.VMEM((B, Rp, Cin), jnp.float32),        # padded pooled input
                pltpu.VMEM((B, Rp, Cp), jnp.float32),         # padded conv1 output
                pltpu.VMEM((B, Mg, 9 * Cin), jnp.float32),    # conv1 im2col slab
                pltpu.VMEM((B, Mg, 9 * Cp), jnp.float32),     # conv2 im2col slab
            ],
        ),
        compiler_params=pltpu.CompilerParams(
            dimension_semantics=("parallel",)),
    )(x4, w1m, b1m, w2m, b2m)

    # ---- output boundary transform: (N, Hp*Ws, Cp) -> NCHW (N, Cout, Hp, Wp) --
    out = out.reshape(N, Hp, Ws, Cp)[:, :, :Wp, :Cout]
    return out.transpose(0, 3, 1, 2).astype(x.dtype)


# ----------------------------------------------------------------------------
# Pure-JAX reference (for correctness check)
# ----------------------------------------------------------------------------
def _ref_forward(x, w1, b1, w2, b2):
    N, C, H, W = x.shape
    Hp, Wp = H // 2, W // 2
    xp = x[:, :, :2 * Hp, :2 * Wp].reshape(N, C, Hp, 2, Wp, 2).max(axis=(3, 5))

    def conv_relu(t, w, b):
        y = lax.conv_general_dilated(
            t, w, window_strides=(1, 1), padding=((1, 1), (1, 1)),
            dimension_numbers=("NCHW", "OIHW", "NCHW"))
        return jnp.maximum(y + b[None, :, None, None], 0.0)

    return conv_relu(conv_relu(xp, w1, b1), w2, b2)


# ----------------------------------------------------------------------------
# Main
# ----------------------------------------------------------------------------
if __name__ == "__main__":
    # DownConv(in_channels=4, out_channels=8, kernel_size=3, padding=1, stride=1)
    N, Cin, H, W = 2, 4, 16, 16
    Cout = 8

    key = jax.random.PRNGKey(0)
    kx_, kw1, kb1, kw2, kb2 = jax.random.split(key, 5)

    x = jax.random.normal(kx_, (N, Cin, H, W), dtype=jnp.float32)
    # deterministic parameter init (synthetic, not a checkpoint load)
    w1 = jax.random.normal(kw1, (Cout, Cin, 3, 3), dtype=jnp.float32) * 0.1
    b1 = jax.random.normal(kb1, (Cout,), dtype=jnp.float32) * 0.1
    w2 = jax.random.normal(kw2, (Cout, Cout, 3, 3), dtype=jnp.float32) * 0.1
    b2 = jax.random.normal(kb2, (Cout,), dtype=jnp.float32) * 0.1

    out = down_conv_forward(x, w1, b1, w2, b2)
    out = jax.block_until_ready(out)

    ref = _ref_forward(x, w1, b1, w2, b2)
    assert out.shape == (N, Cout, H // 2, W // 2), out.shape
    max_err = float(jnp.max(jnp.abs(out - ref)))
    assert jnp.allclose(out, ref, atol=1e-3, rtol=1e-3), max_err

    print("KERNEL_OK")
</pallas_src>

<mosaic_0001>
module attributes {stable_mosaic.version = 11 : i64} {
  func.func @kernel(%arg0: i32, %arg1: memref<2x176x16xf32, #tpu.memory_space<vmem>>, %arg2: memref<36x8xf32, #tpu.memory_space<vmem>>, %arg3: memref<1x8xf32, #tpu.memory_space<vmem>>, %arg4: memref<72x8xf32, #tpu.memory_space<vmem>>, %arg5: memref<1x8xf32, #tpu.memory_space<vmem>>, %arg6: memref<2x128x8xf32, #tpu.memory_space<vmem>>, %arg7: memref<2x176x4xf32, #tpu.memory_space<vmem>>, %arg8: memref<2x176x8xf32, #tpu.memory_space<vmem>>, %arg9: memref<2x128x36xf32, #tpu.memory_space<vmem>>, %arg10: memref<2x128x72xf32, #tpu.memory_space<vmem>>) attributes {dimension_semantics = [#tpu.dimension_semantics<parallel>], iteration_bounds = array<i64: 1>, scalar_prefetch = 0 : i64, scratch_operands = 4 : i64, tpu.core_type = #tpu.core_type<tc>, window_params = [{transform_indices = @transform_0, window_bounds = array<i64: 2, 176, 16>}, {pipeline_mode = #tpu.pipeline_mode<synchronous>, transform_indices = @transform_1, window_bounds = array<i64: 36, 8>}, {pipeline_mode = #tpu.pipeline_mode<synchronous>, transform_indices = @transform_2, window_bounds = array<i64: 1, 8>}, {pipeline_mode = #tpu.pipeline_mode<synchronous>, transform_indices = @transform_3, window_bounds = array<i64: 72, 8>}, {pipeline_mode = #tpu.pipeline_mode<synchronous>, transform_indices = @transform_4, window_bounds = array<i64: 1, 8>}, {transform_indices = @transform_5, window_bounds = array<i64: 2, 128, 8>}]} {
    %c0 = arith.constant 0 : index
    %c0_0 = arith.constant 0 : index
    %c0_1 = arith.constant 0 : index
    %0 = vector.load %arg1[%c0, %c0_0, %c0_1] : memref<2x176x16xf32, #tpu.memory_space<vmem>>, vector<2x176x16xf32>
    %1 = vector.extract_strided_slice %0 {offsets = [0, 0, 0], sizes = [2, 176, 4], strides = [1, 1, 1]} : vector<2x176x16xf32> to vector<2x176x4xf32>
    %2 = vector.extract_strided_slice %0 {offsets = [0, 0, 4], sizes = [2, 176, 4], strides = [1, 1, 1]} : vector<2x176x16xf32> to vector<2x176x4xf32>
    %3 = arith.maximumf %1, %2 : vector<2x176x4xf32>
    %4 = vector.extract_strided_slice %0 {offsets = [0, 0, 8], sizes = [2, 176, 4], strides = [1, 1, 1]} : vector<2x176x16xf32> to vector<2x176x4xf32>
    %5 = vector.extract_strided_slice %0 {offsets = [0, 0, 12], sizes = [2, 176, 4], strides = [1, 1, 1]} : vector<2x176x16xf32> to vector<2x176x4xf32>
    %6 = arith.maximumf %4, %5 : vector<2x176x4xf32>
    %7 = arith.maximumf %3, %6 : vector<2x176x4xf32>
    %c0_2 = arith.constant 0 : index
    %c0_3 = arith.constant 0 : index
    %c0_4 = arith.constant 0 : index
    %8 = vector.load %arg7[%c0_2, %c0_3, %c0_4] : memref<2x176x4xf32, #tpu.memory_space<vmem>>, vector<2x176x4xf32>
    tpu.vector_store %arg7[%c0_2, %c0_3, %c0_4], %7 {strides = array<i32>} : memref<2x176x4xf32, #tpu.memory_space<vmem>>, vector<2x176x4xf32>,
    %c0_5 = arith.constant 0 : index
    %c7 = arith.constant 7 : index
    %c0_6 = arith.constant 0 : index
    %9 = vector.load %arg7[%c0_5, %c7, %c0_6] : memref<2x176x4xf32, #tpu.memory_space<vmem>>, vector<2x160x4xf32>
    %10 = vector.extract_strided_slice %9 {offsets = [0, 0, 0], sizes = [2, 128, 4], strides = [1, 1, 1]} : vector<2x160x4xf32> to vector<2x128x4xf32>
    %c0_7 = arith.constant 0 : index
    %c0_8 = arith.constant 0 : index
    %c0_9 = arith.constant 0 : index
    %11 = vector.load %arg9[%c0_7, %c0_8, %c0_9] : memref<2x128x36xf32, #tpu.memory_space<vmem>>, vector<2x128x4xf32>
    tpu.vector_store %arg9[%c0_7, %c0_8, %c0_9], %10 {strides = array<i32>} : memref<2x128x36xf32, #tpu.memory_space<vmem>>, vector<2x128x4xf32>,
    %12 = vector.extract_strided_slice %9 {offsets = [0, 16, 0], sizes = [2, 128, 4], strides = [1, 1, 1]} : vector<2x160x4xf32> to vector<2x128x4xf32>
    %c0_10 = arith.constant 0 : index
    %c0_11 = arith.constant 0 : index
    %c12 = arith.constant 12 : index
    %13 = vector.load %arg9[%c0_10, %c0_11, %c12] : memref<2x128x36xf32, #tpu.memory_space<vmem>>, vector<2x128x4xf32>
    tpu.vector_store %arg9[%c0_10, %c0_11, %c12], %12 {strides = array<i32>} : memref<2x128x36xf32, #tpu.memory_space<vmem>>, vector<2x128x4xf32>,
    %14 = vector.extract_strided_slice %9 {offsets = [0, 32, 0], sizes = [2, 128, 4], strides = [1, 1, 1]} : vector<2x160x4xf32> to vector<2x128x4xf32>
    %c0_12 = arith.constant 0 : index
    %c0_13 = arith.constant 0 : index
    %c24 = arith.constant 24 : index
    %15 = vector.load %arg9[%c0_12, %c0_13, %c24] : memref<2x128x36xf32, #tpu.memory_space<vmem>>, vector<2x128x4xf32>
    tpu.vector_store %arg9[%c0_12, %c0_13, %c24], %14 {strides = array<i32>} : memref<2x128x36xf32, #tpu.memory_space<vmem>>, vector<2x128x4xf32>,
    %c0_14 = arith.constant 0 : index
    %c8 = arith.constant 8 : index
    %c0_15 = arith.constant 0 : index
    %16 = vector.load %arg7[%c0_14, %c8, %c0_15] : memref<2x176x4xf32, #tpu.memory_space<vmem>>, vector<2x160x4xf32>
    %17 = vector.extract_strided_slice %16 {offsets = [0, 0, 0], sizes = [2, 128, 4], strides = [1, 1, 1]} : vector<2x160x4xf32> to vector<2x128x4xf32>
    %c0_16 = arith.constant 0 : index
    %c0_17 = arith.constant 0 : index
    %c4 = arith.constant 4 : index
    %18 = vector.load %arg9[%c0_16, %c0_17, %c4] : memref<2x128x36xf32, #tpu.memory_space<vmem>>, vector<2x128x4xf32>
    tpu.vector_store %arg9[%c0_16, %c0_17, %c4], %17 {strides = array<i32>} : memref<2x128x36xf32, #tpu.memory_space<vmem>>, vector<2x128x4xf32>,
    %19 = vector.extract_strided_slice %16 {offsets = [0, 16, 0], sizes = [2, 128, 4], strides = [1, 1, 1]} : vector<2x160x4xf32> to vector<2x128x4xf32>
    %c0_18 = arith.constant 0 : index
    %c0_19 = arith.constant 0 : index
    %c16 = arith.constant 16 : index
    %20 = vector.load %arg9[%c0_18, %c0_19, %c16] : memref<2x128x36xf32, #tpu.memory_space<vmem>>, vector<2x128x4xf32>
    tpu.vector_store %arg9[%c0_18, %c0_19, %c16], %19 {strides = array<i32>} : memref<2x128x36xf32, #tpu.memory_space<vmem>>, vector<2x128x4xf32>,
    %21 = vector.extract_strided_slice %16 {offsets = [0, 32, 0], sizes = [2, 128, 4], strides = [1, 1, 1]} : vector<2x160x4xf32> to vector<2x128x4xf32>
    %c0_20 = arith.constant 0 : index
    %c0_21 = arith.constant 0 : index
    %c28 = arith.constant 28 : index
    %22 = vector.load %arg9[%c0_20, %c0_21, %c28] : memref<2x128x36xf32, #tpu.memory_space<vmem>>, vector<2x128x4xf32>
    tpu.vector_store %arg9[%c0_20, %c0_21, %c28], %21 {strides = array<i32>} : memref<2x128x36xf32, #tpu.memory_space<vmem>>, vector<2x128x4xf32>,
    %c0_22 = arith.constant 0 : index
    %c9 = arith.constant 9 : index
    %c0_23 = arith.constant 0 : index
    %23 = vector.load %arg7[%c0_22, %c9, %c0_23] : memref<2x176x4xf32, #tpu.memory_space<vmem>>, vector<2x160x4xf32>
    %24 = vector.extract_strided_slice %23 {offsets = [0, 0, 0], sizes = [2, 128, 4], strides = [1, 1, 1]} : vector<2x160x4xf32> to vector<2x128x4xf32>
    %c0_24 = arith.constant 0 : index
    %c0_25 = arith.constant 0 : index
    %c8_26 = arith.constant 8 : index
    %25 = vector.load %arg9[%c0_24, %c0_25, %c8_26] : memref<2x128x36xf32, #tpu.memory_space<vmem>>, vector<2x128x4xf32>
    tpu.vector_store %arg9[%c0_24, %c0_25, %c8_26], %24 {strides = array<i32>} : memref<2x128x36xf32, #tpu.memory_space<vmem>>, vector<2x128x4xf32>,
    %26 = vector.extract_strided_slice %23 {offsets = [0, 16, 0], sizes = [2, 128, 4], strides = [1, 1, 1]} : vector<2x160x4xf32> to vector<2x128x4xf32>
    %c0_27 = arith.constant 0 : index
    %c0_28 = arith.constant 0 : index
    %c20 = arith.constant 20 : index
    %27 = vector.load %arg9[%c0_27, %c0_28, %c20] : memref<2x128x36xf32, #tpu.memory_space<vmem>>, vector<2x128x4xf32>
    tpu.vector_store %arg9[%c0_27, %c0_28, %c20], %26 {strides = array<i32>} : memref<2x128x36xf32, #tpu.memory_space<vmem>>, vector<2x128x4xf32>,
    %28 = vector.extract_strided_slice %23 {offsets = [0, 32, 0], sizes = [2, 128, 4], strides = [1, 1, 1]} : vector<2x160x4xf32> to vector<2x128x4xf32>
    %c0_29 = arith.constant 0 : index
    %c0_30 = arith.constant 0 : index
    %c32 = arith.constant 32 : index
    %29 = vector.load %arg9[%c0_29, %c0_30, %c32] : memref<2x128x36xf32, #tpu.memory_space<vmem>>, vector<2x128x4xf32>
    tpu.vector_store %arg9[%c0_29, %c0_30, %c32], %28 {strides = array<i32>} : memref<2x128x36xf32, #tpu.memory_space<vmem>>, vector<2x128x4xf32>,
    %c0_31 = arith.constant 0 : index
    %c0_32 = arith.constant 0 : index
    %c0_33 = arith.constant 0 : index
    %30 = vector.load %arg9[%c0_31, %c0_32, %c0_33] : memref<2x128x36xf32, #tpu.memory_space<vmem>>, vector<2x128x36xf32>
    %31 = vector.shape_cast %30 : vector<2x128x36xf32> to vector<256x36xf32>
    %c0_34 = arith.constant 0 : index
    %c0_35 = arith.constant 0 : index
    %32 = vector.load %arg2[%c0_34, %c0_35] : memref<36x8xf32, #tpu.memory_space<vmem>>, vector<36x8xf32>
    %cst = arith.constant dense<0.000000e+00> : vector<256x8xf32>
    %33 = tpu.matmul %31, %32, %cst {dimension_numbers = #tpu.dot_dimension_numbers<[1], [0], [0], [1], [0, 0, 1, 1], [], []>} : vector<256x36xf32>, vector<36x8xf32>, vector<256x8xf32> -> vector<256x8xf32>
    %c0_36 = arith.constant 0 : index
    %c0_37 = arith.constant 0 : index
    %34 = vector.load %arg3[%c0_36, %c0_37] : memref<1x8xf32, #tpu.memory_space<vmem>>, vector<1x8xf32>
    %35 = vector.broadcast %34 : vector<1x8xf32> to vector<256x8xf32>
    %36 = arith.addf %33, %35 : vector<256x8xf32>
    %cst_38 = arith.constant 0.000000e+00 : f32
    %37 = vector.broadcast %cst_38 : f32 to vector<256x8xf32>
    %38 = arith.maximumf %36, %37 : vector<256x8xf32>
    %39 = tpu.iota {dimensions = array<i32: 0>} : vector<256x1xi32>
    %c16_i32 = arith.constant 16 : i32
    %c0_i32 = arith.constant 0 : i32
    %40 = arith.cmpi eq, %c16_i32, %c0_i32 : i32
    %c1_i32 = arith.constant 1 : i32
    %41 = arith.select %40, %c1_i32, %c16_i32 : i32
    %42 = vector.broadcast %41 : i32 to vector<256x1xi32>
    %43 = arith.remsi %39, %42 : vector<256x1xi32>
    %c0_i32_39 = arith.constant 0 : i32
    %44 = vector.broadcast %c0_i32_39 : i32 to vector<256x1xi32>
    %45 = arith.cmpi ne, %43, %44 : vector<256x1xi32>
    %c0_i32_40 = arith.constant 0 : i32
    %46 = vector.broadcast %c0_i32_40 : i32 to vector<256x1xi32>
    %47 = arith.cmpi slt, %43, %46 : vector<256x1xi32>
    %c0_i32_41 = arith.constant 0 : i32
    %48 = arith.cmpi slt, %41, %c0_i32_41 : i32
    %49 = vector.broadcast %48 : i1 to vector<256x1xi1>
    %50 = vector.broadcast %49 : vector<256x1xi1> to vector<256x1xi1>
    %51 = arith.xori %47, %50 : vector<256x1xi1>
    %52 = arith.andi %51, %45 : vector<256x1xi1>
    %53 = vector.broadcast %41 : i32 to vector<256x1xi32>
    %54 = arith.addi %43, %53 : vector<256x1xi32>
    %55 = arith.select %52, %54, %43 : vector<256x1xi1>, vector<256x1xi32>
    %c8_i32 = arith.constant 8 : i32
    %56 = vector.broadcast %c8_i32 : i32 to vector<256x1xi32>
    %57 = arith.cmpi slt, %55, %56 : vector<256x1xi32>
    %cst_42 = arith.constant 0.000000e+00 : f32
    %58 = vector.shape_cast %57 : vector<256x1xi1> to vector<256x1xi1>
    %59 = vector.broadcast %58 : vector<256x1xi1> to vector<256x8xi1>
    %60 = vector.broadcast %cst_42 : f32 to vector<256x8xf32>
    %61 = arith.select %59, %38, %60 : vector<256x8xi1>, vector<256x8xf32>
    %cst_43 = arith.constant 0.000000e+00 : f32
    %62 = vector.broadcast %cst_43 : f32 to vector<2x24x8xf32>
    %c0_44 = arith.constant 0 : index
    %c0_45 = arith.constant 0 : index
    %c0_46 = arith.constant 0 : index
    %63 = vector.load %arg8[%c0_44, %c0_45, %c0_46] : memref<2x176x8xf32, #tpu.memory_space<vmem>>, vector<2x24x8xf32>
    tpu.vector_store %arg8[%c0_44, %c0_45, %c0_46], %62 {strides = array<i32>} : memref<2x176x8xf32, #tpu.memory_space<vmem>>, vector<2x24x8xf32>,
    %cst_47 = arith.constant 0.000000e+00 : f32
    %64 = vector.broadcast %cst_47 : f32 to vector<2x24x8xf32>
    %c0_48 = arith.constant 0 : index
    %c152 = arith.constant 152 : index
    %c0_49 = arith.constant 0 : index
    %65 = vector.load %arg8[%c0_48, %c152, %c0_49] : memref<2x176x8xf32, #tpu.memory_space<vmem>>, vector<2x24x8xf32>
    tpu.vector_store %arg8[%c0_48, %c152, %c0_49], %64 {strides = array<i32>} : memref<2x176x8xf32, #tpu.memory_space<vmem>>, vector<2x24x8xf32>,
    %66 = vector.shape_cast %61 : vector<256x8xf32> to vector<2x128x8xf32>
    %c0_50 = arith.constant 0 : index
    %c24_51 = arith.constant 24 : index
    %c0_52 = arith.constant 0 : index
    %67 = vector.load %arg8[%c0_50, %c24_51, %c0_52] : memref<2x176x8xf32, #tpu.memory_space<vmem>>, vector<2x128x8xf32>
    tpu.vector_store %arg8[%c0_50, %c24_51, %c0_52], %66 {strides = array<i32>} : memref<2x176x8xf32, #tpu.memory_space<vmem>>, vector<2x128x8xf32>,
    %c0_53 = arith.constant 0 : index
    %c7_54 = arith.constant 7 : index
    %c0_55 = arith.constant 0 : index
    %68 = vector.load %arg8[%c0_53, %c7_54, %c0_55] : memref<2x176x8xf32, #tpu.memory_space<vmem>>, vector<2x160x8xf32>
    %69 = vector.extract_strided_slice %68 {offsets = [0, 0, 0], sizes = [2, 128, 8], strides = [1, 1, 1]} : vector<2x160x8xf32> to vector<2x128x8xf32>
    %c0_56 = arith.constant 0 : index
    %c0_57 = arith.constant 0 : index
    %c0_58 = arith.constant 0 : index
    %70 = vector.load %arg10[%c0_56, %c0_57, %c0_58] : memref<2x128x72xf32, #tpu.memory_space<vmem>>, vector<2x128x8xf32>
    tpu.vector_store %arg10[%c0_56, %c0_57, %c0_58], %69 {strides = array<i32>} : memref<2x128x72xf32, #tpu.memory_space<vmem>>, vector<2x128x8xf32>,
    %71 = vector.extract_strided_slice %68 {offsets = [0, 16, 0], sizes = [2, 128, 8], strides = [1, 1, 1]} : vector<2x160x8xf32> to vector<2x128x8xf32>
    %c0_59 = arith.constant 0 : index
    %c0_60 = arith.constant 0 : index
    %c24_61 = arith.constant 24 : index
    %72 = vector.load %arg10[%c0_59, %c0_60, %c24_61] : memref<2x128x72xf32, #tpu.memory_space<vmem>>, vector<2x128x8xf32>
    tpu.vector_store %arg10[%c0_59, %c0_60, %c24_61], %71 {strides = array<i32>} : memref<2x128x72xf32, #tpu.memory_space<vmem>>, vector<2x128x8xf32>,
    %73 = vector.extract_strided_slice %68 {offsets = [0, 32, 0], sizes = [2, 128, 8], strides = [1, 1, 1]} : vector<2x160x8xf32> to vector<2x128x8xf32>
    %c0_62 = arith.constant 0 : index
    %c0_63 = arith.constant 0 : index
    %c48 = arith.constant 48 : index
    %74 = vector.load %arg10[%c0_62, %c0_63, %c48] : memref<2x128x72xf32, #tpu.memory_space<vmem>>, vector<2x128x8xf32>
    tpu.vector_store %arg10[%c0_62, %c0_63, %c48], %73 {strides = array<i32>} : memref<2x128x72xf32, #tpu.memory_space<vmem>>, vector<2x128x8xf32>,
    %c0_64 = arith.constant 0 : index
    %c8_65 = arith.constant 8 : index
    %c0_66 = arith.constant 0 : index
    %75 = vector.load %arg8[%c0_64, %c8_65, %c0_66] : memref<2x176x8xf32, #tpu.memory_space<vmem>>, vector<2x160x8xf32>
    %76 = vector.extract_strided_slice %75 {offsets = [0, 0, 0], sizes = [2, 128, 8], strides = [1, 1, 1]} : vector<2x160x8xf32> to vector<2x128x8xf32>
    %c0_67 = arith.constant 0 : index
    %c0_68 = arith.constant 0 : index
    %c8_69 = arith.constant 8 : index
    %77 = vector.load %arg10[%c0_67, %c0_68, %c8_69] : memref<2x128x72xf32, #tpu.memory_space<vmem>>, vector<2x128x8xf32>
    tpu.vector_store %arg10[%c0_67, %c0_68, %c8_69], %76 {strides = array<i32>} : memref<2x128x72xf32, #tpu.memory_space<vmem>>, vector<2x128x8xf32>,
    %78 = vector.extract_strided_slice %75 {offsets = [0, 16, 0], sizes = [2, 128, 8], strides = [1, 1, 1]} : vector<2x160x8xf32> to vector<2x128x8xf32>
    %c0_70 = arith.constant 0 : index
    %c0_71 = arith.constant 0 : index
    %c32_72 = arith.constant 32 : index
    %79 = vector.load %arg10[%c0_70, %c0_71, %c32_72] : memref<2x128x72xf32, #tpu.memory_space<vmem>>, vector<2x128x8xf32>
    tpu.vector_store %arg10[%c0_70, %c0_71, %c32_72], %78 {strides = array<i32>} : memref<2x128x72xf32, #tpu.memory_space<vmem>>, vector<2x128x8xf32>,
    %80 = vector.extract_strided_slice %75 {offsets = [0, 32, 0], sizes = [2, 128, 8], strides = [1, 1, 1]} : vector<2x160x8xf32> to vector<2x128x8xf32>
    %c0_73 = arith.constant 0 : index
    %c0_74 = arith.constant 0 : index
    %c56 = arith.constant 56 : index
    %81 = vector.load %arg10[%c0_73, %c0_74, %c56] : memref<2x128x72xf32, #tpu.memory_space<vmem>>, vector<2x128x8xf32>
    tpu.vector_store %arg10[%c0_73, %c0_74, %c56], %80 {strides = array<i32>} : memref<2x128x72xf32, #tpu.memory_space<vmem>>, vector<2x128x8xf32>,
    %c0_75 = arith.constant 0 : index
    %c9_76 = arith.constant 9 : index
    %c0_77 = arith.constant 0 : index
    %82 = vector.load %arg8[%c0_75, %c9_76, %c0_77] : memref<2x176x8xf32, #tpu.memory_space<vmem>>, vector<2x160x8xf32>
    %83 = vector.extract_strided_slice %82 {offsets = [0, 0, 0], sizes = [2, 128, 8], strides = [1, 1, 1]} : vector<2x160x8xf32> to vector<2x128x8xf32>
    %c0_78 = arith.constant 0 : index
    %c0_79 = arith.constant 0 : index
    %c16_80 = arith.constant 16 : index
    %84 = vector.load %arg10[%c0_78, %c0_79, %c16_80] : memref<2x128x72xf32, #tpu.memory_space<vmem>>, vector<2x128x8xf32>
    tpu.vector_store %arg10[%c0_78, %c0_79, %c16_80], %83 {strides = array<i32>} : memref<2x128x72xf32, #tpu.memory_space<vmem>>, vector<2x128x8xf32>,
    %85 = vector.extract_strided_slice %82 {offsets = [0, 16, 0], sizes = [2, 128, 8], strides = [1, 1, 1]} : vector<2x160x8xf32> to vector<2x128x8xf32>
    %c0_81 = arith.constant 0 : index
    %c0_82 = arith.constant 0 : index
    %c40 = arith.constant 40 : index
    %86 = vector.load %arg10[%c0_81, %c0_82, %c40] : memref<2x128x72xf32, #tpu.memory_space<vmem>>, vector<2x128x8xf32>
    tpu.vector_store %arg10[%c0_81, %c0_82, %c40], %85 {strides = array<i32>} : memref<2x128x72xf32, #tpu.memory_space<vmem>>, vector<2x128x8xf32>,
    %87 = vector.extract_strided_slice %82 {offsets = [0, 32, 0], sizes = [2, 128, 8], strides = [1, 1, 1]} : vector<2x160x8xf32> to vector<2x128x8xf32>
    %c0_83 = arith.constant 0 : index
    %c0_84 = arith.constant 0 : index
    %c64 = arith.constant 64 : index
    %88 = vector.load %arg10[%c0_83, %c0_84, %c64] : memref<2x128x72xf32, #tpu.memory_space<vmem>>, vector<2x128x8xf32>
    tpu.vector_store %arg10[%c0_83, %c0_84, %c64], %87 {strides = array<i32>} : memref<2x128x72xf32, #tpu.memory_space<vmem>>, vector<2x128x8xf32>,
    %c0_85 = arith.constant 0 : index
    %c0_86 = arith.constant 0 : index
    %c0_87 = arith.constant 0 : index
    %89 = vector.load %arg10[%c0_85, %c0_86, %c0_87] : memref<2x128x72xf32, #tpu.memory_space<vmem>>, vector<2x128x72xf32>
    %90 = vector.shape_cast %89 : vector<2x128x72xf32> to vector<256x72xf32>
    %c0_88 = arith.constant 0 : index
    %c0_89 = arith.constant 0 : index
    %91 = vector.load %arg4[%c0_88, %c0_89] : memref<72x8xf32, #tpu.memory_space<vmem>>, vector<72x8xf32>
    %cst_90 = arith.constant dense<0.000000e+00> : vector<256x8xf32>
    %92 = tpu.matmul %90, %91, %cst_90 {dimension_numbers = #tpu.dot_dimension_numbers<[1], [0], [0], [1], [0, 0, 1, 1], [], []>} : vector<256x72xf32>, vector<72x8xf32>, vector<256x8xf32> -> vector<256x8xf32>
    %c0_91 = arith.constant 0 : index
    %c0_92 = arith.constant 0 : index
    %93 = vector.load %arg5[%c0_91, %c0_92] : memref<1x8xf32, #tpu.memory_space<vmem>>, vector<1x8xf32>
    %94 = vector.broadcast %93 : vector<1x8xf32> to vector<256x8xf32>
    %95 = arith.addf %92, %94 : vector<256x8xf32>
    %cst_93 = arith.constant 0.000000e+00 : f32
    %96 = vector.broadcast %cst_93 : f32 to vector<256x8xf32>
    %97 = arith.maximumf %95, %96 : vector<256x8xf32>
    %98 = vector.shape_cast %97 : vector<256x8xf32> to vector<2x128x8xf32>
    %c0_94 = arith.constant 0 : index
    %c0_95 = arith.constant 0 : index
    %c0_96 = arith.constant 0 : index
    %99 = vector.load %arg6[%c0_94, %c0_95, %c0_96] : memref<2x128x8xf32, #tpu.memory_space<vmem>>, vector<2x128x8xf32>
    tpu.vector_store %arg6[%c0_94, %c0_95, %c0_96], %98 {strides = array<i32>} : memref<2x128x8xf32, #tpu.memory_space<vmem>>, vector<2x128x8xf32>,
    return
  }
  func.func @transform_0(%arg0: i32) -> (i32, i32, i32) {
    %c0_i32 = arith.constant 0 : i32
    %c0_i32_0 = arith.constant 0 : i32
    %c0_i32_1 = arith.constant 0 : i32
    return %arg0, %c0_i32, %c0_i32_0 : i32, i32, i32
  }
  func.func @transform_1(%arg0: i32) -> (i32, i32) {
    %c0_i32 = arith.constant 0 : i32
    %c0_i32_0 = arith.constant 0 : i32
    %c0_i32_1 = arith.constant 0 : i32
    return %c0_i32, %c0_i32_0 : i32, i32
  }
  func.func @transform_2(%arg0: i32) -> (i32, i32) {
    %c0_i32 = arith.constant 0 : i32
    %c0_i32_0 = arith.constant 0 : i32
    %c0_i32_1 = arith.constant 0 : i32
    return %c0_i32, %c0_i32_0 : i32, i32
  }
  func.func @transform_3(%arg0: i32) -> (i32, i32) {
    %c0_i32 = arith.constant 0 : i32
    %c0_i32_0 = arith.constant 0 : i32
    %c0_i32_1 = arith.constant 0 : i32
    return %c0_i32, %c0_i32_0 : i32, i32
  }
  func.func @transform_4(%arg0: i32) -> (i32, i32) {
    %c0_i32 = arith.constant 0 : i32
    %c0_i32_0 = arith.constant 0 : i32
    %c0_i32_1 = arith.constant 0 : i32
    return %c0_i32, %c0_i32_0 : i32, i32
  }
  func.func @transform_5(%arg0: i32) -> (i32, i32, i32) {
    %c0_i32 = arith.constant 0 : i32
    %c0_i32_0 = arith.constant 0 : i32
    %c0_i32_1 = arith.constant 0 : i32
    return %arg0, %c0_i32, %c0_i32_0 : i32, i32, i32
  }
}

</mosaic_0001>

<llo_original>
// kernel: down_conv_forward.1
$region0: #{down_conv_forward.1}
  #allocation0 [shape = 'u32[]', space=smem, size = 0x4, offset = 0x4, fixed_abs, tag = 'smem constant byte address 0x4 - core index']
  #allocation1 [shape = 'u32[72,128]{1,0:T(1,128)}', space=vmem, size = 0x9000, scoped, tag = 'internal scratch']
  #allocation2 [shape = 'f32[2,176,4]{2,1,0:T(8,128)}', space=vmem, size = 0x2c000, scoped, tag = 'scratch operand']
  #allocation3 [shape = 'f32[2,176,8]{2,1,0:T(8,128)}', space=vmem, size = 0x2c000, scoped, tag = 'scratch operand']
  #allocation4 [shape = 'f32[2,128,36]{2,1,0:T(8,128)}', space=vmem, size = 0x20000, scoped, tag = 'scratch operand']
  #allocation5 [shape = 'f32[2,128,72]{2,1,0:T(8,128)}', space=vmem, size = 0x20000, scoped, tag = 'scratch operand']
  %s0 = inlined_call_operand.vmem [shape: f32[2,176,16], index: 0, kind: input, shape index: {}]
  %s1 = inlined_call_operand.vmem [shape: f32[36,8], index: 1, kind: input, shape index: {}]
  %s2 = inlined_call_operand.vmem [shape: f32[1,8], index: 2, kind: input, shape index: {}]
  %s3 = inlined_call_operand.vmem [shape: f32[72,8], index: 3, kind: input, shape index: {}]
  %s4 = inlined_call_operand.vmem [shape: f32[1,8], index: 4, kind: input, shape index: {}]
  %s5 = inlined_call_operand.vmem [shape: f32[2,128,8], index: 5, kind: output, shape index: {}]
  %s6 = sld [smem:[#allocation0]]
  $region30: #{down_conv_forward.1} parent=0
    _
  %s8 = ssub.s32 1, %s6
  %s9 = scalar_select 0, %s8, %s6
  // Predicated region
  $region2: #{down_conv_forward.1} parent=0 // pred_check
    _
  $region3: #{down_conv_forward.1} parent=0 // pred_check_branch
    %11 = sbr.rel (0) target = $region5
  $region4: #{down_conv_forward.1} parent=0 // pred_region
    _
  $region5: #{down_conv_forward.1} parent=0 // pred_fallthru
    _
  // Predicated region
  $region6: #{down_conv_forward.1} parent=0 // pred_check
    _
  $region7: #{down_conv_forward.1} parent=0 // pred_check_branch
    %13 = sbr.rel (0) target = $region9
  $region8: #{down_conv_forward.1} parent=0 // pred_region
    _
  $region9: #{down_conv_forward.1} parent=0 // pred_fallthru
    _
  // Predicated region
  $region10: #{down_conv_forward.1} parent=0 // pred_check
    _
  $region11: #{down_conv_forward.1} parent=0 // pred_check_branch
    %15 = sbr.rel (0) target = $region13
  $region12: #{down_conv_forward.1} parent=0 // pred_region
    _
  $region13: #{down_conv_forward.1} parent=0 // pred_fallthru
    _
  // Predicated region
  $region14: #{down_conv_forward.1} parent=0 // pred_check
    _
  $region15: #{down_conv_forward.1} parent=0 // pred_check_branch
    %17 = sbr.rel (0) target = $region17
  $region16: #{down_conv_forward.1} parent=0 // pred_region
    _
  $region17: #{down_conv_forward.1} parent=0 // pred_fallthru
    _
  // Predicated region
  $region18: #{down_conv_forward.1} parent=0 // pred_check
    _
  $region19: #{down_conv_forward.1} parent=0 // pred_check_branch
    %19 = sbr.rel (0) target = $region21
  $region20: #{down_conv_forward.1} parent=0 // pred_region
    _
  $region21: #{down_conv_forward.1} parent=0 // pred_fallthru
    _
  %v20 = vld [vmem:[%s0] sm:$0xff]
  %v21 = vld [vmem:[%s0 + $0x8] sm:$0xff]
  %v22 = vld [vmem:[%s0 + $0x10] sm:$0xff]
  %v23 = vld [vmem:[%s0 + $0x18] sm:$0xff]
  %v24 = vld [vmem:[%s0 + $0x20] sm:$0xff]
  %v25 = vld [vmem:[%s0 + $0x28] sm:$0xff]
  %v26 = vld [vmem:[%s0 + $0x30] sm:$0xff]
  %v27 = vld [vmem:[%s0 + $0x38] sm:$0xff]
  %v28 = vld [vmem:[%s0 + $0x40] sm:$0xff]
  %v29 = vld [vmem:[%s0 + $0x48] sm:$0xff]
  %v30 = vld [vmem:[%s0 + $0x50] sm:$0xff]
  %v31 = vld [vmem:[%s0 + $0x58] sm:$0xff]
  %v32 = vld [vmem:[%s0 + $0x60] sm:$0xff]
  %v33 = vld [vmem:[%s0 + $0x68] sm:$0xff]
  %v34 = vld [vmem:[%s0 + $0x70] sm:$0xff]
  %v35 = vld [vmem:[%s0 + $0x78] sm:$0xff]
  %v36 = vld [vmem:[%s0 + $0x80] sm:$0xff]
  %v37 = vld [vmem:[%s0 + $0x88] sm:$0xff]
  %v38 = vld [vmem:[%s0 + $0x90] sm:$0xff]
  %v39 = vld [vmem:[%s0 + $0x98] sm:$0xff]
  %v40 = vld [vmem:[%s0 + $0xa0] sm:$0xff]
  %v41 = vld [vmem:[%s0 + $0xa8] sm:$0xff]
  %v42 = vld [vmem:[%s0 + $0xb0] sm:$0xff]
  %v43 = vld [vmem:[%s0 + $0xb8] sm:$0xff]
  %v44 = vld [vmem:[%s0 + $0xc0] sm:$0xff]
  %v45 = vld [vmem:[%s0 + $0xc8] sm:$0xff]
  %v46 = vld [vmem:[%s0 + $0xd0] sm:$0xff]
  %v47 = vld [vmem:[%s0 + $0xd8] sm:$0xff]
  %v48 = vld [vmem:[%s0 + $0xe0] sm:$0xff]
  %v49 = vld [vmem:[%s0 + $0xe8] sm:$0xff]
  %v50 = vld [vmem:[%s0 + $0xf0] sm:$0xff]
  %v51 = vld [vmem:[%s0 + $0xf8] sm:$0xff]
  %v52 = vld [vmem:[%s0 + $0x100] sm:$0xff]
  %v53 = vld [vmem:[%s0 + $0x108] sm:$0xff]
  %v54 = vld [vmem:[%s0 + $0x110] sm:$0xff]
  %v55 = vld [vmem:[%s0 + $0x118] sm:$0xff]
  %v56 = vld [vmem:[%s0 + $0x120] sm:$0xff]
  %v57 = vld [vmem:[%s0 + $0x128] sm:$0xff]
  %v58 = vld [vmem:[%s0 + $0x130] sm:$0xff]
  %v59 = vld [vmem:[%s0 + $0x138] sm:$0xff]
  %v60 = vld [vmem:[%s0 + $0x140] sm:$0xff]
  %v61 = vld [vmem:[%s0 + $0x148] sm:$0xff]
  %v62 = vld [vmem:[%s0 + $0x150] sm:$0xff]
  %v63 = vld [vmem:[%s0 + $0x158] sm:$0xff]
  %108 = vrot.lane.b32.xlu0 %v20, 124
  %v109 = vpop.permute.xlu0 %108
  %110 = vrot.lane.b32.xlu0 %v21, 124
  %v111 = vpop.permute.xlu0 %110
  %112 = vrot.lane.b32.xlu0 %v22, 124
  %v113 = vpop.permute.xlu0 %112
  %114 = vrot.lane.b32.xlu0 %v23, 124
  %v115 = vpop.permute.xlu0 %114
  %116 = vrot.lane.b32.xlu0 %v24, 124
  %v117 = vpop.permute.xlu0 %116
  %118 = vrot.lane.b32.xlu0 %v25, 124
  %v119 = vpop.permute.xlu0 %118
  %120 = vrot.lane.b32.xlu0 %v26, 124
  %v121 = vpop.permute.xlu0 %120
  %122 = vrot.lane.b32.xlu0 %v27, 124
  %v123 = vpop.permute.xlu0 %122
  %124 = vrot.lane.b32.xlu0 %v28, 124
  %v125 = vpop.permute.xlu0 %124
  %126 = vrot.lane.b32.xlu0 %v29, 124
  %v127 = vpop.permute.xlu0 %126
  %128 = vrot.lane.b32.xlu0 %v30, 124
  %v129 = vpop.permute.xlu0 %128
  %130 = vrot.lane.b32.xlu0 %v31, 124
  %v131 = vpop.permute.xlu0 %130
  %132 = vrot.lane.b32.xlu0 %v32, 124
  %v133 = vpop.permute.xlu0 %132
  %134 = vrot.lane.b32.xlu0 %v33, 124
  %v135 = vpop.permute.xlu0 %134
  %136 = vrot.lane.b32.xlu0 %v34, 124
  %v137 = vpop.permute.xlu0 %136
  %138 = vrot.lane.b32.xlu0 %v35, 124
  %v139 = vpop.permute.xlu0 %138
  %140 = vrot.lane.b32.xlu0 %v36, 124
  %v141 = vpop.permute.xlu0 %140
  %142 = vrot.lane.b32.xlu0 %v37, 124
  %v143 = vpop.permute.xlu0 %142
  %144 = vrot.lane.b32.xlu0 %v38, 124
  %v145 = vpop.permute.xlu0 %144
  %146 = vrot.lane.b32.xlu0 %v39, 124
  %v147 = vpop.permute.xlu0 %146
  %148 = vrot.lane.b32.xlu0 %v40, 124
  %v149 = vpop.permute.xlu0 %148
  %150 = vrot.lane.b32.xlu0 %v41, 124
  %v151 = vpop.permute.xlu0 %150
  %152 = vrot.lane.b32.xlu0 %v42, 124
  %v153 = vpop.permute.xlu0 %152
  %154 = vrot.lane.b32.xlu0 %v43, 124
  %v155 = vpop.permute.xlu0 %154
  %156 = vrot.lane.b32.xlu0 %v44, 124
  %v157 = vpop.permute.xlu0 %156
  %158 = vrot.lane.b32.xlu0 %v45, 124
  %v159 = vpop.permute.xlu0 %158
  %160 = vrot.lane.b32.xlu0 %v46, 124
  %v161 = vpop.permute.xlu0 %160
  %162 = vrot.lane.b32.xlu0 %v47, 124
  %v163 = vpop.permute.xlu0 %162
  %164 = vrot.lane.b32.xlu0 %v48, 124
  %v165 = vpop.permute.xlu0 %164
  %166 = vrot.lane.b32.xlu0 %v49, 124
  %v167 = vpop.permute.xlu0 %166
  %168 = vrot.lane.b32.xlu0 %v50, 124
  %v169 = vpop.permute.xlu0 %168
  %170 = vrot.lane.b32.xlu0 %v51, 124
  %v171 = vpop.permute.xlu0 %170
  %172 = vrot.lane.b32.xlu0 %v52, 124
  %v173 = vpop.permute.xlu0 %172
  %174 = vrot.lane.b32.xlu0 %v53, 124
  %v175 = vpop.permute.xlu0 %174
  %176 = vrot.lane.b32.xlu0 %v54, 124
  %v177 = vpop.permute.xlu0 %176
  %178 = vrot.lane.b32.xlu0 %v55, 124
  %v179 = vpop.permute.xlu0 %178
  %180 = vrot.lane.b32.xlu0 %v56, 124
  %v181 = vpop.permute.xlu0 %180
  %182 = vrot.lane.b32.xlu0 %v57, 124
  %v183 = vpop.permute.xlu0 %182
  %184 = vrot.lane.b32.xlu0 %v58, 124
  %v185 = vpop.permute.xlu0 %184
  %186 = vrot.lane.b32.xlu0 %v59, 124
  %v187 = vpop.permute.xlu0 %186
  %188 = vrot.lane.b32.xlu0 %v60, 124
  %v189 = vpop.permute.xlu0 %188
  %190 = vrot.lane.b32.xlu0 %v61, 124
  %v191 = vpop.permute.xlu0 %190
  %192 = vrot.lane.b32.xlu0 %v62, 124
  %v193 = vpop.permute.xlu0 %192
  %194 = vrot.lane.b32.xlu0 %v63, 124
  %v195 = vpop.permute.xlu0 %194
  %v240 = vmax.f32 %v20, %v109
  %v241 = vmax.f32 %v21, %v111
  %v242 = vmax.f32 %v22, %v113
  %v243 = vmax.f32 %v23, %v115
  %v244 = vmax.f32 %v24, %v117
  %v245 = vmax.f32 %v25, %v119
  %v246 = vmax.f32 %v26, %v121
  %v247 = vmax.f32 %v27, %v123
  %v248 = vmax.f32 %v28, %v125
  %v249 = vmax.f32 %v29, %v127
  %v250 = vmax.f32 %v30, %v129
  %v251 = vmax.f32 %v31, %v131
  %v252 = vmax.f32 %v32, %v133
  %v253 = vmax.f32 %v33, %v135
  %v254 = vmax.f32 %v34, %v137
  %v255 = vmax.f32 %v35, %v139
  %v256 = vmax.f32 %v36, %v141
  %v257 = vmax.f32 %v37, %v143
  %v258 = vmax.f32 %v38, %v145
  %v259 = vmax.f32 %v39, %v147
  %v260 = vmax.f32 %v40, %v149
  %v261 = vmax.f32 %v41, %v151
  %v262 = vmax.f32 %v42, %v153
  %v263 = vmax.f32 %v43, %v155
  %v264 = vmax.f32 %v44, %v157
  %v265 = vmax.f32 %v45, %v159
  %v266 = vmax.f32 %v46, %v161
  %v267 = vmax.f32 %v47, %v163
  %v268 = vmax.f32 %v48, %v165
  %v269 = vmax.f32 %v49, %v167
  %v270 = vmax.f32 %v50, %v169
  %v271 = vmax.f32 %v51, %v171
  %v272 = vmax.f32 %v52, %v173
  %v273 = vmax.f32 %v53, %v175
  %v274 = vmax.f32 %v54, %v177
  %v275 = vmax.f32 %v55, %v179
  %v276 = vmax.f32 %v56, %v181
  %v277 = vmax.f32 %v57, %v183
  %v278 = vmax.f32 %v58, %v185
  %v279 = vmax.f32 %v59, %v187
  %v280 = vmax.f32 %v60, %v189
  %v281 = vmax.f32 %v61, %v191
  %v282 = vmax.f32 %v62, %v193
  %v283 = vmax.f32 %v63, %v195
  %328 = vrot.lane.b32.xlu0 %v240, 120
  %v329 = vpop.permute.xlu0 %328
  %330 = vrot.lane.b32.xlu0 %v241, 120
  %v331 = vpop.permute.xlu0 %330
  %332 = vrot.lane.b32.xlu0 %v242, 120
  %v333 = vpop.permute.xlu0 %332
  %334 = vrot.lane.b32.xlu0 %v243, 120
  %v335 = vpop.permute.xlu0 %334
  %336 = vrot.lane.b32.xlu0 %v244, 120
  %v337 = vpop.permute.xlu0 %336
  %338 = vrot.lane.b32.xlu0 %v245, 120
  %v339 = vpop.permute.xlu0 %338
  %340 = vrot.lane.b32.xlu0 %v246, 120
  %v341 = vpop.permute.xlu0 %340
  %342 = vrot.lane.b32.xlu0 %v247, 120
  %v343 = vpop.permute.xlu0 %342
  %344 = vrot.lane.b32.xlu0 %v248, 120
  %v345 = vpop.permute.xlu0 %344
  %346 = vrot.lane.b32.xlu0 %v249, 120
  %v347 = vpop.permute.xlu0 %346
  %348 = vrot.lane.b32.xlu0 %v250, 120
  %v349 = vpop.permute.xlu0 %348
  %350 = vrot.lane.b32.xlu0 %v251, 120
  %v351 = vpop.permute.xlu0 %350
  %352 = vrot.lane.b32.xlu0 %v252, 120
  %v353 = vpop.permute.xlu0 %352
  %354 = vrot.lane.b32.xlu0 %v253, 120
  %v355 = vpop.permute.xlu0 %354
  %356 = vrot.lane.b32.xlu0 %v254, 120
  %v357 = vpop.permute.xlu0 %356
  %358 = vrot.lane.b32.xlu0 %v255, 120
  %v359 = vpop.permute.xlu0 %358
  %360 = vrot.lane.b32.xlu0 %v256, 120
  %v361 = vpop.permute.xlu0 %360
  %362 = vrot.lane.b32.xlu0 %v257, 120
  %v363 = vpop.permute.xlu0 %362
  %364 = vrot.lane.b32.xlu0 %v258, 120
  %v365 = vpop.permute.xlu0 %364
  %366 = vrot.lane.b32.xlu0 %v259, 120
  %v367 = vpop.permute.xlu0 %366
  %368 = vrot.lane.b32.xlu0 %v260, 120
  %v369 = vpop.permute.xlu0 %368
  %370 = vrot.lane.b32.xlu0 %v261, 120
  %v371 = vpop.permute.xlu0 %370
  %372 = vrot.lane.b32.xlu0 %v262, 120
  %v373 = vpop.permute.xlu0 %372
  %374 = vrot.lane.b32.xlu0 %v263, 120
  %v375 = vpop.permute.xlu0 %374
  %376 = vrot.lane.b32.xlu0 %v264, 120
  %v377 = vpop.permute.xlu0 %376
  %378 = vrot.lane.b32.xlu0 %v265, 120
  %v379 = vpop.permute.xlu0 %378
  %380 = vrot.lane.b32.xlu0 %v266, 120
  %v381 = vpop.permute.xlu0 %380
  %382 = vrot.lane.b32.xlu0 %v267, 120
  %v383 = vpop.permute.xlu0 %382
  %384 = vrot.lane.b32.xlu0 %v268, 120
  %v385 = vpop.permute.xlu0 %384
  %386 = vrot.lane.b32.xlu0 %v269, 120
  %v387 = vpop.permute.xlu0 %386
  %388 = vrot.lane.b32.xlu0 %v270, 120
  %v389 = vpop.permute.xlu0 %388
  %390 = vrot.lane.b32.xlu0 %v271, 120
  %v391 = vpop.permute.xlu0 %390
  %392 = vrot.lane.b32.xlu0 %v272, 120
  %v393 = vpop.permute.xlu0 %392
  %394 = vrot.lane.b32.xlu0 %v273, 120
  %v395 = vpop.permute.xlu0 %394
  %396 = vrot.lane.b32.xlu0 %v274, 120
  %v397 = vpop.permute.xlu0 %396
  %398 = vrot.lane.b32.xlu0 %v275, 120
  %v399 = vpop.permute.xlu0 %398
  %400 = vrot.lane.b32.xlu0 %v276, 120
  %v401 = vpop.permute.xlu0 %400
  %402 = vrot.lane.b32.xlu0 %v277, 120
  %v403 = vpop.permute.xlu0 %402
  %404 = vrot.lane.b32.xlu0 %v278, 120
  %v405 = vpop.permute.xlu0 %404
  %406 = vrot.lane.b32.xlu0 %v279, 120
  %v407 = vpop.permute.xlu0 %406
  %408 = vrot.lane.b32.xlu0 %v280, 120
  %v409 = vpop.permute.xlu0 %408
  %410 = vrot.lane.b32.xlu0 %v281, 120
  %v411 = vpop.permute.xlu0 %410
  %412 = vrot.lane.b32.xlu0 %v282, 120
  %v413 = vpop.permute.xlu0 %412
  %414 = vrot.lane.b32.xlu0 %v283, 120
  %v415 = vpop.permute.xlu0 %414
  %v460 = vmax.f32 %v240, %v329
  %v461 = vmax.f32 %v241, %v331
  %v462 = vmax.f32 %v242, %v333
  %v463 = vmax.f32 %v243, %v335
  %v464 = vmax.f32 %v244, %v337
  %v465 = vmax.f32 %v245, %v339
  %v466 = vmax.f32 %v246, %v341
  %v467 = vmax.f32 %v247, %v343
  %v468 = vmax.f32 %v248, %v345
  %v469 = vmax.f32 %v249, %v347
  %v470 = vmax.f32 %v250, %v349
  %v471 = vmax.f32 %v251, %v351
  %v472 = vmax.f32 %v252, %v353
  %v473 = vmax.f32 %v253, %v355
  %v474 = vmax.f32 %v254, %v357
  %v475 = vmax.f32 %v255, %v359
  %v476 = vmax.f32 %v256, %v361
  %v477 = vmax.f32 %v257, %v363
  %v478 = vmax.f32 %v258, %v365
  %v479 = vmax.f32 %v259, %v367
  %v480 = vmax.f32 %v260, %v369
  %v481 = vmax.f32 %v261, %v371
  %v482 = vmax.f32 %v262, %v373
  %v483 = vmax.f32 %v263, %v375
  %v484 = vmax.f32 %v264, %v377
  %v485 = vmax.f32 %v265, %v379
  %v486 = vmax.f32 %v266, %v381
  %v487 = vmax.f32 %v267, %v383
  %v488 = vmax.f32 %v268, %v385
  %v489 = vmax.f32 %v269, %v387
  %v490 = vmax.f32 %v270, %v389
  %v491 = vmax.f32 %v271, %v391
  %v492 = vmax.f32 %v272, %v393
  %v493 = vmax.f32 %v273, %v395
  %v494 = vmax.f32 %v274, %v397
  %v495 = vmax.f32 %v275, %v399
  %v496 = vmax.f32 %v276, %v401
  %v497 = vmax.f32 %v277, %v403
  %v498 = vmax.f32 %v278, %v405
  %v499 = vmax.f32 %v279, %v407
  %v500 = vmax.f32 %v280, %v409
  %v501 = vmax.f32 %v281, %v411
  %v502 = vmax.f32 %v282, %v413
  %v503 = vmax.f32 %v283, %v415
  %vm504 = vcmask 31744
  %505 = vst.msk [vmem:[#allocation2] sm:$0xff] %vm504, %v460
  %506 = vst.msk [vmem:[#allocation2 + $0x8] sm:$0xff] %vm504, %v461
  %507 = vst.msk [vmem:[#allocation2 + $0x10] sm:$0xff] %vm504, %v462
  %508 = vst.msk [vmem:[#allocation2 + $0x18] sm:$0xff] %vm504, %v463
  %509 = vst.msk [vmem:[#allocation2 + $0x20] sm:$0xff] %vm504, %v464
  %510 = vst.msk [vmem:[#allocation2 + $0x28] sm:$0xff] %vm504, %v465
  %511 = vst.msk [vmem:[#allocation2 + $0x30] sm:$0xff] %vm504, %v466
  %512 = vst.msk [vmem:[#allocation2 + $0x38] sm:$0xff] %vm504, %v467
  %513 = vst.msk [vmem:[#allocation2 + $0x40] sm:$0xff] %vm504, %v468
  %514 = vst.msk [vmem:[#allocation2 + $0x48] sm:$0xff] %vm504, %v469
  %515 = vst.msk [vmem:[#allocation2 + $0x50] sm:$0xff] %vm504, %v470
  %516 = vst.msk [vmem:[#allocation2 + $0x58] sm:$0xff] %vm504, %v471
  %517 = vst.msk [vmem:[#allocation2 + $0x60] sm:$0xff] %vm504, %v472
  %518 = vst.msk [vmem:[#allocation2 + $0x68] sm:$0xff] %vm504, %v473
  %519 = vst.msk [vmem:[#allocation2 + $0x70] sm:$0xff] %vm504, %v474
  %520 = vst.msk [vmem:[#allocation2 + $0x78] sm:$0xff] %vm504, %v475
  %521 = vst.msk [vmem:[#allocation2 + $0x80] sm:$0xff] %vm504, %v476
  %522 = vst.msk [vmem:[#allocation2 + $0x88] sm:$0xff] %vm504, %v477
  %523 = vst.msk [vmem:[#allocation2 + $0x90] sm:$0xff] %vm504, %v478
  %524 = vst.msk [vmem:[#allocation2 + $0x98] sm:$0xff] %vm504, %v479
  %525 = vst.msk [vmem:[#allocation2 + $0xa0] sm:$0xff] %vm504, %v480
  %526 = vst.msk [vmem:[#allocation2 + $0xa8] sm:$0xff] %vm504, %v481
  %527 = vst.msk [vmem:[#allocation2 + $0xb0] sm:$0xff] %vm504, %v482
  %528 = vst.msk [vmem:[#allocation2 + $0xb8] sm:$0xff] %vm504, %v483
  %529 = vst.msk [vmem:[#allocation2 + $0xc0] sm:$0xff] %vm504, %v484
  %530 = vst.msk [vmem:[#allocation2 + $0xc8] sm:$0xff] %vm504, %v485
  %531 = vst.msk [vmem:[#allocation2 + $0xd0] sm:$0xff] %vm504, %v486
  %532 = vst.msk [vmem:[#allocation2 + $0xd8] sm:$0xff] %vm504, %v487
  %533 = vst.msk [vmem:[#allocation2 + $0xe0] sm:$0xff] %vm504, %v488
  %534 = vst.msk [vmem:[#allocation2 + $0xe8] sm:$0xff] %vm504, %v489
  %535 = vst.msk [vmem:[#allocation2 + $0xf0] sm:$0xff] %vm504, %v490
  %536 = vst.msk [vmem:[#allocation2 + $0xf8] sm:$0xff] %vm504, %v491
  %537 = vst.msk [vmem:[#allocation2 + $0x100] sm:$0xff] %vm504, %v492
  %538 = vst.msk [vmem:[#allocation2 + $0x108] sm:$0xff] %vm504, %v493
  %539 = vst.msk [vmem:[#allocation2 + $0x110] sm:$0xff] %vm504, %v494
  %540 = vst.msk [vmem:[#allocation2 + $0x118] sm:$0xff] %vm504, %v495
  %541 = vst.msk [vmem:[#allocation2 + $0x120] sm:$0xff] %vm504, %v496
  %542 = vst.msk [vmem:[#allocation2 + $0x128] sm:$0xff] %vm504, %v497
  %543 = vst.msk [vmem:[#allocation2 + $0x130] sm:$0xff] %vm504, %v498
  %544 = vst.msk [vmem:[#allocation2 + $0x138] sm:$0xff] %vm504, %v499
  %545 = vst.msk [vmem:[#allocation2 + $0x140] sm:$0xff] %vm504, %v500
  %546 = vst.msk [vmem:[#allocation2 + $0x148] sm:$0xff] %vm504, %v501
  %547 = vst.msk [vmem:[#allocation2 + $0x150] sm:$0xff] %vm504, %v502
  %548 = vst.msk [vmem:[#allocation2 + $0x158] sm:$0xff] %vm504, %v503
  %v549 = vld [vmem:[#allocation2 + $0x7] sm:$0xff]
  %v550 = vld [vmem:[#allocation2 + $0xf] sm:$0xff]
  %v551 = vld [vmem:[#allocation2 + $0x17] sm:$0xff]
  %v552 = vld [vmem:[#allocation2 + $0x1f] sm:$0xff]
  %v553 = vld [vmem:[#allocation2 + $0x27] sm:$0xff]
  %v554 = vld [vmem:[#allocation2 + $0x2f] sm:$0xff]
  %v555 = vld [vmem:[#allocation2 + $0x37] sm:$0xff]
  %v556 = vld [vmem:[#allocation2 + $0x3f] sm:$0xff]
  %v557 = vld [vmem:[#allocation2 + $0x47] sm:$0xff]
  %v558 = vld [vmem:[#allocation2 + $0x4f] sm:$0xff]
  %v559 = vld [vmem:[#allocation2 + $0x57] sm:$0xff]
  %v560 = vld [vmem:[#allocation2 + $0x5f] sm:$0xff]
  %v561 = vld [vmem:[#allocation2 + $0x67] sm:$0xff]
  %v562 = vld [vmem:[#allocation2 + $0x6f] sm:$0xff]
  %v563 = vld [vmem:[#allocation2 + $0x77] sm:$0xff]
  %v564 = vld [vmem:[#allocation2 + $0x7f] sm:$0xff]
  %v565 = vld [vmem:[#allocation2 + $0x87] sm:$0xff]
  %v566 = vld [vmem:[#allocation2 + $0x8f] sm:$0xff]
  %v567 = vld [vmem:[#allocation2 + $0x97] sm:$0xff]
  %v568 = vld [vmem:[#allocation2 + $0x9f] sm:$0xff]
  %v569 = vld [vmem:[#allocation2 + $0xb7] sm:$0xff]
  %v570 = vld [vmem:[#allocation2 + $0xbf] sm:$0xff]
  %v571 = vld [vmem:[#allocation2 + $0xc7] sm:$0xff]
  %v572 = vld [vmem:[#allocation2 + $0xcf] sm:$0xff]
  %v573 = vld [vmem:[#allocation2 + $0xd7] sm:$0xff]
  %v574 = vld [vmem:[#allocation2 + $0xdf] sm:$0xff]
  %v575 = vld [vmem:[#allocation2 + $0xe7] sm:$0xff]
  %v576 = vld [vmem:[#allocation2 + $0xef] sm:$0xff]
  %v577 = vld [vmem:[#allocation2 + $0xf7] sm:$0xff]
  %v578 = vld [vmem:[#allocation2 + $0xff] sm:$0xff]
  %v579 = vld [vmem:[#allocation2 + $0x107] sm:$0xff]
  %v580 = vld [vmem:[#allocation2 + $0x10f] sm:$0xff]
  %v581 = vld [vmem:[#allocation2 + $0x117] sm:$0xff]
  %v582 = vld [vmem:[#allocation2 + $0x11f] sm:$0xff]
  %v583 = vld [vmem:[#allocation2 + $0x127] sm:$0xff]
  %v584 = vld [vmem:[#allocation2 + $0x12f] sm:$0xff]
  %v585 = vld [vmem:[#allocation2 + $0x137] sm:$0xff]
  %v586 = vld [vmem:[#allocation2 + $0x13f] sm:$0xff]
  %v587 = vld [vmem:[#allocation2 + $0x147] sm:$0xff]
  %v588 = vld [vmem:[#allocation2 + $0x14f] sm:$0xff]
  %589 = vst.msk [vmem:[#allocation4] sm:$0xff] %vm504, %v549
  %590 = vst.msk [vmem:[#allocation4 + $0x8] sm:$0xff] %vm504, %v550
  %591 = vst.msk [vmem:[#allocation4 + $0x10] sm:$0xff] %vm504, %v551
  %592 = vst.msk [vmem:[#allocation4 + $0x18] sm:$0xff] %vm504, %v552
  %593 = vst.msk [vmem:[#allocation4 + $0x20] sm:$0xff] %vm504, %v553
  %594 = vst.msk [vmem:[#allocation4 + $0x28] sm:$0xff] %vm504, %v554
  %595 = vst.msk [vmem:[#allocation4 + $0x30] sm:$0xff] %vm504, %v555
  %596 = vst.msk [vmem:[#allocation4 + $0x38] sm:$0xff] %vm504, %v556
  %597 = vst.msk [vmem:[#allocation4 + $0x40] sm:$0xff] %vm504, %v557
  %598 = vst.msk [vmem:[#allocation4 + $0x48] sm:$0xff] %vm504, %v558
  %599 = vst.msk [vmem:[#allocation4 + $0x50] sm:$0xff] %vm504, %v559
  %600 = vst.msk [vmem:[#allocation4 + $0x58] sm:$0xff] %vm504, %v560
  %601 = vst.msk [vmem:[#allocation4 + $0x60] sm:$0xff] %vm504, %v561
  %602 = vst.msk [vmem:[#allocation4 + $0x68] sm:$0xff] %vm504, %v562
  %603 = vst.msk [vmem:[#allocation4 + $0x70] sm:$0xff] %vm504, %v563
  %604 = vst.msk [vmem:[#allocation4 + $0x78] sm:$0xff] %vm504, %v564
  %605 = vst.msk [vmem:[#allocation4 + $0x80] sm:$0xff] %vm504, %v569
  %606 = vst.msk [vmem:[#allocation4 + $0x88] sm:$0xff] %vm504, %v570
  %607 = vst.msk [vmem:[#allocation4 + $0x90] sm:$0xff] %vm504, %v571
  %608 = vst.msk [vmem:[#allocation4 + $0x98] sm:$0xff] %vm504, %v572
  %609 = vst.msk [vmem:[#allocation4 + $0xa0] sm:$0xff] %vm504, %v573
  %610 = vst.msk [vmem:[#allocation4 + $0xa8] sm:$0xff] %vm504, %v574
  %611 = vst.msk [vmem:[#allocation4 + $0xb0] sm:$0xff] %vm504, %v575
  %612 = vst.msk [vmem:[#allocation4 + $0xb8] sm:$0xff] %vm504, %v576
  %613 = vst.msk [vmem:[#allocation4 + $0xc0] sm:$0xff] %vm504, %v577
  %614 = vst.msk [vmem:[#allocation4 + $0xc8] sm:$0xff] %vm504, %v578
  %615 = vst.msk [vmem:[#allocation4 + $0xd0] sm:$0xff] %vm504, %v579
  %616 = vst.msk [vmem:[#allocation4 + $0xd8] sm:$0xff] %vm504, %v580
  %617 = vst.msk [vmem:[#allocation4 + $0xe0] sm:$0xff] %vm504, %v581
  %618 = vst.msk [vmem:[#allocation4 + $0xe8] sm:$0xff] %vm504, %v582
  %619 = vst.msk [vmem:[#allocation4 + $0xf0] sm:$0xff] %vm504, %v583
  %620 = vst.msk [vmem:[#allocation4 + $0xf8] sm:$0xff] %vm504, %v584
  %653 = vrot.lane.b32.xlu0 %v551, 12
  %v654 = vpop.permute.xlu0 %653
  %655 = vrot.lane.b32.xlu0 %v552, 12
  %v656 = vpop.permute.xlu0 %655
  %657 = vrot.lane.b32.xlu0 %v553, 12
  %v658 = vpop.permute.xlu0 %657
  %659 = vrot.lane.b32.xlu0 %v554, 12
  %v660 = vpop.permute.xlu0 %659
  %661 = vrot.lane.b32.xlu0 %v555, 12
  %v662 = vpop.permute.xlu0 %661
  %663 = vrot.lane.b32.xlu0 %v556, 12
  %v664 = vpop.permute.xlu0 %663
  %665 = vrot.lane.b32.xlu0 %v557, 12
  %v666 = vpop.permute.xlu0 %665
  %667 = vrot.lane.b32.xlu0 %v558, 12
  %v668 = vpop.permute.xlu0 %667
  %669 = vrot.lane.b32.xlu0 %v559, 12
  %v670 = vpop.permute.xlu0 %669
  %671 = vrot.lane.b32.xlu0 %v560, 12
  %v672 = vpop.permute.xlu0 %671
  %673 = vrot.lane.b32.xlu0 %v561, 12
  %v674 = vpop.permute.xlu0 %673
  %675 = vrot.lane.b32.xlu0 %v562, 12
  %v676 = vpop.permute.xlu0 %675
  %677 = vrot.lane.b32.xlu0 %v563, 12
  %v678 = vpop.permute.xlu0 %677
  %679 = vrot.lane.b32.xlu0 %v564, 12
  %v680 = vpop.permute.xlu0 %679
  %681 = vrot.lane.b32.xlu0 %v565, 12
  %v682 = vpop.permute.xlu0 %681
  %683 = vrot.lane.b32.xlu0 %v566, 12
  %v684 = vpop.permute.xlu0 %683
  %685 = vrot.lane.b32.xlu0 %v571, 12
  %v686 = vpop.permute.xlu0 %685
  %687 = vrot.lane.b32.xlu0 %v572, 12
  %v688 = vpop.permute.xlu0 %687
  %689 = vrot.lane.b32.xlu0 %v573, 12
  %v690 = vpop.permute.xlu0 %689
  %691 = vrot.lane.b32.xlu0 %v574, 12
  %v692 = vpop.permute.xlu0 %691
  %693 = vrot.lane.b32.xlu0 %v575, 12
  %v694 = vpop.permute.xlu0 %693
  %695 = vrot.lane.b32.xlu0 %v576, 12
  %v696 = vpop.permute.xlu0 %695
  %697 = vrot.lane.b32.xlu0 %v577, 12
  %v698 = vpop.permute.xlu0 %697
  %699 = vrot.lane.b32.xlu0 %v578, 12
  %v700 = vpop.permute.xlu0 %699
  %701 = vrot.lane.b32.xlu0 %v579, 12
  %v702 = vpop.permute.xlu0 %701
  %703 = vrot.lane.b32.xlu0 %v580, 12
  %v704 = vpop.permute.xlu0 %703
  %705 = vrot.lane.b32.xlu0 %v581, 12
  %v706 = vpop.permute.xlu0 %705
  %707 = vrot.lane.b32.xlu0 %v582, 12
  %v708 = vpop.permute.xlu0 %707
  %709 = vrot.lane.b32.xlu0 %v583, 12
  %v710 = vpop.permute.xlu0 %709
  %711 = vrot.lane.b32.xlu0 %v584, 12
  %v712 = vpop.permute.xlu0 %711
  %713 = vrot.lane.b32.xlu0 %v585, 12
  %v714 = vpop.permute.xlu0 %713
  %715 = vrot.lane.b32.xlu0 %v586, 12
  %v716 = vpop.permute.xlu0 %715
  %vm749 = vcmask 130144
  %750 = vst.msk [vmem:[#allocation4] sm:$0xff] %vm749, %v654
  %751 = vst.msk [vmem:[#allocation4 + $0x8] sm:$0xff] %vm749, %v656
  %752 = vst.msk [vmem:[#allocation4 + $0x10] sm:$0xff] %vm749, %v658
  %753 = vst.msk [vmem:[#allocation4 + $0x18] sm:$0xff] %vm749, %v660
  %754 = vst.msk [vmem:[#allocation4 + $0x20] sm:$0xff] %vm749, %v662
  %755 = vst.msk [vmem:[#allocation4 + $0x28] sm:$0xff] %vm749, %v664
  %756 = vst.msk [vmem:[#allocation4 + $0x30] sm:$0xff] %vm749, %v666
  %757 = vst.msk [vmem:[#allocation4 + $0x38] sm:$0xff] %vm749, %v668
  %758 = vst.msk [vmem:[#allocation4 + $0x40] sm:$0xff] %vm749, %v670
  %759 = vst.msk [vmem:[#allocation4 + $0x48] sm:$0xff] %vm749, %v672
  %760 = vst.msk [vmem:[#allocation4 + $0x50] sm:$0xff] %vm749, %v674
  %761 = vst.msk [vmem:[#allocation4 + $0x58] sm:$0xff] %vm749, %v676
  %762 = vst.msk [vmem:[#allocation4 + $0x60] sm:$0xff] %vm749, %v678
  %763 = vst.msk [vmem:[#allocation4 + $0x68] sm:$0xff] %vm749, %v680
  %764 = vst.msk [vmem:[#allocation4 + $0x70] sm:$0xff] %vm749, %v682
  %765 = vst.msk [vmem:[#allocation4 + $0x78] sm:$0xff] %vm749, %v684
  %766 = vst.msk [vmem:[#allocation4 + $0x80] sm:$0xff] %vm749, %v686
  %767 = vst.msk [vmem:[#allocation4 + $0x88] sm:$0xff] %vm749, %v688
  %768 = vst.msk [vmem:[#allocation4 + $0x90] sm:$0xff] %vm749, %v690
  %769 = vst.msk [vmem:[#allocation4 + $0x98] sm:$0xff] %vm749, %v692
  %770 = vst.msk [vmem:[#allocation4 + $0xa0] sm:$0xff] %vm749, %v694
  %771 = vst.msk [vmem:[#allocation4 + $0xa8] sm:$0xff] %vm749, %v696
  %772 = vst.msk [vmem:[#allocation4 + $0xb0] sm:$0xff] %vm749, %v698
  %773 = vst.msk [vmem:[#allocation4 + $0xb8] sm:$0xff] %vm749, %v700
  %774 = vst.msk [vmem:[#allocation4 + $0xc0] sm:$0xff] %vm749, %v702
  %775 = vst.msk [vmem:[#allocation4 + $0xc8] sm:$0xff] %vm749, %v704
  %776 = vst.msk [vmem:[#allocation4 + $0xd0] sm:$0xff] %vm749, %v706
  %777 = vst.msk [vmem:[#allocation4 + $0xd8] sm:$0xff] %vm749, %v708
  %778 = vst.msk [vmem:[#allocation4 + $0xe0] sm:$0xff] %vm749, %v710
  %779 = vst.msk [vmem:[#allocation4 + $0xe8] sm:$0xff] %vm749, %v712
  %780 = vst.msk [vmem:[#allocation4 + $0xf0] sm:$0xff] %vm749, %v714
  %781 = vst.msk [vmem:[#allocation4 + $0xf8] sm:$0xff] %vm749, %v716
  %786 = vrot.lane.b32.xlu0 %v553, 24
  %v787 = vpop.permute.xlu0 %786
  %788 = vrot.lane.b32.xlu0 %v554, 24
  %v789 = vpop.permute.xlu0 %788
  %790 = vrot.lane.b32.xlu0 %v555, 24
  %v791 = vpop.permute.xlu0 %790
  %792 = vrot.lane.b32.xlu0 %v556, 24
  %v793 = vpop.permute.xlu0 %792
  %794 = vrot.lane.b32.xlu0 %v557, 24
  %v795 = vpop.permute.xlu0 %794
  %796 = vrot.lane.b32.xlu0 %v558, 24
  %v797 = vpop.permute.xlu0 %796
  %798 = vrot.lane.b32.xlu0 %v559, 24
  %v799 = vpop.permute.xlu0 %798
  %800 = vrot.lane.b32.xlu0 %v560, 24
  %v801 = vpop.permute.xlu0 %800
  %802 = vrot.lane.b32.xlu0 %v561, 24
  %v803 = vpop.permute.xlu0 %802
  %804 = vrot.lane.b32.xlu0 %v562, 24
  %v805 = vpop.permute.xlu0 %804
  %806 = vrot.lane.b32.xlu0 %v563, 24
  %v807 = vpop.permute.xlu0 %806
  %808 = vrot.lane.b32.xlu0 %v564, 24
  %v809 = vpop.permute.xlu0 %808
  %810 = vrot.lane.b32.xlu0 %v565, 24
  %v811 = vpop.permute.xlu0 %810
  %812 = vrot.lane.b32.xlu0 %v566, 24
  %v813 = vpop.permute.xlu0 %812
  %814 = vrot.lane.b32.xlu0 %v567, 24
  %v815 = vpop.permute.xlu0 %814
  %816 = vrot.lane.b32.xlu0 %v568, 24
  %v817 = vpop.permute.xlu0 %816
  %818 = vrot.lane.b32.xlu0 %v573, 24
  %v819 = vpop.permute.xlu0 %818
  %820 = vrot.lane.b32.xlu0 %v574, 24
  %v821 = vpop.permute.xlu0 %820
  %822 = vrot.lane.b32.xlu0 %v575, 24
  %v823 = vpop.permute.xlu0 %822
  %824 = vrot.lane.b32.xlu0 %v576, 24
  %v825 = vpop.permute.xlu0 %824
  %826 = vrot.lane.b32.xlu0 %v577, 24
  %v827 = vpop.permute.xlu0 %826
  %828 = vrot.lane.b32.xlu0 %v578, 24
  %v829 = vpop.permute.xlu0 %828
  %830 = vrot.lane.b32.xlu0 %v579, 24
  %v831 = vpop.permute.xlu0 %830
  %832 = vrot.lane.b32.xlu0 %v580, 24
  %v833 = vpop.permute.xlu0 %832
  %834 = vrot.lane.b32.xlu0 %v581, 24
  %v835 = vpop.permute.xlu0 %834
  %836 = vrot.lane.b32.xlu0 %v582, 24
  %v837 = vpop.permute.xlu0 %836
  %838 = vrot.lane.b32.xlu0 %v583, 24
  %v839 = vpop.permute.xlu0 %838
  %840 = vrot.lane.b32.xlu0 %v584, 24
  %v841 = vpop.permute.xlu0 %840
  %842 = vrot.lane.b32.xlu0 %v585, 24
  %v843 = vpop.permute.xlu0 %842
  %844 = vrot.lane.b32.xlu0 %v586, 24
  %v845 = vpop.permute.xlu0 %844
  %846 = vrot.lane.b32.xlu0 %v587, 24
  %v847 = vpop.permute.xlu0 %846
  %848 = vrot.lane.b32.xlu0 %v588, 24
  %v849 = vpop.permute.xlu0 %848
  %vm882 = vcmask 228544
  %883 = vst.msk [vmem:[#allocation4] sm:$0xff] %vm882, %v787
  %884 = vst.msk [vmem:[#allocation4 + $0x8] sm:$0xff] %vm882, %v789
  %885 = vst.msk [vmem:[#allocation4 + $0x10] sm:$0xff] %vm882, %v791
  %886 = vst.msk [vmem:[#allocation4 + $0x18] sm:$0xff] %vm882, %v793
  %887 = vst.msk [vmem:[#allocation4 + $0x20] sm:$0xff] %vm882, %v795
  %888 = vst.msk [vmem:[#allocation4 + $0x28] sm:$0xff] %vm882, %v797
  %889 = vst.msk [vmem:[#allocation4 + $0x30] sm:$0xff] %vm882, %v799
  %890 = vst.msk [vmem:[#allocation4 + $0x38] sm:$0xff] %vm882, %v801
  %891 = vst.msk [vmem:[#allocation4 + $0x40] sm:$0xff] %vm882, %v803
  %892 = vst.msk [vmem:[#allocation4 + $0x48] sm:$0xff] %vm882, %v805
  %893 = vst.msk [vmem:[#allocation4 + $0x50] sm:$0xff] %vm882, %v807
  %894 = vst.msk [vmem:[#allocation4 + $0x58] sm:$0xff] %vm882, %v809
  %895 = vst.msk [vmem:[#allocation4 + $0x60] sm:$0xff] %vm882, %v811
  %896 = vst.msk [vmem:[#allocation4 + $0x68] sm:$0xff] %vm882, %v813
  %897 = vst.msk [vmem:[#allocation4 + $0x70] sm:$0xff] %vm882, %v815
  %898 = vst.msk [vmem:[#allocation4 + $0x78] sm:$0xff] %vm882, %v817
  %899 = vst.msk [vmem:[#allocation4 + $0x80] sm:$0xff] %vm882, %v819
  %900 = vst.msk [vmem:[#allocation4 + $0x88] sm:$0xff] %vm882, %v821
  %901 = vst.msk [vmem:[#allocation4 + $0x90] sm:$0xff] %vm882, %v823
  %902 = vst.msk [vmem:[#allocation4 + $0x98] sm:$0xff] %vm882, %v825
  %903 = vst.msk [vmem:[#allocation4 + $0xa0] sm:$0xff] %vm882, %v827
  %904 = vst.msk [vmem:[#allocation4 + $0xa8] sm:$0xff] %vm882, %v829
  %905 = vst.msk [vmem:[#allocation4 + $0xb0] sm:$0xff] %vm882, %v831
  %906 = vst.msk [vmem:[#allocation4 + $0xb8] sm:$0xff] %vm882, %v833
  %907 = vst.msk [vmem:[#allocation4 + $0xc0] sm:$0xff] %vm882, %v835
  %908 = vst.msk [vmem:[#allocation4 + $0xc8] sm:$0xff] %vm882, %v837
  %909 = vst.msk [vmem:[#allocation4 + $0xd0] sm:$0xff] %vm882, %v839
  %910 = vst.msk [vmem:[#allocation4 + $0xd8] sm:$0xff] %vm882, %v841
  %911 = vst.msk [vmem:[#allocation4 + $0xe0] sm:$0xff] %vm882, %v843
  %912 = vst.msk [vmem:[#allocation4 + $0xe8] sm:$0xff] %vm882, %v845
  %913 = vst.msk [vmem:[#allocation4 + $0xf0] sm:$0xff] %vm882, %v847
  %914 = vst.msk [vmem:[#allocation4 + $0xf8] sm:$0xff] %vm882, %v849
  %v915 = vld [vmem:[#allocation2 + $0x8] sm:$0xff]
  %v916 = vld [vmem:[#allocation2 + $0x10] sm:$0xff]
  %v917 = vld [vmem:[#allocation2 + $0x18] sm:$0xff]
  %v918 = vld [vmem:[#allocation2 + $0x20] sm:$0xff]
  %v919 = vld [vmem:[#allocation2 + $0x28] sm:$0xff]
  %v920 = vld [vmem:[#allocation2 + $0x30] sm:$0xff]
  %v921 = vld [vmem:[#allocation2 + $0x38] sm:$0xff]
  %v922 = vld [vmem:[#allocation2 + $0x40] sm:$0xff]
  %v923 = vld [vmem:[#allocation2 + $0x48] sm:$0xff]
  %v924 = vld [vmem:[#allocation2 + $0x50] sm:$0xff]
  %v925 = vld [vmem:[#allocation2 + $0x58] sm:$0xff]
  %v926 = vld [vmem:[#allocation2 + $0x60] sm:$0xff]
  %v927 = vld [vmem:[#allocation2 + $0x68] sm:$0xff]
  %v928 = vld [vmem:[#allocation2 + $0x70] sm:$0xff]
  %v929 = vld [vmem:[#allocation2 + $0x78] sm:$0xff]
  %v930 = vld [vmem:[#allocation2 + $0x80] sm:$0xff]
  %v931 = vld [vmem:[#allocation2 + $0x88] sm:$0xff]
  %v932 = vld [vmem:[#allocation2 + $0x90] sm:$0xff]
  %v933 = vld [vmem:[#allocation2 + $0x98] sm:$0xff]
  %v934 = vld [vmem:[#allocation2 + $0xa0] sm:$0xff]
  %v935 = vld [vmem:[#allocation2 + $0xb8] sm:$0xff]
  %v936 = vld [vmem:[#allocation2 + $0xc0] sm:$0xff]
  %v937 = vld [vmem:[#allocation2 + $0xc8] sm:$0xff]
  %v938 = vld [vmem:[#allocation2 + $0xd0] sm:$0xff]
  %v939 = vld [vmem:[#allocation2 + $0xd8] sm:$0xff]
  %v940 = vld [vmem:[#allocation2 + $0xe0] sm:$0xff]
  %v941 = vld [vmem:[#allocation2 + $0xe8] sm:$0xff]
  %v942 = vld [vmem:[#allocation2 + $0xf0] sm:$0xff]
  %v943 = vld [vmem:[#allocation2 + $0xf8] sm:$0xff]
  %v944 = vld [vmem:[#allocation2 + $0x100] sm:$0xff]
  %v945 = vld [vmem:[#allocation2 + $0x108] sm:$0xff]
  %v946 = vld [vmem:[#allocation2 + $0x110] sm:$0xff]
  %v947 = vld [vmem:[#allocation2 + $0x118] sm:$0xff]
  %v948 = vld [vmem:[#allocation2 + $0x120] sm:$0xff]
  %v949 = vld [vmem:[#allocation2 + $0x128] sm:$0xff]
  %v950 = vld [vmem:[#allocation2 + $0x130] sm:$0xff]
  %v951 = vld [vmem:[#allocation2 + $0x138] sm:$0xff]
  %v952 = vld [vmem:[#allocation2 + $0x140] sm:$0xff]
  %v953 = vld [vmem:[#allocation2 + $0x148] sm:$0xff]
  %v954 = vld [vmem:[#allocation2 + $0x150] sm:$0xff]
  %987 = vrot.lane.b32.xlu0 %v915, 4
  %v988 = vpop.permute.xlu0 %987
  %989 = vrot.lane.b32.xlu0 %v916, 4
  %v990 = vpop.permute.xlu0 %989
  %991 = vrot.lane.b32.xlu0 %v917, 4
  %v992 = vpop.permute.xlu0 %991
  %993 = vrot.lane.b32.xlu0 %v918, 4
  %v994 = vpop.permute.xlu0 %993
  %995 = vrot.lane.b32.xlu0 %v919, 4
  %v996 = vpop.permute.xlu0 %995
  %997 = vrot.lane.b32.xlu0 %v920, 4
  %v998 = vpop.permute.xlu0 %997
  %999 = vrot.lane.b32.xlu0 %v921, 4
  %v1000 = vpop.permute.xlu0 %999
  %1001 = vrot.lane.b32.xlu0 %v922, 4
  %v1002 = vpop.permute.xlu0 %1001
  %1003 = vrot.lane.b32.xlu0 %v923, 4
  %v1004 = vpop.permute.xlu0 %1003
  %1005 = vrot.lane.b32.xlu0 %v924, 4
  %v1006 = vpop.permute.xlu0 %1005
  %1007 = vrot.lane.b32.xlu0 %v925, 4
  %v1008 = vpop.permute.xlu0 %1007
  %1009 = vrot.lane.b32.xlu0 %v926, 4
  %v1010 = vpop.permute.xlu0 %1009
  %1011 = vrot.lane.b32.xlu0 %v927, 4
  %v1012 = vpop.permute.xlu0 %1011
  %1013 = vrot.lane.b32.xlu0 %v928, 4
  %v1014 = vpop.permute.xlu0 %1013
  %1015 = vrot.lane.b32.xlu0 %v929, 4
  %v1016 = vpop.permute.xlu0 %1015
  %1017 = vrot.lane.b32.xlu0 %v930, 4
  %v1018 = vpop.permute.xlu0 %1017
  %1019 = vrot.lane.b32.xlu0 %v935, 4
  %v1020 = vpop.permute.xlu0 %1019
  %1021 = vrot.lane.b32.xlu0 %v936, 4
  %v1022 = vpop.permute.xlu0 %1021
  %1023 = vrot.lane.b32.xlu0 %v937, 4
  %v1024 = vpop.permute.xlu0 %1023
  %1025 = vrot.lane.b32.xlu0 %v938, 4
  %v1026 = vpop.permute.xlu0 %1025
  %1027 = vrot.lane.b32.xlu0 %v939, 4
  %v1028 = vpop.permute.xlu0 %1027
  %1029 = vrot.lane.b32.xlu0 %v940, 4
  %v1030 = vpop.permute.xlu0 %1029
  %1031 = vrot.lane.b32.xlu0 %v941, 4
  %v1032 = vpop.permute.xlu0 %1031
  %1033 = vrot.lane.b32.xlu0 %v942, 4
  %v1034 = vpop.permute.xlu0 %1033
  %1035 = vrot.lane.b32.xlu0 %v943, 4
  %v1036 = vpop.permute.xlu0 %1035
  %1037 = vrot.lane.b32.xlu0 %v944, 4
  %v1038 = vpop.permute.xlu0 %1037
  %1039 = vrot.lane.b32.xlu0 %v945, 4
  %v1040 = vpop.permute.xlu0 %1039
  %1041 = vrot.lane.b32.xlu0 %v946, 4
  %v1042 = vpop.permute.xlu0 %1041
  %1043 = vrot.lane.b32.xlu0 %v947, 4
  %v1044 = vpop.permute.xlu0 %1043
  %1045 = vrot.lane.b32.xlu0 %v948, 4
  %v1046 = vpop.permute.xlu0 %1045
  %1047 = vrot.lane.b32.xlu0 %v949, 4
  %v1048 = vpop.permute.xlu0 %1047
  %1049 = vrot.lane.b32.xlu0 %v950, 4
  %v1050 = vpop.permute.xlu0 %1049
  %vm1083 = vcmask 64544
  %1084 = vst.msk [vmem:[#allocation4] sm:$0xff] %vm1083, %v988
  %1085 = vst.msk [vmem:[#allocation4 + $0x8] sm:$0xff] %vm1083, %v990
  %1086 = vst.msk [vmem:[#allocation4 + $0x10] sm:$0xff] %vm1083, %v992
  %1087 = vst.msk [vmem:[#allocation4 + $0x18] sm:$0xff] %vm1083, %v994
  %1088 = vst.msk [vmem:[#allocation4 + $0x20] sm:$0xff] %vm1083, %v996
  %1089 = vst.msk [vmem:[#allocation4 + $0x28] sm:$0xff] %vm1083, %v998
  %1090 = vst.msk [vmem:[#allocation4 + $0x30] sm:$0xff] %vm1083, %v1000
  %1091 = vst.msk [vmem:[#allocation4 + $0x38] sm:$0xff] %vm1083, %v1002
  %1092 = vst.msk [vmem:[#allocation4 + $0x40] sm:$0xff] %vm1083, %v1004
  %1093 = vst.msk [vmem:[#allocation4 + $0x48] sm:$0xff] %vm1083, %v1006
  %1094 = vst.msk [vmem:[#allocation4 + $0x50] sm:$0xff] %vm1083, %v1008
  %1095 = vst.msk [vmem:[#allocation4 + $0x58] sm:$0xff] %vm1083, %v1010
  %1096 = vst.msk [vmem:[#allocation4 + $0x60] sm:$0xff] %vm1083, %v1012
  %1097 = vst.msk [vmem:[#allocation4 + $0x68] sm:$0xff] %vm1083, %v1014
  %1098 = vst.msk [vmem:[#allocation4 + $0x70] sm:$0xff] %vm1083, %v1016
  %1099 = vst.msk [vmem:[#allocation4 + $0x78] sm:$0xff] %vm1083, %v1018
  %1100 = vst.msk [vmem:[#allocation4 + $0x80] sm:$0xff] %vm1083, %v1020
  %1101 = vst.msk [vmem:[#allocation4 + $0x88] sm:$0xff] %vm1083, %v1022
  %1102 = vst.msk [vmem:[#allocation4 + $0x90] sm:$0xff] %vm1083, %v1024
  %1103 = vst.msk [vmem:[#allocation4 + $0x98] sm:$0xff] %vm1083, %v1026
  %1104 = vst.msk [vmem:[#allocation4 + $0xa0] sm:$0xff] %vm1083, %v1028
  %1105 = vst.msk [vmem:[#allocation4 + $0xa8] sm:$0xff] %vm1083, %v1030
  %1106 = vst.msk [vmem:[#allocation4 + $0xb0] sm:$0xff] %vm1083, %v1032
  %1107 = vst.msk [vmem:[#allocation4 + $0xb8] sm:$0xff] %vm1083, %v1034
  %1108 = vst.msk [vmem:[#allocation4 + $0xc0] sm:$0xff] %vm1083, %v1036
  %1109 = vst.msk [vmem:[#allocation4 + $0xc8] sm:$0xff] %vm1083, %v1038
  %1110 = vst.msk [vmem:[#allocation4 + $0xd0] sm:$0xff] %vm1083, %v1040
  %1111 = vst.msk [vmem:[#allocation4 + $0xd8] sm:$0xff] %vm1083, %v1042
  %1112 = vst.msk [vmem:[#allocation4 + $0xe0] sm:$0xff] %vm1083, %v1044
  %1113 = vst.msk [vmem:[#allocation4 + $0xe8] sm:$0xff] %vm1083, %v1046
  %1114 = vst.msk [vmem:[#allocation4 + $0xf0] sm:$0xff] %vm1083, %v1048
  %1115 = vst.msk [vmem:[#allocation4 + $0xf8] sm:$0xff] %vm1083, %v1050
  %1120 = vrot.lane.b32.xlu0 %v917, 16
  %v1121 = vpop.permute.xlu0 %1120
  %1122 = vrot.lane.b32.xlu0 %v918, 16
  %v1123 = vpop.permute.xlu0 %1122
  %1124 = vrot.lane.b32.xlu0 %v919, 16
  %v1125 = vpop.permute.xlu0 %1124
  %1126 = vrot.lane.b32.xlu0 %v920, 16
  %v1127 = vpop.permute.xlu0 %1126
  %1128 = vrot.lane.b32.xlu0 %v921, 16
  %v1129 = vpop.permute.xlu0 %1128
  %1130 = vrot.lane.b32.xlu0 %v922, 16
  %v1131 = vpop.permute.xlu0 %1130
  %1132 = vrot.lane.b32.xlu0 %v923, 16
  %v1133 = vpop.permute.xlu0 %1132
  %1134 = vrot.lane.b32.xlu0 %v924, 16
  %v1135 = vpop.permute.xlu0 %1134
  %1136 = vrot.lane.b32.xlu0 %v925, 16
  %v1137 = vpop.permute.xlu0 %1136
  %1138 = vrot.lane.b32.xlu0 %v926, 16
  %v1139 = vpop.permute.xlu0 %1138
  %1140 = vrot.lane.b32.xlu0 %v927, 16
  %v1141 = vpop.permute.xlu0 %1140
  %1142 = vrot.lane.b32.xlu0 %v928, 16
  %v1143 = vpop.permute.xlu0 %1142
  %1144 = vrot.lane.b32.xlu0 %v929, 16
  %v1145 = vpop.permute.xlu0 %1144
  %1146 = vrot.lane.b32.xlu0 %v930, 16
  %v1147 = vpop.permute.xlu0 %1146
  %1148 = vrot.lane.b32.xlu0 %v931, 16
  %v1149 = vpop.permute.xlu0 %1148
  %1150 = vrot.lane.b32.xlu0 %v932, 16
  %v1151 = vpop.permute.xlu0 %1150
  %1152 = vrot.lane.b32.xlu0 %v937, 16
  %v1153 = vpop.permute.xlu0 %1152
  %1154 = vrot.lane.b32.xlu0 %v938, 16
  %v1155 = vpop.permute.xlu0 %1154
  %1156 = vrot.lane.b32.xlu0 %v939, 16
  %v1157 = vpop.permute.xlu0 %1156
  %1158 = vrot.lane.b32.xlu0 %v940, 16
  %v1159 = vpop.permute.xlu0 %1158
  %1160 = vrot.lane.b32.xlu0 %v941, 16
  %v1161 = vpop.permute.xlu0 %1160
  %1162 = vrot.lane.b32.xlu0 %v942, 16
  %v1163 = vpop.permute.xlu0 %1162
  %1164 = vrot.lane.b32.xlu0 %v943, 16
  %v1165 = vpop.permute.xlu0 %1164
  %1166 = vrot.lane.b32.xlu0 %v944, 16
  %v1167 = vpop.permute.xlu0 %1166
  %1168 = vrot.lane.b32.xlu0 %v945, 16
  %v1169 = vpop.permute.xlu0 %1168
  %1170 = vrot.lane.b32.xlu0 %v946, 16
  %v1171 = vpop.permute.xlu0 %1170
  %1172 = vrot.lane.b32.xlu0 %v947, 16
  %v1173 = vpop.permute.xlu0 %1172
  %1174 = vrot.lane.b32.xlu0 %v948, 16
  %v1175 = vpop.permute.xlu0 %1174
  %1176 = vrot.lane.b32.xlu0 %v949, 16
  %v1177 = vpop.permute.xlu0 %1176
  %1178 = vrot.lane.b32.xlu0 %v950, 16
  %v1179 = vpop.permute.xlu0 %1178
  %1180 = vrot.lane.b32.xlu0 %v951, 16
  %v1181 = vpop.permute.xlu0 %1180
  %1182 = vrot.lane.b32.xlu0 %v952, 16
  %v1183 = vpop.permute.xlu0 %1182
  %vm1216 = vcmask 162944
  %1217 = vst.msk [vmem:[#allocation4] sm:$0xff] %vm1216, %v1121
  %1218 = vst.msk [vmem:[#allocation4 + $0x8] sm:$0xff] %vm1216, %v1123
  %1219 = vst.msk [vmem:[#allocation4 + $0x10] sm:$0xff] %vm1216, %v1125
  %1220 = vst.msk [vmem:[#allocation4 + $0x18] sm:$0xff] %vm1216, %v1127
  %1221 = vst.msk [vmem:[#allocation4 + $0x20] sm:$0xff] %vm1216, %v1129
  %1222 = vst.msk [vmem:[#allocation4 + $0x28] sm:$0xff] %vm1216, %v1131
  %1223 = vst.msk [vmem:[#allocation4 + $0x30] sm:$0xff] %vm1216, %v1133
  %1224 = vst.msk [vmem:[#allocation4 + $0x38] sm:$0xff] %vm1216, %v1135
  %1225 = vst.msk [vmem:[#allocation4 + $0x40] sm:$0xff] %vm1216, %v1137
  %1226 = vst.msk [vmem:[#allocation4 + $0x48] sm:$0xff] %vm1216, %v1139
  %1227 = vst.msk [vmem:[#allocation4 + $0x50] sm:$0xff] %vm1216, %v1141
  %1228 = vst.msk [vmem:[#allocation4 + $0x58] sm:$0xff] %vm1216, %v1143
  %1229 = vst.msk [vmem:[#allocation4 + $0x60] sm:$0xff] %vm1216, %v1145
  %1230 = vst.msk [vmem:[#allocation4 + $0x68] sm:$0xff] %vm1216, %v1147
  %1231 = vst.msk [vmem:[#allocation4 + $0x70] sm:$0xff] %vm1216, %v1149
  %1232 = vst.msk [vmem:[#allocation4 + $0x78] sm:$0xff] %vm1216, %v1151
  %1233 = vst.msk [vmem:[#allocation4 + $0x80] sm:$0xff] %vm1216, %v1153
  %1234 = vst.msk [vmem:[#allocation4 + $0x88] sm:$0xff] %vm1216, %v1155
  %1235 = vst.msk [vmem:[#allocation4 + $0x90] sm:$0xff] %vm1216, %v1157
  %1236 = vst.msk [vmem:[#allocation4 + $0x98] sm:$0xff] %vm1216, %v1159
  %1237 = vst.msk [vmem:[#allocation4 + $0xa0] sm:$0xff] %vm1216, %v1161
  %1238 = vst.msk [vmem:[#allocation4 + $0xa8] sm:$0xff] %vm1216, %v1163
  %1239 = vst.msk [vmem:[#allocation4 + $0xb0] sm:$0xff] %vm1216, %v1165
  %1240 = vst.msk [vmem:[#allocation4 + $0xb8] sm:$0xff] %vm1216, %v1167
  %1241 = vst.msk [vmem:[#allocation4 + $0xc0] sm:$0xff] %vm1216, %v1169
  %1242 = vst.msk [vmem:[#allocation4 + $0xc8] sm:$0xff] %vm1216, %v1171
  %1243 = vst.msk [vmem:[#allocation4 + $0xd0] sm:$0xff] %vm1216, %v1173
  %1244 = vst.msk [vmem:[#allocation4 + $0xd8] sm:$0xff] %vm1216, %v1175
  %1245 = vst.msk [vmem:[#allocation4 + $0xe0] sm:$0xff] %vm1216, %v1177
  %1246 = vst.msk [vmem:[#allocation4 + $0xe8] sm:$0xff] %vm1216, %v1179
  %1247 = vst.msk [vmem:[#allocation4 + $0xf0] sm:$0xff] %vm1216, %v1181
  %1248 = vst.msk [vmem:[#allocation4 + $0xf8] sm:$0xff] %vm1216, %v1183
  %1253 = vrot.lane.b32.xlu0 %v919, 28
  %v1254 = vpop.permute.xlu0 %1253
  %1255 = vrot.lane.b32.xlu0 %v920, 28
  %v1256 = vpop.permute.xlu0 %1255
  %1257 = vrot.lane.b32.xlu0 %v921, 28
  %v1258 = vpop.permute.xlu0 %1257
  %1259 = vrot.lane.b32.xlu0 %v922, 28
  %v1260 = vpop.permute.xlu0 %1259
  %1261 = vrot.lane.b32.xlu0 %v923, 28
  %v1262 = vpop.permute.xlu0 %1261
  %1263 = vrot.lane.b32.xlu0 %v924, 28
  %v1264 = vpop.permute.xlu0 %1263
  %1265 = vrot.lane.b32.xlu0 %v925, 28
  %v1266 = vpop.permute.xlu0 %1265
  %1267 = vrot.lane.b32.xlu0 %v926, 28
  %v1268 = vpop.permute.xlu0 %1267
  %1269 = vrot.lane.b32.xlu0 %v927, 28
  %v1270 = vpop.permute.xlu0 %1269
  %1271 = vrot.lane.b32.xlu0 %v928, 28
  %v1272 = vpop.permute.xlu0 %1271
  %1273 = vrot.lane.b32.xlu0 %v929, 28
  %v1274 = vpop.permute.xlu0 %1273
  %1275 = vrot.lane.b32.xlu0 %v930, 28
  %v1276 = vpop.permute.xlu0 %1275
  %1277 = vrot.lane.b32.xlu0 %v931, 28
  %v1278 = vpop.permute.xlu0 %1277
  %1279 = vrot.lane.b32.xlu0 %v932, 28
  %v1280 = vpop.permute.xlu0 %1279
  %1281 = vrot.lane.b32.xlu0 %v933, 28
  %v1282 = vpop.permute.xlu0 %1281
  %1283 = vrot.lane.b32.xlu0 %v934, 28
  %v1284 = vpop.permute.xlu0 %1283
  %1285 = vrot.lane.b32.xlu0 %v939, 28
  %v1286 = vpop.permute.xlu0 %1285
  %1287 = vrot.lane.b32.xlu0 %v940, 28
  %v1288 = vpop.permute.xlu0 %1287
  %1289 = vrot.lane.b32.xlu0 %v941, 28
  %v1290 = vpop.permute.xlu0 %1289
  %1291 = vrot.lane.b32.xlu0 %v942, 28
  %v1292 = vpop.permute.xlu0 %1291
  %1293 = vrot.lane.b32.xlu0 %v943, 28
  %v1294 = vpop.permute.xlu0 %1293
  %1295 = vrot.lane.b32.xlu0 %v944, 28
  %v1296 = vpop.permute.xlu0 %1295
  %1297 = vrot.lane.b32.xlu0 %v945, 28
  %v1298 = vpop.permute.xlu0 %1297
  %1299 = vrot.lane.b32.xlu0 %v946, 28
  %v1300 = vpop.permute.xlu0 %1299
  %1301 = vrot.lane.b32.xlu0 %v947, 28
  %v1302 = vpop.permute.xlu0 %1301
  %1303 = vrot.lane.b32.xlu0 %v948, 28
  %v1304 = vpop.permute.xlu0 %1303
  %1305 = vrot.lane.b32.xlu0 %v949, 28
  %v1306 = vpop.permute.xlu0 %1305
  %1307 = vrot.lane.b32.xlu0 %v950, 28
  %v1308 = vpop.permute.xlu0 %1307
  %1309 = vrot.lane.b32.xlu0 %v951, 28
  %v1310 = vpop.permute.xlu0 %1309
  %1311 = vrot.lane.b32.xlu0 %v952, 28
  %v1312 = vpop.permute.xlu0 %1311
  %1313 = vrot.lane.b32.xlu0 %v953, 28
  %v1314 = vpop.permute.xlu0 %1313
  %1315 = vrot.lane.b32.xlu0 %v954, 28
  %v1316 = vpop.permute.xlu0 %1315
  %vm1349 = vcmask 261344
  %1350 = vst.msk [vmem:[#allocation4] sm:$0xff] %vm1349, %v1254
  %1351 = vst.msk [vmem:[#allocation4 + $0x8] sm:$0xff] %vm1349, %v1256
  %1352 = vst.msk [vmem:[#allocation4 + $0x10] sm:$0xff] %vm1349, %v1258
  %1353 = vst.msk [vmem:[#allocation4 + $0x18] sm:$0xff] %vm1349, %v1260
  %1354 = vst.msk [vmem:[#allocation4 + $0x20] sm:$0xff] %vm1349, %v1262
  %1355 = vst.msk [vmem:[#allocation4 + $0x28] sm:$0xff] %vm1349, %v1264
  %1356 = vst.msk [vmem:[#allocation4 + $0x30] sm:$0xff] %vm1349, %v1266
  %1357 = vst.msk [vmem:[#allocation4 + $0x38] sm:$0xff] %vm1349, %v1268
  %1358 = vst.msk [vmem:[#allocation4 + $0x40] sm:$0xff] %vm1349, %v1270
  %1359 = vst.msk [vmem:[#allocation4 + $0x48] sm:$0xff] %vm1349, %v1272
  %1360 = vst.msk [vmem:[#allocation4 + $0x50] sm:$0xff] %vm1349, %v1274
  %1361 = vst.msk [vmem:[#allocation4 + $0x58] sm:$0xff] %vm1349, %v1276
  %1362 = vst.msk [vmem:[#allocation4 + $0x60] sm:$0xff] %vm1349, %v1278
  %1363 = vst.msk [vmem:[#allocation4 + $0x68] sm:$0xff] %vm1349, %v1280
  %1364 = vst.msk [vmem:[#allocation4 + $0x70] sm:$0xff] %vm1349, %v1282
  %1365 = vst.msk [vmem:[#allocation4 + $0x78] sm:$0xff] %vm1349, %v1284
  %1366 = vst.msk [vmem:[#allocation4 + $0x80] sm:$0xff] %vm1349, %v1286
  %1367 = vst.msk [vmem:[#allocation4 + $0x88] sm:$0xff] %vm1349, %v1288
  %1368 = vst.msk [vmem:[#allocation4 + $0x90] sm:$0xff] %vm1349, %v1290
  %1369 = vst.msk [vmem:[#allocation4 + $0x98] sm:$0xff] %vm1349, %v1292
  %1370 = vst.msk [vmem:[#allocation4 + $0xa0] sm:$0xff] %vm1349, %v1294
  %1371 = vst.msk [vmem:[#allocation4 + $0xa8] sm:$0xff] %vm1349, %v1296
  %1372 = vst.msk [vmem:[#allocation4 + $0xb0] sm:$0xff] %vm1349, %v1298
  %1373 = vst.msk [vmem:[#allocation4 + $0xb8] sm:$0xff] %vm1349, %v1300
  %1374 = vst.msk [vmem:[#allocation4 + $0xc0] sm:$0xff] %vm1349, %v1302
  %1375 = vst.msk [vmem:[#allocation4 + $0xc8] sm:$0xff] %vm1349, %v1304
  %1376 = vst.msk [vmem:[#allocation4 + $0xd0] sm:$0xff] %vm1349, %v1306
  %1377 = vst.msk [vmem:[#allocation4 + $0xd8] sm:$0xff] %vm1349, %v1308
  %1378 = vst.msk [vmem:[#allocation4 + $0xe0] sm:$0xff] %vm1349, %v1310
  %1379 = vst.msk [vmem:[#allocation4 + $0xe8] sm:$0xff] %vm1349, %v1312
  %1380 = vst.msk [vmem:[#allocation4 + $0xf0] sm:$0xff] %vm1349, %v1314
  %1381 = vst.msk [vmem:[#allocation4 + $0xf8] sm:$0xff] %vm1349, %v1316
  %v1382 = vld [vmem:[#allocation2 + $0x9] sm:$0xff]
  %v1383 = vld [vmem:[#allocation2 + $0x11] sm:$0xff]
  %v1384 = vld [vmem:[#allocation2 + $0x19] sm:$0xff]
  %v1385 = vld [vmem:[#allocation2 + $0x21] sm:$0xff]
  %v1386 = vld [vmem:[#allocation2 + $0x29] sm:$0xff]
  %v1387 = vld [vmem:[#allocation2 + $0x31] sm:$0xff]
  %v1388 = vld [vmem:[#allocation2 + $0x39] sm:$0xff]
  %v1389 = vld [vmem:[#allocation2 + $0x41] sm:$0xff]
  %v1390 = vld [vmem:[#allocation2 + $0x49] sm:$0xff]
  %v1391 = vld [vmem:[#allocation2 + $0x51] sm:$0xff]
  %v1392 = vld [vmem:[#allocation2 + $0x59] sm:$0xff]
  %v1393 = vld [vmem:[#allocation2 + $0x61] sm:$0xff]
  %v1394 = vld [vmem:[#allocation2 + $0x69] sm:$0xff]
  %v1395 = vld [vmem:[#allocation2 + $0x71] sm:$0xff]
  %v1396 = vld [vmem:[#allocation2 + $0x79] sm:$0xff]
  %v1397 = vld [vmem:[#allocation2 + $0x81] sm:$0xff]
  %v1398 = vld [vmem:[#allocation2 + $0x89] sm:$0xff]
  %v1399 = vld [vmem:[#allocation2 + $0x91] sm:$0xff]
  %v1400 = vld [vmem:[#allocation2 + $0x99] sm:$0xff]
  %v1401 = vld [vmem:[#allocation2 + $0xa1] sm:$0xff]
  %v1402 = vld [vmem:[#allocation2 + $0xb9] sm:$0xff]
  %v1403 = vld [vmem:[#allocation2 + $0xc1] sm:$0xff]
  %v1404 = vld [vmem:[#allocation2 + $0xc9] sm:$0xff]
  %v1405 = vld [vmem:[#allocation2 + $0xd1] sm:$0xff]
  %v1406 = vld [vmem:[#allocation2 + $0xd9] sm:$0xff]
  %v1407 = vld [vmem:[#allocation2 + $0xe1] sm:$0xff]
  %v1408 = vld [vmem:[#allocation2 + $0xe9] sm:$0xff]
  %v1409 = vld [vmem:[#allocation2 + $0xf1] sm:$0xff]
  %v1410 = vld [vmem:[#allocation2 + $0xf9] sm:$0xff]
  %v1411 = vld [vmem:[#allocation2 + $0x101] sm:$0xff]
  %v1412 = vld [vmem:[#allocation2 + $0x109] sm:$0xff]
  %v1413 = vld [vmem:[#allocation2 + $0x111] sm:$0xff]
  %v1414 = vld [vmem:[#allocation2 + $0x119] sm:$0xff]
  %v1415 = vld [vmem:[#allocation2 + $0x121] sm:$0xff]
  %v1416 = vld [vmem:[#allocation2 + $0x129] sm:$0xff]
  %v1417 = vld [vmem:[#allocation2 + $0x131] sm:$0xff]
  %v1418 = vld [vmem:[#allocation2 + $0x139] sm:$0xff]
  %v1419 = vld [vmem:[#allocation2 + $0x141] sm:$0xff]
  %v1420 = vld [vmem:[#allocation2 + $0x149] sm:$0xff]
  %v1421 = vld [vmem:[#allocation2 + $0x151] sm:$0xff]
  %1454 = vrot.lane.b32.xlu0 %v1382, 8
  %v1455 = vpop.permute.xlu0 %1454
  %1456 = vrot.lane.b32.xlu0 %v1383, 8
  %v1457 = vpop.permute.xlu0 %1456
  %1458 = vrot.lane.b32.xlu0 %v1384, 8
  %v1459 = vpop.permute.xlu0 %1458
  %1460 = vrot.lane.b32.xlu0 %v1385, 8
  %v1461 = vpop.permute.xlu0 %1460
  %1462 = vrot.lane.b32.xlu0 %v1386, 8
  %v1463 = vpop.permute.xlu0 %1462
  %1464 = vrot.lane.b32.xlu0 %v1387, 8
  %v1465 = vpop.permute.xlu0 %1464
  %1466 = vrot.lane.b32.xlu0 %v1388, 8
  %v1467 = vpop.permute.xlu0 %1466
  %1468 = vrot.lane.b32.xlu0 %v1389, 8
  %v1469 = vpop.permute.xlu0 %1468
  %1470 = vrot.lane.b32.xlu0 %v1390, 8
  %v1471 = vpop.permute.xlu0 %1470
  %1472 = vrot.lane.b32.xlu0 %v1391, 8
  %v1473 = vpop.permute.xlu0 %1472
  %1474 = vrot.lane.b32.xlu0 %v1392, 8
  %v1475 = vpop.permute.xlu0 %1474
  %1476 = vrot.lane.b32.xlu0 %v1393, 8
  %v1477 = vpop.permute.xlu0 %1476
  %1478 = vrot.lane.b32.xlu0 %v1394, 8
  %v1479 = vpop.permute.xlu0 %1478
  %1480 = vrot.lane.b32.xlu0 %v1395, 8
  %v1481 = vpop.permute.xlu0 %1480
  %1482 = vrot.lane.b32.xlu0 %v1396, 8
  %v1483 = vpop.permute.xlu0 %1482
  %1484 = vrot.lane.b32.xlu0 %v1397, 8
  %v1485 = vpop.permute.xlu0 %1484
  %1486 = vrot.lane.b32.xlu0 %v1402, 8
  %v1487 = vpop.permute.xlu0 %1486
  %1488 = vrot.lane.b32.xlu0 %v1403, 8
  %v1489 = vpop.permute.xlu0 %1488
  %1490 = vrot.lane.b32.xlu0 %v1404, 8
  %v1491 = vpop.permute.xlu0 %1490
  %1492 = vrot.lane.b32.xlu0 %v1405, 8
  %v1493 = vpop.permute.xlu0 %1492
  %1494 = vrot.lane.b32.xlu0 %v1406, 8
  %v1495 = vpop.permute.xlu0 %1494
  %1496 = vrot.lane.b32.xlu0 %v1407, 8
  %v1497 = vpop.permute.xlu0 %1496
  %1498 = vrot.lane.b32.xlu0 %v1408, 8
  %v1499 = vpop.permute.xlu0 %1498
  %1500 = vrot.lane.b32.xlu0 %v1409, 8
  %v1501 = vpop.permute.xlu0 %1500
  %1502 = vrot.lane.b32.xlu0 %v1410, 8
  %v1503 = vpop.permute.xlu0 %1502
  %1504 = vrot.lane.b32.xlu0 %v1411, 8
  %v1505 = vpop.permute.xlu0 %1504
  %1506 = vrot.lane.b32.xlu0 %v1412, 8
  %v1507 = vpop.permute.xlu0 %1506
  %1508 = vrot.lane.b32.xlu0 %v1413, 8
  %v1509 = vpop.permute.xlu0 %1508
  %1510 = vrot.lane.b32.xlu0 %v1414, 8
  %v1511 = vpop.permute.xlu0 %1510
  %1512 = vrot.lane.b32.xlu0 %v1415, 8
  %v1513 = vpop.permute.xlu0 %1512
  %1514 = vrot.lane.b32.xlu0 %v1416, 8
  %v1515 = vpop.permute.xlu0 %1514
  %1516 = vrot.lane.b32.xlu0 %v1417, 8
  %v1517 = vpop.permute.xlu0 %1516
  %vm1550 = vcmask 97344
  %1551 = vst.msk [vmem:[#allocation4] sm:$0xff] %vm1550, %v1455
  %1552 = vst.msk [vmem:[#allocation4 + $0x8] sm:$0xff] %vm1550, %v1457
  %1553 = vst.msk [vmem:[#allocation4 + $0x10] sm:$0xff] %vm1550, %v1459
  %1554 = vst.msk [vmem:[#allocation4 + $0x18] sm:$0xff] %vm1550, %v1461
  %1555 = vst.msk [vmem:[#allocation4 + $0x20] sm:$0xff] %vm1550, %v1463
  %1556 = vst.msk [vmem:[#allocation4 + $0x28] sm:$0xff] %vm1550, %v1465
  %1557 = vst.msk [vmem:[#allocation4 + $0x30] sm:$0xff] %vm1550, %v1467
  %1558 = vst.msk [vmem:[#allocation4 + $0x38] sm:$0xff] %vm1550, %v1469
  %1559 = vst.msk [vmem:[#allocation4 + $0x40] sm:$0xff] %vm1550, %v1471
  %1560 = vst.msk [vmem:[#allocation4 + $0x48] sm:$0xff] %vm1550, %v1473
  %1561 = vst.msk [vmem:[#allocation4 + $0x50] sm:$0xff] %vm1550, %v1475
  %1562 = vst.msk [vmem:[#allocation4 + $0x58] sm:$0xff] %vm1550, %v1477
  %1563 = vst.msk [vmem:[#allocation4 + $0x60] sm:$0xff] %vm1550, %v1479
  %1564 = vst.msk [vmem:[#allocation4 + $0x68] sm:$0xff] %vm1550, %v1481
  %1565 = vst.msk [vmem:[#allocation4 + $0x70] sm:$0xff] %vm1550, %v1483
  %1566 = vst.msk [vmem:[#allocation4 + $0x78] sm:$0xff] %vm1550, %v1485
  %1567 = vst.msk [vmem:[#allocation4 + $0x80] sm:$0xff] %vm1550, %v1487
  %1568 = vst.msk [vmem:[#allocation4 + $0x88] sm:$0xff] %vm1550, %v1489
  %1569 = vst.msk [vmem:[#allocation4 + $0x90] sm:$0xff] %vm1550, %v1491
  %1570 = vst.msk [vmem:[#allocation4 + $0x98] sm:$0xff] %vm1550, %v1493
  %1571 = vst.msk [vmem:[#allocation4 + $0xa0] sm:$0xff] %vm1550, %v1495
  %1572 = vst.msk [vmem:[#allocation4 + $0xa8] sm:$0xff] %vm1550, %v1497
  %1573 = vst.msk [vmem:[#allocation4 + $0xb0] sm:$0xff] %vm1550, %v1499
  %1574 = vst.msk [vmem:[#allocation4 + $0xb8] sm:$0xff] %vm1550, %v1501
  %1575 = vst.msk [vmem:[#allocation4 + $0xc0] sm:$0xff] %vm1550, %v1503
  %1576 = vst.msk [vmem:[#allocation4 + $0xc8] sm:$0xff] %vm1550, %v1505
  %1577 = vst.msk [vmem:[#allocation4 + $0xd0] sm:$0xff] %vm1550, %v1507
  %1578 = vst.msk [vmem:[#allocation4 + $0xd8] sm:$0xff] %vm1550, %v1509
  %1579 = vst.msk [vmem:[#allocation4 + $0xe0] sm:$0xff] %vm1550, %v1511
  %1580 = vst.msk [vmem:[#allocation4 + $0xe8] sm:$0xff] %vm1550, %v1513
  %1581 = vst.msk [vmem:[#allocation4 + $0xf0] sm:$0xff] %vm1550, %v1515
  %1582 = vst.msk [vmem:[#allocation4 + $0xf8] sm:$0xff] %vm1550, %v1517
  %1587 = vrot.lane.b32.xlu0 %v1384, 20
  %v1588 = vpop.permute.xlu0 %1587
  %1589 = vrot.lane.b32.xlu0 %v1385, 20
  %v1590 = vpop.permute.xlu0 %1589
  %1591 = vrot.lane.b32.xlu0 %v1386, 20
  %v1592 = vpop.permute.xlu0 %1591
  %1593 = vrot.lane.b32.xlu0 %v1387, 20
  %v1594 = vpop.permute.xlu0 %1593
  %1595 = vrot.lane.b32.xlu0 %v1388, 20
  %v1596 = vpop.permute.xlu0 %1595
  %1597 = vrot.lane.b32.xlu0 %v1389, 20
  %v1598 = vpop.permute.xlu0 %1597
  %1599 = vrot.lane.b32.xlu0 %v1390, 20
  %v1600 = vpop.permute.xlu0 %1599
  %1601 = vrot.lane.b32.xlu0 %v1391, 20
  %v1602 = vpop.permute.xlu0 %1601
  %1603 = vrot.lane.b32.xlu0 %v1392, 20
  %v1604 = vpop.permute.xlu0 %1603
  %1605 = vrot.lane.b32.xlu0 %v1393, 20
  %v1606 = vpop.permute.xlu0 %1605
  %1607 = vrot.lane.b32.xlu0 %v1394, 20
  %v1608 = vpop.permute.xlu0 %1607
  %1609 = vrot.lane.b32.xlu0 %v1395, 20
  %v1610 = vpop.permute.xlu0 %1609
  %1611 = vrot.lane.b32.xlu0 %v1396, 20
  %v1612 = vpop.permute.xlu0 %1611
  %1613 = vrot.lane.b32.xlu0 %v1397, 20
  %v1614 = vpop.permute.xlu0 %1613
  %1615 = vrot.lane.b32.xlu0 %v1398, 20
  %v1616 = vpop.permute.xlu0 %1615
  %1617 = vrot.lane.b32.xlu0 %v1399, 20
  %v1618 = vpop.permute.xlu0 %1617
  %1619 = vrot.lane.b32.xlu0 %v1404, 20
  %v1620 = vpop.permute.xlu0 %1619
  %1621 = vrot.lane.b32.xlu0 %v1405, 20
  %v1622 = vpop.permute.xlu0 %1621
  %1623 = vrot.lane.b32.xlu0 %v1406, 20
  %v1624 = vpop.permute.xlu0 %1623
  %1625 = vrot.lane.b32.xlu0 %v1407, 20
  %v1626 = vpop.permute.xlu0 %1625
  %1627 = vrot.lane.b32.xlu0 %v1408, 20
  %v1628 = vpop.permute.xlu0 %1627
  %1629 = vrot.lane.b32.xlu0 %v1409, 20
  %v1630 = vpop.permute.xlu0 %1629
  %1631 = vrot.lane.b32.xlu0 %v1410, 20
  %v1632 = vpop.permute.xlu0 %1631
  %1633 = vrot.lane.b32.xlu0 %v1411, 20
  %v1634 = vpop.permute.xlu0 %1633
  %1635 = vrot.lane.b32.xlu0 %v1412, 20
  %v1636 = vpop.permute.xlu0 %1635
  %1637 = vrot.lane.b32.xlu0 %v1413, 20
  %v1638 = vpop.permute.xlu0 %1637
  %1639 = vrot.lane.b32.xlu0 %v1414, 20
  %v1640 = vpop.permute.xlu0 %1639
  %1641 = vrot.lane.b32.xlu0 %v1415, 20
  %v1642 = vpop.permute.xlu0 %1641
  %1643 = vrot.lane.b32.xlu0 %v1416, 20
  %v1644 = vpop.permute.xlu0 %1643
  %1645 = vrot.lane.b32.xlu0 %v1417, 20
  %v1646 = vpop.permute.xlu0 %1645
  %1647 = vrot.lane.b32.xlu0 %v1418, 20
  %v1648 = vpop.permute.xlu0 %1647
  %1649 = vrot.lane.b32.xlu0 %v1419, 20
  %v1650 = vpop.permute.xlu0 %1649
  %vm1683 = vcmask 195744
  %1684 = vst.msk [vmem:[#allocation4] sm:$0xff] %vm1683, %v1588
  %1685 = vst.msk [vmem:[#allocation4 + $0x8] sm:$0xff] %vm1683, %v1590
  %1686 = vst.msk [vmem:[#allocation4 + $0x10] sm:$0xff] %vm1683, %v1592
  %1687 = vst.msk [vmem:[#allocation4 + $0x18] sm:$0xff] %vm1683, %v1594
  %1688 = vst.msk [vmem:[#allocation4 + $0x20] sm:$0xff] %vm1683, %v1596
  %1689 = vst.msk [vmem:[#allocation4 + $0x28] sm:$0xff] %vm1683, %v1598
  %1690 = vst.msk [vmem:[#allocation4 + $0x30] sm:$0xff] %vm1683, %v1600
  %1691 = vst.msk [vmem:[#allocation4 + $0x38] sm:$0xff] %vm1683, %v1602
  %1692 = vst.msk [vmem:[#allocation4 + $0x40] sm:$0xff] %vm1683, %v1604
  %1693 = vst.msk [vmem:[#allocation4 + $0x48] sm:$0xff] %vm1683, %v1606
  %1694 = vst.msk [vmem:[#allocation4 + $0x50] sm:$0xff] %vm1683, %v1608
  %1695 = vst.msk [vmem:[#allocation4 + $0x58] sm:$0xff] %vm1683, %v1610
  %1696 = vst.msk [vmem:[#allocation4 + $0x60] sm:$0xff] %vm1683, %v1612
  %1697 = vst.msk [vmem:[#allocation4 + $0x68] sm:$0xff] %vm1683, %v1614
  %1698 = vst.msk [vmem:[#allocation4 + $0x70] sm:$0xff] %vm1683, %v1616
  %1699 = vst.msk [vmem:[#allocation4 + $0x78] sm:$0xff] %vm1683, %v1618
  %1700 = vst.msk [vmem:[#allocation4 + $0x80] sm:$0xff] %vm1683, %v1620
  %1701 = vst.msk [vmem:[#allocation4 + $0x88] sm:$0xff] %vm1683, %v1622
  %1702 = vst.msk [vmem:[#allocation4 + $0x90] sm:$0xff] %vm1683, %v1624
  %1703 = vst.msk [vmem:[#allocation4 + $0x98] sm:$0xff] %vm1683, %v1626
  %1704 = vst.msk [vmem:[#allocation4 + $0xa0] sm:$0xff] %vm1683, %v1628
  %1705 = vst.msk [vmem:[#allocation4 + $0xa8] sm:$0xff] %vm1683, %v1630
  %1706 = vst.msk [vmem:[#allocation4 + $0xb0] sm:$0xff] %vm1683, %v1632
  %1707 = vst.msk [vmem:[#allocation4 + $0xb8] sm:$0xff] %vm1683, %v1634
  %1708 = vst.msk [vmem:[#allocation4 + $0xc0] sm:$0xff] %vm1683, %v1636
  %1709 = vst.msk [vmem:[#allocation4 + $0xc8] sm:$0xff] %vm1683, %v1638
  %1710 = vst.msk [vmem:[#allocation4 + $0xd0] sm:$0xff] %vm1683, %v1640
  %1711 = vst.msk [vmem:[#allocation4 + $0xd8] sm:$0xff] %vm1683, %v1642
  %1712 = vst.msk [vmem:[#allocation4 + $0xe0] sm:$0xff] %vm1683, %v1644
  %1713 = vst.msk [vmem:[#allocation4 + $0xe8] sm:$0xff] %vm1683, %v1646
  %1714 = vst.msk [vmem:[#allocation4 + $0xf0] sm:$0xff] %vm1683, %v1648
  %1715 = vst.msk [vmem:[#allocation4 + $0xf8] sm:$0xff] %vm1683, %v1650
  %1720 = vrot.lane.b32.xlu0 %v1386, 32
  %v1721 = vpop.permute.xlu0 %1720
  %1722 = vrot.lane.b32.xlu0 %v1387, 32
  %v1723 = vpop.permute.xlu0 %1722
  %1724 = vrot.lane.b32.xlu0 %v1388, 32
  %v1725 = vpop.permute.xlu0 %1724
  %1726 = vrot.lane.b32.xlu0 %v1389, 32
  %v1727 = vpop.permute.xlu0 %1726
  %1728 = vrot.lane.b32.xlu0 %v1390, 32
  %v1729 = vpop.permute.xlu0 %1728
  %1730 = vrot.lane.b32.xlu0 %v1391, 32
  %v1731 = vpop.permute.xlu0 %1730
  %1732 = vrot.lane.b32.xlu0 %v1392, 32
  %v1733 = vpop.permute.xlu0 %1732
  %1734 = vrot.lane.b32.xlu0 %v1393, 32
  %v1735 = vpop.permute.xlu0 %1734
  %1736 = vrot.lane.b32.xlu0 %v1394, 32
  %v1737 = vpop.permute.xlu0 %1736
  %1738 = vrot.lane.b32.xlu0 %v1395, 32
  %v1739 = vpop.permute.xlu0 %1738
  %1740 = vrot.lane.b32.xlu0 %v1396, 32
  %v1741 = vpop.permute.xlu0 %1740
  %1742 = vrot.lane.b32.xlu0 %v1397, 32
  %v1743 = vpop.permute.xlu0 %1742
  %1744 = vrot.lane.b32.xlu0 %v1398, 32
  %v1745 = vpop.permute.xlu0 %1744
  %1746 = vrot.lane.b32.xlu0 %v1399, 32
  %v1747 = vpop.permute.xlu0 %1746
  %1748 = vrot.lane.b32.xlu0 %v1400, 32
  %v1749 = vpop.permute.xlu0 %1748
  %1750 = vrot.lane.b32.xlu0 %v1401, 32
  %v1751 = vpop.permute.xlu0 %1750
  %1752 = vrot.lane.b32.xlu0 %v1406, 32
  %v1753 = vpop.permute.xlu0 %1752
  %1754 = vrot.lane.b32.xlu0 %v1407, 32
  %v1755 = vpop.permute.xlu0 %1754
  %1756 = vrot.lane.b32.xlu0 %v1408, 32
  %v1757 = vpop.permute.xlu0 %1756
  %1758 = vrot.lane.b32.xlu0 %v1409, 32
  %v1759 = vpop.permute.xlu0 %1758
  %1760 = vrot.lane.b32.xlu0 %v1410, 32
  %v1761 = vpop.permute.xlu0 %1760
  %1762 = vrot.lane.b32.xlu0 %v1411, 32
  %v1763 = vpop.permute.xlu0 %1762
  %1764 = vrot.lane.b32.xlu0 %v1412, 32
  %v1765 = vpop.permute.xlu0 %1764
  %1766 = vrot.lane.b32.xlu0 %v1413, 32
  %v1767 = vpop.permute.xlu0 %1766
  %1768 = vrot.lane.b32.xlu0 %v1414, 32
  %v1769 = vpop.permute.xlu0 %1768
  %1770 = vrot.lane.b32.xlu0 %v1415, 32
  %v1771 = vpop.permute.xlu0 %1770
  %1772 = vrot.lane.b32.xlu0 %v1416, 32
  %v1773 = vpop.permute.xlu0 %1772
  %1774 = vrot.lane.b32.xlu0 %v1417, 32
  %v1775 = vpop.permute.xlu0 %1774
  %1776 = vrot.lane.b32.xlu0 %v1418, 32
  %v1777 = vpop.permute.xlu0 %1776
  %1778 = vrot.lane.b32.xlu0 %v1419, 32
  %v1779 = vpop.permute.xlu0 %1778
  %1780 = vrot.lane.b32.xlu0 %v1420, 32
  %v1781 = vpop.permute.xlu0 %1780
  %1782 = vrot.lane.b32.xlu0 %v1421, 32
  %v1783 = vpop.permute.xlu0 %1782
  %vm1816 = vcmask 294144
  %1817 = vst.msk [vmem:[#allocation4] sm:$0xff] %vm1816, %v1721
  %1818 = vst.msk [vmem:[#allocation4 + $0x8] sm:$0xff] %vm1816, %v1723
  %1819 = vst.msk [vmem:[#allocation4 + $0x10] sm:$0xff] %vm1816, %v1725
  %1820 = vst.msk [vmem:[#allocation4 + $0x18] sm:$0xff] %vm1816, %v1727
  %1821 = vst.msk [vmem:[#allocation4 + $0x20] sm:$0xff] %vm1816, %v1729
  %1822 = vst.msk [vmem:[#allocation4 + $0x28] sm:$0xff] %vm1816, %v1731
  %1823 = vst.msk [vmem:[#allocation4 + $0x30] sm:$0xff] %vm1816, %v1733
  %1824 = vst.msk [vmem:[#allocation4 + $0x38] sm:$0xff] %vm1816, %v1735
  %1825 = vst.msk [vmem:[#allocation4 + $0x40] sm:$0xff] %vm1816, %v1737
  %1826 = vst.msk [vmem:[#allocation4 + $0x48] sm:$0xff] %vm1816, %v1739
  %1827 = vst.msk [vmem:[#allocation4 + $0x50] sm:$0xff] %vm1816, %v1741
  %1828 = vst.msk [vmem:[#allocation4 + $0x58] sm:$0xff] %vm1816, %v1743
  %1829 = vst.msk [vmem:[#allocation4 + $0x60] sm:$0xff] %vm1816, %v1745
  %1830 = vst.msk [vmem:[#allocation4 + $0x68] sm:$0xff] %vm1816, %v1747
  %1831 = vst.msk [vmem:[#allocation4 + $0x70] sm:$0xff] %vm1816, %v1749
  %1832 = vst.msk [vmem:[#allocation4 + $0x78] sm:$0xff] %vm1816, %v1751
  %1833 = vst.msk [vmem:[#allocation4 + $0x80] sm:$0xff] %vm1816, %v1753
  %1834 = vst.msk [vmem:[#allocation4 + $0x88] sm:$0xff] %vm1816, %v1755
  %1835 = vst.msk [vmem:[#allocation4 + $0x90] sm:$0xff] %vm1816, %v1757
  %1836 = vst.msk [vmem:[#allocation4 + $0x98] sm:$0xff] %vm1816, %v1759
  %1837 = vst.msk [vmem:[#allocation4 + $0xa0] sm:$0xff] %vm1816, %v1761
  %1838 = vst.msk [vmem:[#allocation4 + $0xa8] sm:$0xff] %vm1816, %v1763
  %1839 = vst.msk [vmem:[#allocation4 + $0xb0] sm:$0xff] %vm1816, %v1765
  %1840 = vst.msk [vmem:[#allocation4 + $0xb8] sm:$0xff] %vm1816, %v1767
  %1841 = vst.msk [vmem:[#allocation4 + $0xc0] sm:$0xff] %vm1816, %v1769
  %1842 = vst.msk [vmem:[#allocation4 + $0xc8] sm:$0xff] %vm1816, %v1771
  %1843 = vst.msk [vmem:[#allocation4 + $0xd0] sm:$0xff] %vm1816, %v1773
  %1844 = vst.msk [vmem:[#allocation4 + $0xd8] sm:$0xff] %vm1816, %v1775
  %1845 = vst.msk [vmem:[#allocation4 + $0xe0] sm:$0xff] %vm1816, %v1777
  %1846 = vst.msk [vmem:[#allocation4 + $0xe8] sm:$0xff] %vm1816, %v1779
  %1847 = vst.msk [vmem:[#allocation4 + $0xf0] sm:$0xff] %vm1816, %v1781
  %1848 = vst.msk [vmem:[#allocation4 + $0xf8] sm:$0xff] %vm1816, %v1783
  %v1849 = vld [vmem:[#allocation4] sm:$0xff]
  %v1850 = vld [vmem:[#allocation4 + $0x8] sm:$0xff]
  %v1851 = vld [vmem:[#allocation4 + $0x10] sm:$0xff]
  %v1852 = vld [vmem:[#allocation4 + $0x18] sm:$0xff]
  %v1853 = vld [vmem:[#allocation4 + $0x20] sm:$0xff]
  %v1854 = vld [vmem:[#allocation4 + $0x28] sm:$0xff]
  %v1855 = vld [vmem:[#allocation4 + $0x30] sm:$0xff]
  %v1856 = vld [vmem:[#allocation4 + $0x38] sm:$0xff]
  %v1857 = vld [vmem:[#allocation4 + $0x40] sm:$0xff]
  %v1858 = vld [vmem:[#allocation4 + $0x48] sm:$0xff]
  %v1859 = vld [vmem:[#allocation4 + $0x50] sm:$0xff]
  %v1860 = vld [vmem:[#allocation4 + $0x58] sm:$0xff]
  %v1861 = vld [vmem:[#allocation4 + $0x60] sm:$0xff]
  %v1862 = vld [vmem:[#allocation4 + $0x68] sm:$0xff]
  %v1863 = vld [vmem:[#allocation4 + $0x70] sm:$0xff]
  %v1864 = vld [vmem:[#allocation4 + $0x78] sm:$0xff]
  %v1865 = vld [vmem:[#allocation4 + $0x80] sm:$0xff]
  %v1866 = vld [vmem:[#allocation4 + $0x88] sm:$0xff]
  %v1867 = vld [vmem:[#allocation4 + $0x90] sm:$0xff]
  %v1868 = vld [vmem:[#allocation4 + $0x98] sm:$0xff]
  %v1869 = vld [vmem:[#allocation4 + $0xa0] sm:$0xff]
  %v1870 = vld [vmem:[#allocation4 + $0xa8] sm:$0xff]
  %v1871 = vld [vmem:[#allocation4 + $0xb0] sm:$0xff]
  %v1872 = vld [vmem:[#allocation4 + $0xb8] sm:$0xff]
  %v1873 = vld [vmem:[#allocation4 + $0xc0] sm:$0xff]
  %v1874 = vld [vmem:[#allocation4 + $0xc8] sm:$0xff]
  %v1875 = vld [vmem:[#allocation4 + $0xd0] sm:$0xff]
  %v1876 = vld [vmem:[#allocation4 + $0xd8] sm:$0xff]
  %v1877 = vld [vmem:[#allocation4 + $0xe0] sm:$0xff]
  %v1878 = vld [vmem:[#allocation4 + $0xe8] sm:$0xff]
  %v1879 = vld [vmem:[#allocation4 + $0xf0] sm:$0xff]
  %v1880 = vld [vmem:[#allocation4 + $0xf8] sm:$0xff]
  %v1881 = vld [vmem:[%s1] sm:$0xff]
  %v1882 = vld [vmem:[%s1 + $0x8] sm:$0xff]
  %v1883 = vld [vmem:[%s1 + $0x10] sm:$0xff]
  %v1884 = vld [vmem:[%s1 + $0x18] sm:$0xff]
  %v1885 = vld [vmem:[%s1 + $0x20] sm:$0xf]
  %v1886 = vld [vmem:[%s2] sm:$0x1]
  %v1888 = vperm.slane %v1886, 0
  %vm1890 = vcmask 293888
  %v1892 = vsel %vm1890, %v1849, 0
  %v1895 = vsel %vm1890, %v1850, 0
  %v1898 = vsel %vm1890, %v1851, 0
  %v1901 = vsel %vm1890, %v1852, 0
  %v1904 = vsel %vm1890, %v1853, 0
  %v1907 = vsel %vm1890, %v1854, 0
  %v1910 = vsel %vm1890, %v1855, 0
  %v1913 = vsel %vm1890, %v1856, 0
  %v1916 = vsel %vm1890, %v1857, 0
  %v1919 = vsel %vm1890, %v1858, 0
  %v1922 = vsel %vm1890, %v1859, 0
  %v1925 = vsel %vm1890, %v1860, 0
  %v1928 = vsel %vm1890, %v1861, 0
  %v1931 = vsel %vm1890, %v1862, 0
  %v1934 = vsel %vm1890, %v1863, 0
  %v1937 = vsel %vm1890, %v1864, 0
  %v1940 = vsel %vm1890, %v1865, 0
  %v1943 = vsel %vm1890, %v1866, 0
  %v1946 = vsel %vm1890, %v1867, 0
  %v1949 = vsel %vm1890, %v1868, 0
  %v1952 = vsel %vm1890, %v1869, 0
  %v1955 = vsel %vm1890, %v1870, 0
  %v1958 = vsel %vm1890, %v1871, 0
  %v1961 = vsel %vm1890, %v1872, 0
  %v1964 = vsel %vm1890, %v1873, 0
  %v1967 = vsel %vm1890, %v1874, 0
  %v1970 = vsel %vm1890, %v1875, 0
  %v1973 = vsel %vm1890, %v1876, 0
  %v1976 = vsel %vm1890, %v1877, 0
  %v1979 = vsel %vm1890, %v1878, 0
  %v1982 = vsel %vm1890, %v1879, 0
  %v1985 = vsel %vm1890, %v1880, 0
  %vm1987 = vcmask 1043456
  %v1989 = vsel %vm1987, %v1885, 0
  %1991 = vmatpush.msra.mxu0 0.0
  %1992 = vmatpush.msra.mxu0 0.0
  %1993 = vmatpush.msra.mxu0 0.0
  %1994 = vmatpush.msra.mxu0 0.0
  %1995 = vmatpush.msra.mxu0 0.0
  %1996 = vmatpush.msra.mxu0 0.0
  %1997 = vmatpush.msra.mxu0 0.0
  %1998 = vmatpush.msra.mxu0 0.0
  %1999 = vmatpush.msra.mxu0 0.0
  %2000 = vmatpush.msra.mxu0 0.0
  %2001 = vmatpush.msra.mxu0 0.0
  %2002 = vmatpush.msra.mxu0 %v1989
  %2003 = vmatpush.msra.mxu0 %v1884
  %2004 = vmatpush.msra.mxu0 %v1883
  %2005 = vmatpush.msra.mxu0 %v1882
  %2006 = vmatpush.msra.mxu0 %v1881
  %2007 = vmatmul.f32.gmra.mxu0 %v1892
  %v2008 = vpop.f32.mrf.mxu0
  %v2009 = vadd.f32 %v1888, %v2008
  %2010 = vmatmul.f32.gmra.mxu0 %v1895
  %v2011 = vpop.f32.mrf.mxu0
  %v2012 = vadd.f32 %v1888, %v2011
  %2013 = vmatmul.f32.gmra.mxu0 %v1898
  %v2014 = vpop.f32.mrf.mxu0
  %v2015 = vadd.f32 %v1888, %v2014
  %2016 = vmatmul.f32.gmra.mxu0 %v1901
  %v2017 = vpop.f32.mrf.mxu0
  %v2018 = vadd.f32 %v1888, %v2017
  %2019 = vmatmul.f32.gmra.mxu0 %v1904
  %v2020 = vpop.f32.mrf.mxu0
  %v2021 = vadd.f32 %v1888, %v2020
  %2022 = vmatmul.f32.gmra.mxu0 %v1907
  %v2023 = vpop.f32.mrf.mxu0
  %v2024 = vadd.f32 %v1888, %v2023
  %2025 = vmatmul.f32.gmra.mxu0 %v1910
  %v2026 = vpop.f32.mrf.mxu0
  %v2027 = vadd.f32 %v1888, %v2026
  %2028 = vmatmul.f32.gmra.mxu0 %v1913
  %v2029 = vpop.f32.mrf.mxu0
  %v2030 = vadd.f32 %v1888, %v2029
  %2031 = vmatmul.f32.gmra.mxu0 %v1916
  %v2032 = vpop.f32.mrf.mxu0
  %v2033 = vadd.f32 %v1888, %v2032
  %2034 = vmatmul.f32.gmra.mxu0 %v1919
  %v2035 = vpop.f32.mrf.mxu0
  %v2036 = vadd.f32 %v1888, %v2035
  %2037 = vmatmul.f32.gmra.mxu0 %v1922
  %v2038 = vpop.f32.mrf.mxu0
  %v2039 = vadd.f32 %v1888, %v2038
  %2040 = vmatmul.f32.gmra.mxu0 %v1925
  %v2041 = vpop.f32.mrf.mxu0
  %v2042 = vadd.f32 %v1888, %v2041
  %2043 = vmatmul.f32.gmra.mxu0 %v1928
  %v2044 = vpop.f32.mrf.mxu0
  %v2045 = vadd.f32 %v1888, %v2044
  %2046 = vmatmul.f32.gmra.mxu0 %v1931
  %v2047 = vpop.f32.mrf.mxu0
  %v2048 = vadd.f32 %v1888, %v2047
  %2049 = vmatmul.f32.gmra.mxu0 %v1934
  %v2050 = vpop.f32.mrf.mxu0
  %v2051 = vadd.f32 %v1888, %v2050
  %2052 = vmatmul.f32.gmra.mxu0 %v1937
  %v2053 = vpop.f32.mrf.mxu0
  %v2054 = vadd.f32 %v1888, %v2053
  %2055 = vmatmul.f32.gmra.mxu0 %v1940
  %v2056 = vpop.f32.mrf.mxu0
  %v2057 = vadd.f32 %v1888, %v2056
  %2058 = vmatmul.f32.gmra.mxu0 %v1943
  %v2059 = vpop.f32.mrf.mxu0
  %v2060 = vadd.f32 %v1888, %v2059
  %2061 = vmatmul.f32.gmra.mxu0 %v1946
  %v2062 = vpop.f32.mrf.mxu0
  %v2063 = vadd.f32 %v1888, %v2062
  %2064 = vmatmul.f32.gmra.mxu0 %v1949
  %v2065 = vpop.f32.mrf.mxu0
  %v2066 = vadd.f32 %v1888, %v2065
  %2067 = vmatmul.f32.gmra.mxu0 %v1952
  %v2068 = vpop.f32.mrf.mxu0
  %v2069 = vadd.f32 %v1888, %v2068
  %2070 = vmatmul.f32.gmra.mxu0 %v1955
  %v2071 = vpop.f32.mrf.mxu0
  %v2072 = vadd.f32 %v1888, %v2071
  %2073 = vmatmul.f32.gmra.mxu0 %v1958
  %v2074 = vpop.f32.mrf.mxu0
  %v2075 = vadd.f32 %v1888, %v2074
  %2076 = vmatmul.f32.gmra.mxu0 %v1961
  %v2077 = vpop.f32.mrf.mxu0
  %v2078 = vadd.f32 %v1888, %v2077
  %2079 = vmatmul.f32.gmra.mxu0 %v1964
  %v2080 = vpop.f32.mrf.mxu0
  %v2081 = vadd.f32 %v1888, %v2080
  %2082 = vmatmul.f32.gmra.mxu0 %v1967
  %v2083 = vpop.f32.mrf.mxu0
  %v2084 = vadd.f32 %v1888, %v2083
  %2085 = vmatmul.f32.gmra.mxu0 %v1970
  %v2086 = vpop.f32.mrf.mxu0
  %v2087 = vadd.f32 %v1888, %v2086
  %2088 = vmatmul.f32.gmra.mxu0 %v1973
  %v2089 = vpop.f32.mrf.mxu0
  %v2090 = vadd.f32 %v1888, %v2089
  %2091 = vmatmul.f32.gmra.mxu0 %v1976
  %v2092 = vpop.f32.mrf.mxu0
  %v2093 = vadd.f32 %v1888, %v2092
  %2094 = vmatmul.f32.gmra.mxu0 %v1979
  %v2095 = vpop.f32.mrf.mxu0
  %v2096 = vadd.f32 %v1888, %v2095
  %2097 = vmatmul.f32.gmra.mxu0 %v1982
  %v2098 = vpop.f32.mrf.mxu0
  %v2099 = vadd.f32 %v1888, %v2098
  %2100 = vmatmul.f32.gmra.mxu0 %v1985
  %v2101 = vpop.f32.mrf.mxu0
  %v2102 = vadd.f32 %v1888, %v2101
  %2103 = vdwg.mxu0
  %v2104 = vmax.f32 %v2009, 0.0
  %v2105 = vmax.f32 %v2012, 0.0
  %v2106 = vmax.f32 %v2015, 0.0
  %v2107 = vmax.f32 %v2018, 0.0
  %v2108 = vmax.f32 %v2021, 0.0
  %v2109 = vmax.f32 %v2024, 0.0
  %v2110 = vmax.f32 %v2027, 0.0
  %v2111 = vmax.f32 %v2030, 0.0
  %v2112 = vmax.f32 %v2033, 0.0
  %v2113 = vmax.f32 %v2036, 0.0
  %v2114 = vmax.f32 %v2039, 0.0
  %v2115 = vmax.f32 %v2042, 0.0
  %v2116 = vmax.f32 %v2045, 0.0
  %v2117 = vmax.f32 %v2048, 0.0
  %v2118 = vmax.f32 %v2051, 0.0
  %v2119 = vmax.f32 %v2054, 0.0
  %v2120 = vmax.f32 %v2057, 0.0
  %v2121 = vmax.f32 %v2060, 0.0
  %v2122 = vmax.f32 %v2063, 0.0
  %v2123 = vmax.f32 %v2066, 0.0
  %v2124 = vmax.f32 %v2069, 0.0
  %v2125 = vmax.f32 %v2072, 0.0
  %v2126 = vmax.f32 %v2075, 0.0
  %v2127 = vmax.f32 %v2078, 0.0
  %v2128 = vmax.f32 %v2081, 0.0
  %v2129 = vmax.f32 %v2084, 0.0
  %v2130 = vmax.f32 %v2087, 0.0
  %v2131 = vmax.f32 %v2090, 0.0
  %v2132 = vmax.f32 %v2093, 0.0
  %v2133 = vmax.f32 %v2096, 0.0
  %v2134 = vmax.f32 %v2099, 0.0
  %v2135 = vmax.f32 %v2102, 0.0
  %v2136 = vlaneseq
  %v2137 = vshrl.u32 %v2136, 7
  %v2138 = vadd.s32 %v2137, 8
  %v2139 = vadd.s32 %v2137, 16
  %v2140 = vadd.s32 %v2137, 24
  %v2141 = vadd.s32 %v2137, 32
  %v2142 = vadd.s32 %v2137, 40
  %v2143 = vadd.s32 %v2137, 48
  %v2144 = vadd.s32 %v2137, 56
  %v2145 = vadd.s32 %v2137, 64
  %v2146 = vadd.s32 %v2137, 72
  %v2147 = vadd.s32 %v2137, 80
  %v2148 = vadd.s32 %v2137, 88
  %v2149 = vadd.s32 %v2137, 96
  %v2150 = vadd.s32 %v2137, 104
  %v2151 = vadd.s32 %v2137, 112
  %v2152 = vadd.s32 %v2137, 120
  %v2153 = vadd.s32 %v2137, 128
  %v2154 = vadd.s32 %v2137, 136
  %v2155 = vadd.s32 %v2137, 144
  %v2156 = vadd.s32 %v2137, 152
  %v2157 = vadd.s32 %v2137, 160
  %v2158 = vadd.s32 %v2137, 168
  %v2159 = vadd.s32 %v2137, 176
  %v2160 = vadd.s32 %v2137, 184
  %v2161 = vadd.s32 %v2137, 192
  %v2162 = vadd.s32 %v2137, 200
  %v2163 = vadd.s32 %v2137, 208
  %v2164 = vadd.s32 %v2137, 216
  %v2165 = vadd.s32 %v2137, 224
  %v2166 = vadd.s32 %v2137, 232
  %v2167 = vadd.s32 %v2137, 240
  %v2168 = vadd.s32 %v2137, 248
  %vm2169 = vcmp.lt.s32.totalorder %v2137, 0
  %v2170 = vsub.s32 0, %v2137
  %v2171 = vsel %vm2169, %v2170, %v2137
  %v2172 = vshrl.u32 %v2171, 4
  %v2173 = vand.u32 %v2171, 15
  %v2174 = vsub.s32 0, %v2173
  %v2175 = vsel %vm2169, %v2174, %v2173
  %vm2176 = vcmp.lt.s32.totalorder %v2138, 0
  %v2177 = vsub.s32 0, %v2138
  %v2178 = vsel %vm2176, %v2177, %v2138
  %v2179 = vshrl.u32 %v2178, 4
  %v2180 = vand.u32 %v2178, 15
  %v2181 = vsub.s32 0, %v2180
  %v2182 = vsel %vm2176, %v2181, %v2180
  %vm2183 = vcmp.lt.s32.totalorder %v2139, 0
  %v2184 = vsub.s32 0, %v2139
  %v2185 = vsel %vm2183, %v2184, %v2139
  %v2186 = vshrl.u32 %v2185, 4
  %v2187 = vand.u32 %v2185, 15
  %v2188 = vsub.s32 0, %v2187
  %v2189 = vsel %vm2183, %v2188, %v2187
  %vm2190 = vcmp.lt.s32.totalorder %v2140, 0
  %v2191 = vsub.s32 0, %v2140
  %v2192 = vsel %vm2190, %v2191, %v2140
  %v2193 = vshrl.u32 %v2192, 4
  %v2194 = vand.u32 %v2192, 15
  %v2195 = vsub.s32 0, %v2194
  %v2196 = vsel %vm2190, %v2195, %v2194
  %vm2197 = vcmp.lt.s32.totalorder %v2141, 0
  %v2198 = vsub.s32 0, %v2141
  %v2199 = vsel %vm2197, %v2198, %v2141
  %v2200 = vshrl.u32 %v2199, 4
  %v2201 = vand.u32 %v2199, 15
  %v2202 = vsub.s32 0, %v2201
  %v2203 = vsel %vm2197, %v2202, %v2201
  %vm2204 = vcmp.lt.s32.totalorder %v2142, 0
  %v2205 = vsub.s32 0, %v2142
  %v2206 = vsel %vm2204, %v2205, %v2142
  %v2207 = vshrl.u32 %v2206, 4
  %v2208 = vand.u32 %v2206, 15
  %v2209 = vsub.s32 0, %v2208
  %v2210 = vsel %vm2204, %v2209, %v2208
  %vm2211 = vcmp.lt.s32.totalorder %v2143, 0
  %v2212 = vsub.s32 0, %v2143
  %v2213 = vsel %vm2211, %v2212, %v2143
  %v2214 = vshrl.u32 %v2213, 4
  %v2215 = vand.u32 %v2213, 15
  %v2216 = vsub.s32 0, %v2215
  %v2217 = vsel %vm2211, %v2216, %v2215
  %vm2218 = vcmp.lt.s32.totalorder %v2144, 0
  %v2219 = vsub.s32 0, %v2144
  %v2220 = vsel %vm2218, %v2219, %v2144
  %v2221 = vshrl.u32 %v2220, 4
  %v2222 = vand.u32 %v2220, 15
  %v2223 = vsub.s32 0, %v2222
  %v2224 = vsel %vm2218, %v2223, %v2222
  %vm2225 = vcmp.lt.s32.totalorder %v2145, 0
  %v2226 = vsub.s32 0, %v2145
  %v2227 = vsel %vm2225, %v2226, %v2145
  %v2228 = vshrl.u32 %v2227, 4
  %v2229 = vand.u32 %v2227, 15
  %v2230 = vsub.s32 0, %v2229
  %v2231 = vsel %vm2225, %v2230, %v2229
  %vm2232 = vcmp.lt.s32.totalorder %v2146, 0
  %v2233 = vsub.s32 0, %v2146
  %v2234 = vsel %vm2232, %v2233, %v2146
  %v2235 = vshrl.u32 %v2234, 4
  %v2236 = vand.u32 %v2234, 15
  %v2237 = vsub.s32 0, %v2236
  %v2238 = vsel %vm2232, %v2237, %v2236
  %vm2239 = vcmp.lt.s32.totalorder %v2147, 0
  %v2240 = vsub.s32 0, %v2147
  %v2241 = vsel %vm2239, %v2240, %v2147
  %v2242 = vshrl.u32 %v2241, 4
  %v2243 = vand.u32 %v2241, 15
  %v2244 = vsub.s32 0, %v2243
  %v2245 = vsel %vm2239, %v2244, %v2243
  %vm2246 = vcmp.lt.s32.totalorder %v2148, 0
  %v2247 = vsub.s32 0, %v2148
  %v2248 = vsel %vm2246, %v2247, %v2148
  %v2249 = vshrl.u32 %v2248, 4
  %v2250 = vand.u32 %v2248, 15
  %v2251 = vsub.s32 0, %v2250
  %v2252 = vsel %vm2246, %v2251, %v2250
  %vm2253 = vcmp.lt.s32.totalorder %v2149, 0
  %v2254 = vsub.s32 0, %v2149
  %v2255 = vsel %vm2253, %v2254, %v2149
  %v2256 = vshrl.u32 %v2255, 4
  %v2257 = vand.u32 %v2255, 15
  %v2258 = vsub.s32 0, %v2257
  %v2259 = vsel %vm2253, %v2258, %v2257
  %vm2260 = vcmp.lt.s32.totalorder %v2150, 0
  %v2261 = vsub.s32 0, %v2150
  %v2262 = vsel %vm2260, %v2261, %v2150
  %v2263 = vshrl.u32 %v2262, 4
  %v2264 = vand.u32 %v2262, 15
  %v2265 = vsub.s32 0, %v2264
  %v2266 = vsel %vm2260, %v2265, %v2264
  %vm2267 = vcmp.lt.s32.totalorder %v2151, 0
  %v2268 = vsub.s32 0, %v2151
  %v2269 = vsel %vm2267, %v2268, %v2151
  %v2270 = vshrl.u32 %v2269, 4
  %v2271 = vand.u32 %v2269, 15
  %v2272 = vsub.s32 0, %v2271
  %v2273 = vsel %vm2267, %v2272, %v2271
  %vm2274 = vcmp.lt.s32.totalorder %v2152, 0
  %v2275 = vsub.s32 0, %v2152
  %v2276 = vsel %vm2274, %v2275, %v2152
  %v2277 = vshrl.u32 %v2276, 4
  %v2278 = vand.u32 %v2276, 15
  %v2279 = vsub.s32 0, %v2278
  %v2280 = vsel %vm2274, %v2279, %v2278
  %vm2281 = vcmp.lt.s32.totalorder %v2153, 0
  %v2282 = vsub.s32 0, %v2153
  %v2283 = vsel %vm2281, %v2282, %v2153
  %v2284 = vshrl.u32 %v2283, 4
  %v2285 = vand.u32 %v2283, 15
  %v2286 = vsub.s32 0, %v2285
  %v2287 = vsel %vm2281, %v2286, %v2285
  %vm2288 = vcmp.lt.s32.totalorder %v2154, 0
  %v2289 = vsub.s32 0, %v2154
  %v2290 = vsel %vm2288, %v2289, %v2154
  %v2291 = vshrl.u32 %v2290, 4
  %v2292 = vand.u32 %v2290, 15
  %v2293 = vsub.s32 0, %v2292
  %v2294 = vsel %vm2288, %v2293, %v2292
  %vm2295 = vcmp.lt.s32.totalorder %v2155, 0
  %v2296 = vsub.s32 0, %v2155
  %v2297 = vsel %vm2295, %v2296, %v2155
  %v2298 = vshrl.u32 %v2297, 4
  %v2299 = vand.u32 %v2297, 15
  %v2300 = vsub.s32 0, %v2299
  %v2301 = vsel %vm2295, %v2300, %v2299
  %vm2302 = vcmp.lt.s32.totalorder %v2156, 0
  %v2303 = vsub.s32 0, %v2156
  %v2304 = vsel %vm2302, %v2303, %v2156
  %v2305 = vshrl.u32 %v2304, 4
  %v2306 = vand.u32 %v2304, 15
  %v2307 = vsub.s32 0, %v2306
  %v2308 = vsel %vm2302, %v2307, %v2306
  %vm2309 = vcmp.lt.s32.totalorder %v2157, 0
  %v2310 = vsub.s32 0, %v2157
  %v2311 = vsel %vm2309, %v2310, %v2157
  %v2312 = vshrl.u32 %v2311, 4
  %v2313 = vand.u32 %v2311, 15
  %v2314 = vsub.s32 0, %v2313
  %v2315 = vsel %vm2309, %v2314, %v2313
  %vm2316 = vcmp.lt.s32.totalorder %v2158, 0
  %v2317 = vsub.s32 0, %v2158
  %v2318 = vsel %vm2316, %v2317, %v2158
  %v2319 = vshrl.u32 %v2318, 4
  %v2320 = vand.u32 %v2318, 15
  %v2321 = vsub.s32 0, %v2320
  %v2322 = vsel %vm2316, %v2321, %v2320
  %vm2323 = vcmp.lt.s32.totalorder %v2159, 0
  %v2324 = vsub.s32 0, %v2159
  %v2325 = vsel %vm2323, %v2324, %v2159
  %v2326 = vshrl.u32 %v2325, 4
  %v2327 = vand.u32 %v2325, 15
  %v2328 = vsub.s32 0, %v2327
  %v2329 = vsel %vm2323, %v2328, %v2327
  %vm2330 = vcmp.lt.s32.totalorder %v2160, 0
  %v2331 = vsub.s32 0, %v2160
  %v2332 = vsel %vm2330, %v2331, %v2160
  %v2333 = vshrl.u32 %v2332, 4
  %v2334 = vand.u32 %v2332, 15
  %v2335 = vsub.s32 0, %v2334
  %v2336 = vsel %vm2330, %v2335, %v2334
  %vm2337 = vcmp.lt.s32.totalorder %v2161, 0
  %v2338 = vsub.s32 0, %v2161
  %v2339 = vsel %vm2337, %v2338, %v2161
  %v2340 = vshrl.u32 %v2339, 4
  %v2341 = vand.u32 %v2339, 15
  %v2342 = vsub.s32 0, %v2341
  %v2343 = vsel %vm2337, %v2342, %v2341
  %vm2344 = vcmp.lt.s32.totalorder %v2162, 0
  %v2345 = vsub.s32 0, %v2162
  %v2346 = vsel %vm2344, %v2345, %v2162
  %v2347 = vshrl.u32 %v2346, 4
  %v2348 = vand.u32 %v2346, 15
  %v2349 = vsub.s32 0, %v2348
  %v2350 = vsel %vm2344, %v2349, %v2348
  %vm2351 = vcmp.lt.s32.totalorder %v2163, 0
  %v2352 = vsub.s32 0, %v2163
  %v2353 = vsel %vm2351, %v2352, %v2163
  %v2354 = vshrl.u32 %v2353, 4
  %v2355 = vand.u32 %v2353, 15
  %v2356 = vsub.s32 0, %v2355
  %v2357 = vsel %vm2351, %v2356, %v2355
  %vm2358 = vcmp.lt.s32.totalorder %v2164, 0
  %v2359 = vsub.s32 0, %v2164
  %v2360 = vsel %vm2358, %v2359, %v2164
  %v2361 = vshrl.u32 %v2360, 4
  %v2362 = vand.u32 %v2360, 15
  %v2363 = vsub.s32 0, %v2362
  %v2364 = vsel %vm2358, %v2363, %v2362
  %vm2365 = vcmp.lt.s32.totalorder %v2165, 0
  %v2366 = vsub.s32 0, %v2165
  %v2367 = vsel %vm2365, %v2366, %v2165
  %v2368 = vshrl.u32 %v2367, 4
  %v2369 = vand.u32 %v2367, 15
  %v2370 = vsub.s32 0, %v2369
  %v2371 = vsel %vm2365, %v2370, %v2369
  %vm2372 = vcmp.lt.s32.totalorder %v2166, 0
  %v2373 = vsub.s32 0, %v2166
  %v2374 = vsel %vm2372, %v2373, %v2166
  %v2375 = vshrl.u32 %v2374, 4
  %v2376 = vand.u32 %v2374, 15
  %v2377 = vsub.s32 0, %v2376
  %v2378 = vsel %vm2372, %v2377, %v2376
  %vm2379 = vcmp.lt.s32.totalorder %v2167, 0
  %v2380 = vsub.s32 0, %v2167
  %v2381 = vsel %vm2379, %v2380, %v2167
  %v2382 = vshrl.u32 %v2381, 4
  %v2383 = vand.u32 %v2381, 15
  %v2384 = vsub.s32 0, %v2383
  %v2385 = vsel %vm2379, %v2384, %v2383
  %vm2386 = vcmp.lt.s32.totalorder %v2168, 0
  %v2387 = vsub.s32 0, %v2168
  %v2388 = vsel %vm2386, %v2387, %v2168
  %v2389 = vshrl.u32 %v2388, 4
  %v2390 = vand.u32 %v2388, 15
  %v2391 = vsub.s32 0, %v2390
  %v2392 = vsel %vm2386, %v2391, %v2390
  %vm2393 = vcmp.ne.s32.totalorder %v2175, 0
  %vm2394 = vcmp.ne.s32.totalorder %v2182, 0
  %vm2395 = vcmp.ne.s32.totalorder %v2189, 0
  %vm2396 = vcmp.ne.s32.totalorder %v2196, 0
  %vm2397 = vcmp.ne.s32.totalorder %v2203, 0
  %vm2398 = vcmp.ne.s32.totalorder %v2210, 0
  %vm2399 = vcmp.ne.s32.totalorder %v2217, 0
  %vm2400 = vcmp.ne.s32.totalorder %v2224, 0
  %vm2401 = vcmp.ne.s32.totalorder %v2231, 0
  %vm2402 = vcmp.ne.s32.totalorder %v2238, 0
  %vm2403 = vcmp.ne.s32.totalorder %v2245, 0
  %vm2404 = vcmp.ne.s32.totalorder %v2252, 0
  %vm2405 = vcmp.ne.s32.totalorder %v2259, 0
  %vm2406 = vcmp.ne.s32.totalorder %v2266, 0
  %vm2407 = vcmp.ne.s32.totalorder %v2273, 0
  %vm2408 = vcmp.ne.s32.totalorder %v2280, 0
  %vm2409 = vcmp.ne.s32.totalorder %v2287, 0
  %vm2410 = vcmp.ne.s32.totalorder %v2294, 0
  %vm2411 = vcmp.ne.s32.totalorder %v2301, 0
  %vm2412 = vcmp.ne.s32.totalorder %v2308, 0
  %vm2413 = vcmp.ne.s32.totalorder %v2315, 0
  %vm2414 = vcmp.ne.s32.totalorder %v2322, 0
  %vm2415 = vcmp.ne.s32.totalorder %v2329, 0
  %vm2416 = vcmp.ne.s32.totalorder %v2336, 0
  %vm2417 = vcmp.ne.s32.totalorder %v2343, 0
  %vm2418 = vcmp.ne.s32.totalorder %v2350, 0
  %vm2419 = vcmp.ne.s32.totalorder %v2357, 0
  %vm2420 = vcmp.ne.s32.totalorder %v2364, 0
  %vm2421 = vcmp.ne.s32.totalorder %v2371, 0
  %vm2422 = vcmp.ne.s32.totalorder %v2378, 0
  %vm2423 = vcmp.ne.s32.totalorder %v2385, 0
  %vm2424 = vcmp.ne.s32.totalorder %v2392, 0
  %vm2425 = vcmp.lt.s32.totalorder %v2175, 0
  %vm2426 = vcmp.lt.s32.totalorder %v2182, 0
  %vm2427 = vcmp.lt.s32.totalorder %v2189, 0
  %vm2428 = vcmp.lt.s32.totalorder %v2196, 0
  %vm2429 = vcmp.lt.s32.totalorder %v2203, 0
  %vm2430 = vcmp.lt.s32.totalorder %v2210, 0
  %vm2431 = vcmp.lt.s32.totalorder %v2217, 0
  %vm2432 = vcmp.lt.s32.totalorder %v2224, 0
  %vm2433 = vcmp.lt.s32.totalorder %v2231, 0
  %vm2434 = vcmp.lt.s32.totalorder %v2238, 0
  %vm2435 = vcmp.lt.s32.totalorder %v2245, 0
  %vm2436 = vcmp.lt.s32.totalorder %v2252, 0
  %vm2437 = vcmp.lt.s32.totalorder %v2259, 0
  %vm2438 = vcmp.lt.s32.totalorder %v2266, 0
  %vm2439 = vcmp.lt.s32.totalorder %v2273, 0
  %vm2440 = vcmp.lt.s32.totalorder %v2280, 0
  %vm2441 = vcmp.lt.s32.totalorder %v2287, 0
  %vm2442 = vcmp.lt.s32.totalorder %v2294, 0
  %vm2443 = vcmp.lt.s32.totalorder %v2301, 0
  %vm2444 = vcmp.lt.s32.totalorder %v2308, 0
  %vm2445 = vcmp.lt.s32.totalorder %v2315, 0
  %vm2446 = vcmp.lt.s32.totalorder %v2322, 0
  %vm2447 = vcmp.lt.s32.totalorder %v2329, 0
  %vm2448 = vcmp.lt.s32.totalorder %v2336, 0
  %vm2449 = vcmp.lt.s32.totalorder %v2343, 0
  %vm2450 = vcmp.lt.s32.totalorder %v2350, 0
  %vm2451 = vcmp.lt.s32.totalorder %v2357, 0
  %vm2452 = vcmp.lt.s32.totalorder %v2364, 0
  %vm2453 = vcmp.lt.s32.totalorder %v2371, 0
  %vm2454 = vcmp.lt.s32.totalorder %v2378, 0
  %vm2455 = vcmp.lt.s32.totalorder %v2385, 0
  %vm2456 = vcmp.lt.s32.totalorder %v2392, 0
  %vm2457 = vmand %vm2425, %vm2393
  %vm2458 = vmand %vm2426, %vm2394
  %vm2459 = vmand %vm2427, %vm2395
  %vm2460 = vmand %vm2428, %vm2396
  %vm2461 = vmand %vm2429, %vm2397
  %vm2462 = vmand %vm2430, %vm2398
  %vm2463 = vmand %vm2431, %vm2399
  %vm2464 = vmand %vm2432, %vm2400
  %vm2465 = vmand %vm2433, %vm2401
  %vm2466 = vmand %vm2434, %vm2402
  %vm2467 = vmand %vm2435, %vm2403
  %vm2468 = vmand %vm2436, %vm2404
  %vm2469 = vmand %vm2437, %vm2405
  %vm2470 = vmand %vm2438, %vm2406
  %vm2471 = vmand %vm2439, %vm2407
  %vm2472 = vmand %vm2440, %vm2408
  %vm2473 = vmand %vm2441, %vm2409
  %vm2474 = vmand %vm2442, %vm2410
  %vm2475 = vmand %vm2443, %vm2411
  %vm2476 = vmand %vm2444, %vm2412
  %vm2477 = vmand %vm2445, %vm2413
  %vm2478 = vmand %vm2446, %vm2414
  %vm2479 = vmand %vm2447, %vm2415
  %vm2480 = vmand %vm2448, %vm2416
  %vm2481 = vmand %vm2449, %vm2417
  %vm2482 = vmand %vm2450, %vm2418
  %vm2483 = vmand %vm2451, %vm2419
  %vm2484 = vmand %vm2452, %vm2420
  %vm2485 = vmand %vm2453, %vm2421
  %vm2486 = vmand %vm2454, %vm2422
  %vm2487 = vmand %vm2455, %vm2423
  %vm2488 = vmand %vm2456, %vm2424
  %v2489 = vadd.s32 %v2175, 16
  %v2490 = vadd.s32 %v2182, 16
  %v2491 = vadd.s32 %v2189, 16
  %v2492 = vadd.s32 %v2196, 16
  %v2493 = vadd.s32 %v2203, 16
  %v2494 = vadd.s32 %v2210, 16
  %v2495 = vadd.s32 %v2217, 16
  %v2496 = vadd.s32 %v2224, 16
  %v2497 = vadd.s32 %v2231, 16
  %v2498 = vadd.s32 %v2238, 16
  %v2499 = vadd.s32 %v2245, 16
  %v2500 = vadd.s32 %v2252, 16
  %v2501 = vadd.s32 %v2259, 16
  %v2502 = vadd.s32 %v2266, 16
  %v2503 = vadd.s32 %v2273, 16
  %v2504 = vadd.s32 %v2280, 16
  %v2505 = vadd.s32 %v2287, 16
  %v2506 = vadd.s32 %v2294, 16
  %v2507 = vadd.s32 %v2301, 16
  %v2508 = vadd.s32 %v2308, 16
  %v2509 = vadd.s32 %v2315, 16
  %v2510 = vadd.s32 %v2322, 16
  %v2511 = vadd.s32 %v2329, 16
  %v2512 = vadd.s32 %v2336, 16
  %v2513 = vadd.s32 %v2343, 16
  %v2514 = vadd.s32 %v2350, 16
  %v2515 = vadd.s32 %v2357, 16
  %v2516 = vadd.s32 %v2364, 16
  %v2517 = vadd.s32 %v2371, 16
  %v2518 = vadd.s32 %v2378, 16
  %v2519 = vadd.s32 %v2385, 16
  %v2520 = vadd.s32 %v2392, 16
  %v2521 = vsel %vm2457, %v2489, %v2175
  %v2522 = vsel %vm2458, %v2490, %v2182
  %v2523 = vsel %vm2459, %v2491, %v2189
  %v2524 = vsel %vm2460, %v2492, %v2196
  %v2525 = vsel %vm2461, %v2493, %v2203
  %v2526 = vsel %vm2462, %v2494, %v2210
  %v2527 = vsel %vm2463, %v2495, %v2217
  %v2528 = vsel %vm2464, %v2496, %v2224
  %v2529 = vsel %vm2465, %v2497, %v2231
  %v2530 = vsel %vm2466, %v2498, %v2238
  %v2531 = vsel %vm2467, %v2499, %v2245
  %v2532 = vsel %vm2468, %v2500, %v2252
  %v2533 = vsel %vm2469, %v2501, %v2259
  %v2534 = vsel %vm2470, %v2502, %v2266
  %v2535 = vsel %vm2471, %v2503, %v2273
  %v2536 = vsel %vm2472, %v2504, %v2280
  %v2537 = vsel %vm2473, %v2505, %v2287
  %v2538 = vsel %vm2474, %v2506, %v2294
  %v2539 = vsel %vm2475, %v2507, %v2301
  %v2540 = vsel %vm2476, %v2508, %v2308
  %v2541 = vsel %vm2477, %v2509, %v2315
  %v2542 = vsel %vm2478, %v2510, %v2322
  %v2543 = vsel %vm2479, %v2511, %v2329
  %v2544 = vsel %vm2480, %v2512, %v2336
  %v2545 = vsel %vm2481, %v2513, %v2343
  %v2546 = vsel %vm2482, %v2514, %v2350
  %v2547 = vsel %vm2483, %v2515, %v2357
  %v2548 = vsel %vm2484, %v2516, %v2364
  %v2549 = vsel %vm2485, %v2517, %v2371
  %v2550 = vsel %vm2486, %v2518, %v2378
  %v2551 = vsel %vm2487, %v2519, %v2385
  %v2552 = vsel %vm2488, %v2520, %v2392
  %vm2553 = vcmp.lt.s32.totalorder %v2521, 8
  %vm2554 = vcmp.lt.s32.totalorder %v2522, 8
  %vm2555 = vcmp.lt.s32.totalorder %v2523, 8
  %vm2556 = vcmp.lt.s32.totalorder %v2524, 8
  %vm2557 = vcmp.lt.s32.totalorder %v2525, 8
  %vm2558 = vcmp.lt.s32.totalorder %v2526, 8
  %vm2559 = vcmp.lt.s32.totalorder %v2527, 8
  %vm2560 = vcmp.lt.s32.totalorder %v2528, 8
  %vm2561 = vcmp.lt.s32.totalorder %v2529, 8
  %vm2562 = vcmp.lt.s32.totalorder %v2530, 8
  %vm2563 = vcmp.lt.s32.totalorder %v2531, 8
  %vm2564 = vcmp.lt.s32.totalorder %v2532, 8
  %vm2565 = vcmp.lt.s32.totalorder %v2533, 8
  %vm2566 = vcmp.lt.s32.totalorder %v2534, 8
  %vm2567 = vcmp.lt.s32.totalorder %v2535, 8
  %vm2568 = vcmp.lt.s32.totalorder %v2536, 8
  %vm2569 = vcmp.lt.s32.totalorder %v2537, 8
  %vm2570 = vcmp.lt.s32.totalorder %v2538, 8
  %vm2571 = vcmp.lt.s32.totalorder %v2539, 8
  %vm2572 = vcmp.lt.s32.totalorder %v2540, 8
  %vm2573 = vcmp.lt.s32.totalorder %v2541, 8
  %vm2574 = vcmp.lt.s32.totalorder %v2542, 8
  %vm2575 = vcmp.lt.s32.totalorder %v2543, 8
  %vm2576 = vcmp.lt.s32.totalorder %v2544, 8
  %vm2577 = vcmp.lt.s32.totalorder %v2545, 8
  %vm2578 = vcmp.lt.s32.totalorder %v2546, 8
  %vm2579 = vcmp.lt.s32.totalorder %v2547, 8
  %vm2580 = vcmp.lt.s32.totalorder %v2548, 8
  %vm2581 = vcmp.lt.s32.totalorder %v2549, 8
  %vm2582 = vcmp.lt.s32.totalorder %v2550, 8
  %vm2583 = vcmp.lt.s32.totalorder %v2551, 8
  %vm2584 = vcmp.lt.s32.totalorder %v2552, 8
  %v2585 = vsel %vm2553, 1, 0
  %v2586 = vsel %vm2554, 1, 0
  %v2587 = vsel %vm2555, 1, 0
  %v2588 = vsel %vm2556, 1, 0
  %v2589 = vsel %vm2557, 1, 0
  %v2590 = vsel %vm2558, 1, 0
  %v2591 = vsel %vm2559, 1, 0
  %v2592 = vsel %vm2560, 1, 0
  %v2593 = vsel %vm2561, 1, 0
  %v2594 = vsel %vm2562, 1, 0
  %v2595 = vsel %vm2563, 1, 0
  %v2596 = vsel %vm2564, 1, 0
  %v2597 = vsel %vm2565, 1, 0
  %v2598 = vsel %vm2566, 1, 0
  %v2599 = vsel %vm2567, 1, 0
  %v2600 = vsel %vm2568, 1, 0
  %v2601 = vsel %vm2569, 1, 0
  %v2602 = vsel %vm2570, 1, 0
  %v2603 = vsel %vm2571, 1, 0
  %v2604 = vsel %vm2572, 1, 0
  %v2605 = vsel %vm2573, 1, 0
  %v2606 = vsel %vm2574, 1, 0
  %v2607 = vsel %vm2575, 1, 0
  %v2608 = vsel %vm2576, 1, 0
  %v2609 = vsel %vm2577, 1, 0
  %v2610 = vsel %vm2578, 1, 0
  %v2611 = vsel %vm2579, 1, 0
  %v2612 = vsel %vm2580, 1, 0
  %v2613 = vsel %vm2581, 1, 0
  %v2614 = vsel %vm2582, 1, 0
  %v2615 = vsel %vm2583, 1, 0
  %v2616 = vsel %vm2584, 1, 0
  %vm2617 = vcmp.eq.s32.totalorder %v2585, 1
  %vm2618 = vcmp.eq.s32.totalorder %v2586, 1
  %vm2619 = vcmp.eq.s32.totalorder %v2587, 1
  %vm2620 = vcmp.eq.s32.totalorder %v2588, 1
  %vm2621 = vcmp.eq.s32.totalorder %v2589, 1
  %vm2622 = vcmp.eq.s32.totalorder %v2590, 1
  %vm2623 = vcmp.eq.s32.totalorder %v2591, 1
  %vm2624 = vcmp.eq.s32.totalorder %v2592, 1
  %vm2625 = vcmp.eq.s32.totalorder %v2593, 1
  %vm2626 = vcmp.eq.s32.totalorder %v2594, 1
  %vm2627 = vcmp.eq.s32.totalorder %v2595, 1
  %vm2628 = vcmp.eq.s32.totalorder %v2596, 1
  %vm2629 = vcmp.eq.s32.totalorder %v2597, 1
  %vm2630 = vcmp.eq.s32.totalorder %v2598, 1
  %vm2631 = vcmp.eq.s32.totalorder %v2599, 1
  %vm2632 = vcmp.eq.s32.totalorder %v2600, 1
  %vm2633 = vcmp.eq.s32.totalorder %v2601, 1
  %vm2634 = vcmp.eq.s32.totalorder %v2602, 1
  %vm2635 = vcmp.eq.s32.totalorder %v2603, 1
  %vm2636 = vcmp.eq.s32.totalorder %v2604, 1
  %vm2637 = vcmp.eq.s32.totalorder %v2605, 1
  %vm2638 = vcmp.eq.s32.totalorder %v2606, 1
  %vm2639 = vcmp.eq.s32.totalorder %v2607, 1
  %vm2640 = vcmp.eq.s32.totalorder %v2608, 1
  %vm2641 = vcmp.eq.s32.totalorder %v2609, 1
  %vm2642 = vcmp.eq.s32.totalorder %v2610, 1
  %vm2643 = vcmp.eq.s32.totalorder %v2611, 1
  %vm2644 = vcmp.eq.s32.totalorder %v2612, 1
  %vm2645 = vcmp.eq.s32.totalorder %v2613, 1
  %vm2646 = vcmp.eq.s32.totalorder %v2614, 1
  %vm2647 = vcmp.eq.s32.totalorder %v2615, 1
  %vm2648 = vcmp.eq.s32.totalorder %v2616, 1
  %v2649 = vsel %vm2617, %v2104, 0.0
  %v2650 = vsel %vm2618, %v2105, 0.0
  %v2651 = vsel %vm2619, %v2106, 0.0
  %v2652 = vsel %vm2620, %v2107, 0.0
  %v2653 = vsel %vm2621, %v2108, 0.0
  %v2654 = vsel %vm2622, %v2109, 0.0
  %v2655 = vsel %vm2623, %v2110, 0.0
  %v2656 = vsel %vm2624, %v2111, 0.0
  %v2657 = vsel %vm2625, %v2112, 0.0
  %v2658 = vsel %vm2626, %v2113, 0.0
  %v2659 = vsel %vm2627, %v2114, 0.0
  %v2660 = vsel %vm2628, %v2115, 0.0
  %v2661 = vsel %vm2629, %v2116, 0.0
  %v2662 = vsel %vm2630, %v2117, 0.0
  %v2663 = vsel %vm2631, %v2118, 0.0
  %v2664 = vsel %vm2632, %v2119, 0.0
  %v2665 = vsel %vm2633, %v2120, 0.0
  %v2666 = vsel %vm2634, %v2121, 0.0
  %v2667 = vsel %vm2635, %v2122, 0.0
  %v2668 = vsel %vm2636, %v2123, 0.0
  %v2669 = vsel %vm2637, %v2124, 0.0
  %v2670 = vsel %vm2638, %v2125, 0.0
  %v2671 = vsel %vm2639, %v2126, 0.0
  %v2672 = vsel %vm2640, %v2127, 0.0
  %v2673 = vsel %vm2641, %v2128, 0.0
  %v2674 = vsel %vm2642, %v2129, 0.0
  %v2675 = vsel %vm2643, %v2130, 0.0
  %v2676 = vsel %vm2644, %v2131, 0.0
  %v2677 = vsel %vm2645, %v2132, 0.0
  %v2678 = vsel %vm2646, %v2133, 0.0
  %v2679 = vsel %vm2647, %v2134, 0.0
  %v2680 = vsel %vm2648, %v2135, 0.0
  %vm2681 = vcmask 64512
  %2682 = vst.msk [vmem:[#allocation3] sm:$0xff] %vm2681, 0.0
  %2683 = vst.msk [vmem:[#allocation3 + $0x8] sm:$0xff] %vm2681, 0.0
  %2684 = vst.msk [vmem:[#allocation3 + $0x10] sm:$0xff] %vm2681, 0.0
  %2685 = vst.msk [vmem:[#allocation3 + $0xb0] sm:$0xff] %vm2681, 0.0
  %2686 = vst.msk [vmem:[#allocation3 + $0xb8] sm:$0xff] %vm2681, 0.0
  %2687 = vst.msk [vmem:[#allocation3 + $0xc0] sm:$0xff] %vm2681, 0.0
  %2688 = vst.msk [vmem:[#allocation3 + $0x98] sm:$0xff] %vm2681, 0.0
  %2689 = vst.msk [vmem:[#allocation3 + $0xa0] sm:$0xff] %vm2681, 0.0
  %2690 = vst.msk [vmem:[#allocation3 + $0xa8] sm:$0xff] %vm2681, 0.0
  %2691 = vst.msk [vmem:[#allocation3 + $0x148] sm:$0xff] %vm2681, 0.0
  %2692 = vst.msk [vmem:[#allocation3 + $0x150] sm:$0xff] %vm2681, 0.0
  %2693 = vst.msk [vmem:[#allocation3 + $0x158] sm:$0xff] %vm2681, 0.0
  %2694 = vst.msk [vmem:[#allocation3 + $0x18] sm:$0xff] %vm2681, %v2649
  %2695 = vst.msk [vmem:[#allocation3 + $0x20] sm:$0xff] %vm2681, %v2650
  %2696 = vst.msk [vmem:[#allocation3 + $0x28] sm:$0xff] %vm2681, %v2651
  %2697 = vst.msk [vmem:[#allocation3 + $0x30] sm:$0xff] %vm2681, %v2652
  %2698 = vst.msk [vmem:[#allocation3 + $0x38] sm:$0xff] %vm2681, %v2653
  %2699 = vst.msk [vmem:[#allocation3 + $0x40] sm:$0xff] %vm2681, %v2654
  %2700 = vst.msk [vmem:[#allocation3 + $0x48] sm:$0xff] %vm2681, %v2655
  %2701 = vst.msk [vmem:[#allocation3 + $0x50] sm:$0xff] %vm2681, %v2656
  %2702 = vst.msk [vmem:[#allocation3 + $0x58] sm:$0xff] %vm2681, %v2657
  %2703 = vst.msk [vmem:[#allocation3 + $0x60] sm:$0xff] %vm2681, %v2658
  %2704 = vst.msk [vmem:[#allocation3 + $0x68] sm:$0xff] %vm2681, %v2659
  %2705 = vst.msk [vmem:[#allocation3 + $0x70] sm:$0xff] %vm2681, %v2660
  %2706 = vst.msk [vmem:[#allocation3 + $0x78] sm:$0xff] %vm2681, %v2661
  %2707 = vst.msk [vmem:[#allocation3 + $0x80] sm:$0xff] %vm2681, %v2662
  %2708 = vst.msk [vmem:[#allocation3 + $0x88] sm:$0xff] %vm2681, %v2663
  %2709 = vst.msk [vmem:[#allocation3 + $0x90] sm:$0xff] %vm2681, %v2664
  %2710 = vst.msk [vmem:[#allocation3 + $0xc8] sm:$0xff] %vm2681, %v2665
  %2711 = vst.msk [vmem:[#allocation3 + $0xd0] sm:$0xff] %vm2681, %v2666
  %2712 = vst.msk [vmem:[#allocation3 + $0xd8] sm:$0xff] %vm2681, %v2667
  %2713 = vst.msk [vmem:[#allocation3 + $0xe0] sm:$0xff] %vm2681, %v2668
  %2714 = vst.msk [vmem:[#allocation3 + $0xe8] sm:$0xff] %vm2681, %v2669
  %2715 = vst.msk [vmem:[#allocation3 + $0xf0] sm:$0xff] %vm2681, %v2670
  %2716 = vst.msk [vmem:[#allocation3 + $0xf8] sm:$0xff] %vm2681, %v2671
  %2717 = vst.msk [vmem:[#allocation3 + $0x100] sm:$0xff] %vm2681, %v2672
  %2718 = vst.msk [vmem:[#allocation3 + $0x108] sm:$0xff] %vm2681, %v2673
  %2719 = vst.msk [vmem:[#allocation3 + $0x110] sm:$0xff] %vm2681, %v2674
  %2720 = vst.msk [vmem:[#allocation3 + $0x118] sm:$0xff] %vm2681, %v2675
  %2721 = vst.msk [vmem:[#allocation3 + $0x120] sm:$0xff] %vm2681, %v2676
  %2722 = vst.msk [vmem:[#allocation3 + $0x128] sm:$0xff] %vm2681, %v2677
  %2723 = vst.msk [vmem:[#allocation3 + $0x130] sm:$0xff] %vm2681, %v2678
  %2724 = vst.msk [vmem:[#allocation3 + $0x138] sm:$0xff] %vm2681, %v2679
  %2725 = vst.msk [vmem:[#allocation3 + $0x140] sm:$0xff] %vm2681, %v2680
  %v2726 = vld [vmem:[#allocation3 + $0x7] sm:$0xff]
  %v2727 = vld [vmem:[#allocation3 + $0xf] sm:$0xff]
  %v2728 = vld [vmem:[#allocation3 + $0x17] sm:$0xff]
  %v2729 = vld [vmem:[#allocation3 + $0x1f] sm:$0xff]
  %v2730 = vld [vmem:[#allocation3 + $0x27] sm:$0xff]
  %v2731 = vld [vmem:[#allocation3 + $0x2f] sm:$0xff]
  %v2732 = vld [vmem:[#allocation3 + $0x37] sm:$0xff]
  %v2733 = vld [vmem:[#allocation3 + $0x3f] sm:$0xff]
  %v2734 = vld [vmem:[#allocation3 + $0x47] sm:$0xff]
  %v2735 = vld [vmem:[#allocation3 + $0x4f] sm:$0xff]
  %v2736 = vld [vmem:[#allocation3 + $0x57] sm:$0xff]
  %v2737 = vld [vmem:[#allocation3 + $0x5f] sm:$0xff]
  %v2738 = vld [vmem:[#allocation3 + $0x67] sm:$0xff]
  %v2739 = vld [vmem:[#allocation3 + $0x6f] sm:$0xff]
  %v2740 = vld [vmem:[#allocation3 + $0x77] sm:$0xff]
  %v2741 = vld [vmem:[#allocation3 + $0x7f] sm:$0xff]
  %v2742 = vld [vmem:[#allocation3 + $0x87] sm:$0xff]
  %v2743 = vld [vmem:[#allocation3 + $0x8f] sm:$0xff]
  %v2744 = vld [vmem:[#allocation3 + $0x97] sm:$0xff]
  %v2745 = vld [vmem:[#allocation3 + $0x9f] sm:$0xff]
  %v2746 = vld [vmem:[#allocation3 + $0xb7] sm:$0xff]
  %v2747 = vld [vmem:[#allocation3 + $0xbf] sm:$0xff]
  %v2748 = vld [vmem:[#allocation3 + $0xc7] sm:$0xff]
  %v2749 = vld [vmem:[#allocation3 + $0xcf] sm:$0xff]
  %v2750 = vld [vmem:[#allocation3 + $0xd7] sm:$0xff]
  %v2751 = vld [vmem:[#allocation3 + $0xdf] sm:$0xff]
  %v2752 = vld [vmem:[#allocation3 + $0xe7] sm:$0xff]
  %v2753 = vld [vmem:[#allocation3 + $0xef] sm:$0xff]
  %v2754 = vld [vmem:[#allocation3 + $0xf7] sm:$0xff]
  %v2755 = vld [vmem:[#allocation3 + $0xff] sm:$0xff]
  %v2756 = vld [vmem:[#allocation3 + $0x107] sm:$0xff]
  %v2757 = vld [vmem:[#allocation3 + $0x10f] sm:$0xff]
  %v2758 = vld [vmem:[#allocation3 + $0x117] sm:$0xff]
  %v2759 = vld [vmem:[#allocation3 + $0x11f] sm:$0xff]
  %v2760 = vld [vmem:[#allocation3 + $0x127] sm:$0xff]
  %v2761 = vld [vmem:[#allocation3 + $0x12f] sm:$0xff]
  %v2762 = vld [vmem:[#allocation3 + $0x137] sm:$0xff]
  %v2763 = vld [vmem:[#allocation3 + $0x13f] sm:$0xff]
  %v2764 = vld [vmem:[#allocation3 + $0x147] sm:$0xff]
  %v2765 = vld [vmem:[#allocation3 + $0x14f] sm:$0xff]
  %2766 = vst.msk [vmem:[#allocation5] sm:$0xff] %vm2681, %v2726
  %2767 = vst.msk [vmem:[#allocation5 + $0x8] sm:$0xff] %vm2681, %v2727
  %2768 = vst.msk [vmem:[#allocation5 + $0x10] sm:$0xff] %vm2681, %v2728
  %2769 = vst.msk [vmem:[#allocation5 + $0x18] sm:$0xff] %vm2681, %v2729
  %2770 = vst.msk [vmem:[#allocation5 + $0x20] sm:$0xff] %vm2681, %v2730
  %2771 = vst.msk [vmem:[#allocation5 + $0x28] sm:$0xff] %vm2681, %v2731
  %2772 = vst.msk [vmem:[#allocation5 + $0x30] sm:$0xff] %vm2681, %v2732
  %2773 = vst.msk [vmem:[#allocation5 + $0x38] sm:$0xff] %vm2681, %v2733
  %2774 = vst.msk [vmem:[#allocation5 + $0x40] sm:$0xff] %vm2681, %v2734
  %2775 = vst.msk [vmem:[#allocation5 + $0x48] sm:$0xff] %vm2681, %v2735
  %2776 = vst.msk [vmem:[#allocation5 + $0x50] sm:$0xff] %vm2681, %v2736
  %2777 = vst.msk [vmem:[#allocation5 + $0x58] sm:$0xff] %vm2681, %v2737
  %2778 = vst.msk [vmem:[#allocation5 + $0x60] sm:$0xff] %vm2681, %v2738
  %2779 = vst.msk [vmem:[#allocation5 + $0x68] sm:$0xff] %vm2681, %v2739
  %2780 = vst.msk [vmem:[#allocation5 + $0x70] sm:$0xff] %vm2681, %v2740
  %2781 = vst.msk [vmem:[#allocation5 + $0x78] sm:$0xff] %vm2681, %v2741
  %2782 = vst.msk [vmem:[#allocation5 + $0x80] sm:$0xff] %vm2681, %v2746
  %2783 = vst.msk [vmem:[#allocation5 + $0x88] sm:$0xff] %vm2681, %v2747
  %2784 = vst.msk [vmem:[#allocation5 + $0x90] sm:$0xff] %vm2681, %v2748
  %2785 = vst.msk [vmem:[#allocation5 + $0x98] sm:$0xff] %vm2681, %v2749
  %2786 = vst.msk [vmem:[#allocation5 + $0xa0] sm:$0xff] %vm2681, %v2750
  %2787 = vst.msk [vmem:[#allocation5 + $0xa8] sm:$0xff] %vm2681, %v2751
  %2788 = vst.msk [vmem:[#allocation5 + $0xb0] sm:$0xff] %vm2681, %v2752
  %2789 = vst.msk [vmem:[#allocation5 + $0xb8] sm:$0xff] %vm2681, %v2753
  %2790 = vst.msk [vmem:[#allocation5 + $0xc0] sm:$0xff] %vm2681, %v2754
  %2791 = vst.msk [vmem:[#allocation5 + $0xc8] sm:$0xff] %vm2681, %v2755
  %2792 = vst.msk [vmem:[#allocation5 + $0xd0] sm:$0xff] %vm2681, %v2756
  %2793 = vst.msk [vmem:[#allocation5 + $0xd8] sm:$0xff] %vm2681, %v2757
  %2794 = vst.msk [vmem:[#allocation5 + $0xe0] sm:$0xff] %vm2681, %v2758
  %2795 = vst.msk [vmem:[#allocation5 + $0xe8] sm:$0xff] %vm2681, %v2759
  %2796 = vst.msk [vmem:[#allocation5 + $0xf0] sm:$0xff] %vm2681, %v2760
  %2797 = vst.msk [vmem:[#allocation5 + $0xf8] sm:$0xff] %vm2681, %v2761
  %2830 = vrot.lane.b32.xlu0 %v2728, 24
  %v2831 = vpop.permute.xlu0 %2830
  %2832 = vrot.lane.b32.xlu0 %v2729, 24
  %v2833 = vpop.permute.xlu0 %2832
  %2834 = vrot.lane.b32.xlu0 %v2730, 24
  %v2835 = vpop.permute.xlu0 %2834
  %2836 = vrot.lane.b32.xlu0 %v2731, 24
  %v2837 = vpop.permute.xlu0 %2836
  %2838 = vrot.lane.b32.xlu0 %v2732, 24
  %v2839 = vpop.permute.xlu0 %2838
  %2840 = vrot.lane.b32.xlu0 %v2733, 24
  %v2841 = vpop.permute.xlu0 %2840
  %2842 = vrot.lane.b32.xlu0 %v2734, 24
  %v2843 = vpop.permute.xlu0 %2842
  %2844 = vrot.lane.b32.xlu0 %v2735, 24
  %v2845 = vpop.permute.xlu0 %2844
  %2846 = vrot.lane.b32.xlu0 %v2736, 24
  %v2847 = vpop.permute.xlu0 %2846
  %2848 = vrot.lane.b32.xlu0 %v2737, 24
  %v2849 = vpop.permute.xlu0 %2848
  %2850 = vrot.lane.b32.xlu0 %v2738, 24
  %v2851 = vpop.permute.xlu0 %2850
  %2852 = vrot.lane.b32.xlu0 %v2739, 24
  %v2853 = vpop.permute.xlu0 %2852
  %2854 = vrot.lane.b32.xlu0 %v2740, 24
  %v2855 = vpop.permute.xlu0 %2854
  %2856 = vrot.lane.b32.xlu0 %v2741, 24
  %v2857 = vpop.permute.xlu0 %2856
  %2858 = vrot.lane.b32.xlu0 %v2742, 24
  %v2859 = vpop.permute.xlu0 %2858
  %2860 = vrot.lane.b32.xlu0 %v2743, 24
  %v2861 = vpop.permute.xlu0 %2860
  %2862 = vrot.lane.b32.xlu0 %v2748, 24
  %v2863 = vpop.permute.xlu0 %2862
  %2864 = vrot.lane.b32.xlu0 %v2749, 24
  %v2865 = vpop.permute.xlu0 %2864
  %2866 = vrot.lane.b32.xlu0 %v2750, 24
  %v2867 = vpop.permute.xlu0 %2866
  %2868 = vrot.lane.b32.xlu0 %v2751, 24
  %v2869 = vpop.permute.xlu0 %2868
  %2870 = vrot.lane.b32.xlu0 %v2752, 24
  %v2871 = vpop.permute.xlu0 %2870
  %2872 = vrot.lane.b32.xlu0 %v2753, 24
  %v2873 = vpop.permute.xlu0 %2872
  %2874 = vrot.lane.b32.xlu0 %v2754, 24
  %v2875 = vpop.permute.xlu0 %2874
  %2876 = vrot.lane.b32.xlu0 %v2755, 24
  %v2877 = vpop.permute.xlu0 %2876
  %2878 = vrot.lane.b32.xlu0 %v2756, 24
  %v2879 = vpop.permute.xlu0 %2878
  %2880 = vrot.lane.b32.xlu0 %v2757, 24
  %v2881 = vpop.permute.xlu0 %2880
  %2882 = vrot.lane.b32.xlu0 %v2758, 24
  %v2883 = vpop.permute.xlu0 %2882
  %2884 = vrot.lane.b32.xlu0 %v2759, 24
  %v2885 = vpop.permute.xlu0 %2884
  %2886 = vrot.lane.b32.xlu0 %v2760, 24
  %v2887 = vpop.permute.xlu0 %2886
  %2888 = vrot.lane.b32.xlu0 %v2761, 24
  %v2889 = vpop.permute.xlu0 %2888
  %2890 = vrot.lane.b32.xlu0 %v2762, 24
  %v2891 = vpop.permute.xlu0 %2890
  %2892 = vrot.lane.b32.xlu0 %v2763, 24
  %v2893 = vpop.permute.xlu0 %2892
  %vm2926 = vcmask 261312
  %2927 = vst.msk [vmem:[#allocation5] sm:$0xff] %vm2926, %v2831
  %2928 = vst.msk [vmem:[#allocation5 + $0x8] sm:$0xff] %vm2926, %v2833
  %2929 = vst.msk [vmem:[#allocation5 + $0x10] sm:$0xff] %vm2926, %v2835
  %2930 = vst.msk [vmem:[#allocation5 + $0x18] sm:$0xff] %vm2926, %v2837
  %2931 = vst.msk [vmem:[#allocation5 + $0x20] sm:$0xff] %vm2926, %v2839
  %2932 = vst.msk [vmem:[#allocation5 + $0x28] sm:$0xff] %vm2926, %v2841
  %2933 = vst.msk [vmem:[#allocation5 + $0x30] sm:$0xff] %vm2926, %v2843
  %2934 = vst.msk [vmem:[#allocation5 + $0x38] sm:$0xff] %vm2926, %v2845
  %2935 = vst.msk [vmem:[#allocation5 + $0x40] sm:$0xff] %vm2926, %v2847
  %2936 = vst.msk [vmem:[#allocation5 + $0x48] sm:$0xff] %vm2926, %v2849
  %2937 = vst.msk [vmem:[#allocation5 + $0x50] sm:$0xff] %vm2926, %v2851
  %2938 = vst.msk [vmem:[#allocation5 + $0x58] sm:$0xff] %vm2926, %v2853
  %2939 = vst.msk [vmem:[#allocation5 + $0x60] sm:$0xff] %vm2926, %v2855
  %2940 = vst.msk [vmem:[#allocation5 + $0x68] sm:$0xff] %vm2926, %v2857
  %2941 = vst.msk [vmem:[#allocation5 + $0x70] sm:$0xff] %vm2926, %v2859
  %2942 = vst.msk [vmem:[#allocation5 + $0x78] sm:$0xff] %vm2926, %v2861
  %2943 = vst.msk [vmem:[#allocation5 + $0x80] sm:$0xff] %vm2926, %v2863
  %2944 = vst.msk [vmem:[#allocation5 + $0x88] sm:$0xff] %vm2926, %v2865
  %2945 = vst.msk [vmem:[#allocation5 + $0x90] sm:$0xff] %vm2926, %v2867
  %2946 = vst.msk [vmem:[#allocation5 + $0x98] sm:$0xff] %vm2926, %v2869
  %2947 = vst.msk [vmem:[#allocation5 + $0xa0] sm:$0xff] %vm2926, %v2871
  %2948 = vst.msk [vmem:[#allocation5 + $0xa8] sm:$0xff] %vm2926, %v2873
  %2949 = vst.msk [vmem:[#allocation5 + $0xb0] sm:$0xff] %vm2926, %v2875
  %2950 = vst.msk [vmem:[#allocation5 + $0xb8] sm:$0xff] %vm2926, %v2877
  %2951 = vst.msk [vmem:[#allocation5 + $0xc0] sm:$0xff] %vm2926, %v2879
  %2952 = vst.msk [vmem:[#allocation5 + $0xc8] sm:$0xff] %vm2926, %v2881
  %2953 = vst.msk [vmem:[#allocation5 + $0xd0] sm:$0xff] %vm2926, %v2883
  %2954 = vst.msk [vmem:[#allocation5 + $0xd8] sm:$0xff] %vm2926, %v2885
  %2955 = vst.msk [vmem:[#allocation5 + $0xe0] sm:$0xff] %vm2926, %v2887
  %2956 = vst.msk [vmem:[#allocation5 + $0xe8] sm:$0xff] %vm2926, %v2889
  %2957 = vst.msk [vmem:[#allocation5 + $0xf0] sm:$0xff] %vm2926, %v2891
  %2958 = vst.msk [vmem:[#allocation5 + $0xf8] sm:$0xff] %vm2926, %v2893
  %2963 = vrot.lane.b32.xlu0 %v2730, 48
  %v2964 = vpop.permute.xlu0 %2963
  %2965 = vrot.lane.b32.xlu0 %v2731, 48
  %v2966 = vpop.permute.xlu0 %2965
  %2967 = vrot.lane.b32.xlu0 %v2732, 48
  %v2968 = vpop.permute.xlu0 %2967
  %2969 = vrot.lane.b32.xlu0 %v2733, 48
  %v2970 = vpop.permute.xlu0 %2969
  %2971 = vrot.lane.b32.xlu0 %v2734, 48
  %v2972 = vpop.permute.xlu0 %2971
  %2973 = vrot.lane.b32.xlu0 %v2735, 48
  %v2974 = vpop.permute.xlu0 %2973
  %2975 = vrot.lane.b32.xlu0 %v2736, 48
  %v2976 = vpop.permute.xlu0 %2975
  %2977 = vrot.lane.b32.xlu0 %v2737, 48
  %v2978 = vpop.permute.xlu0 %2977
  %2979 = vrot.lane.b32.xlu0 %v2738, 48
  %v2980 = vpop.permute.xlu0 %2979
  %2981 = vrot.lane.b32.xlu0 %v2739, 48
  %v2982 = vpop.permute.xlu0 %2981
  %2983 = vrot.lane.b32.xlu0 %v2740, 48
  %v2984 = vpop.permute.xlu0 %2983
  %2985 = vrot.lane.b32.xlu0 %v2741, 48
  %v2986 = vpop.permute.xlu0 %2985
  %2987 = vrot.lane.b32.xlu0 %v2742, 48
  %v2988 = vpop.permute.xlu0 %2987
  %2989 = vrot.lane.b32.xlu0 %v2743, 48
  %v2990 = vpop.permute.xlu0 %2989
  %2991 = vrot.lane.b32.xlu0 %v2744, 48
  %v2992 = vpop.permute.xlu0 %2991
  %2993 = vrot.lane.b32.xlu0 %v2745, 48
  %v2994 = vpop.permute.xlu0 %2993
  %2995 = vrot.lane.b32.xlu0 %v2750, 48
  %v2996 = vpop.permute.xlu0 %2995
  %2997 = vrot.lane.b32.xlu0 %v2751, 48
  %v2998 = vpop.permute.xlu0 %2997
  %2999 = vrot.lane.b32.xlu0 %v2752, 48
  %v3000 = vpop.permute.xlu0 %2999
  %3001 = vrot.lane.b32.xlu0 %v2753, 48
  %v3002 = vpop.permute.xlu0 %3001
  %3003 = vrot.lane.b32.xlu0 %v2754, 48
  %v3004 = vpop.permute.xlu0 %3003
  %3005 = vrot.lane.b32.xlu0 %v2755, 48
  %v3006 = vpop.permute.xlu0 %3005
  %3007 = vrot.lane.b32.xlu0 %v2756, 48
  %v3008 = vpop.permute.xlu0 %3007
  %3009 = vrot.lane.b32.xlu0 %v2757, 48
  %v3010 = vpop.permute.xlu0 %3009
  %3011 = vrot.lane.b32.xlu0 %v2758, 48
  %v3012 = vpop.permute.xlu0 %3011
  %3013 = vrot.lane.b32.xlu0 %v2759, 48
  %v3014 = vpop.permute.xlu0 %3013
  %3015 = vrot.lane.b32.xlu0 %v2760, 48
  %v3016 = vpop.permute.xlu0 %3015
  %3017 = vrot.lane.b32.xlu0 %v2761, 48
  %v3018 = vpop.permute.xlu0 %3017
  %3019 = vrot.lane.b32.xlu0 %v2762, 48
  %v3020 = vpop.permute.xlu0 %3019
  %3021 = vrot.lane.b32.xlu0 %v2763, 48
  %v3022 = vpop.permute.xlu0 %3021
  %3023 = vrot.lane.b32.xlu0 %v2764, 48
  %v3024 = vpop.permute.xlu0 %3023
  %3025 = vrot.lane.b32.xlu0 %v2765, 48
  %v3026 = vpop.permute.xlu0 %3025
  %vm3059 = vcmask 458112
  %3060 = vst.msk [vmem:[#allocation5] sm:$0xff] %vm3059, %v2964
  %3061 = vst.msk [vmem:[#allocation5 + $0x8] sm:$0xff] %vm3059, %v2966
  %3062 = vst.msk [vmem:[#allocation5 + $0x10] sm:$0xff] %vm3059, %v2968
  %3063 = vst.msk [vmem:[#allocation5 + $0x18] sm:$0xff] %vm3059, %v2970
  %3064 = vst.msk [vmem:[#allocation5 + $0x20] sm:$0xff] %vm3059, %v2972
  %3065 = vst.msk [vmem:[#allocation5 + $0x28] sm:$0xff] %vm3059, %v2974
  %3066 = vst.msk [vmem:[#allocation5 + $0x30] sm:$0xff] %vm3059, %v2976
  %3067 = vst.msk [vmem:[#allocation5 + $0x38] sm:$0xff] %vm3059, %v2978
  %3068 = vst.msk [vmem:[#allocation5 + $0x40] sm:$0xff] %vm3059, %v2980
  %3069 = vst.msk [vmem:[#allocation5 + $0x48] sm:$0xff] %vm3059, %v2982
  %3070 = vst.msk [vmem:[#allocation5 + $0x50] sm:$0xff] %vm3059, %v2984
  %3071 = vst.msk [vmem:[#allocation5 + $0x58] sm:$0xff] %vm3059, %v2986
  %3072 = vst.msk [vmem:[#allocation5 + $0x60] sm:$0xff] %vm3059, %v2988
  %3073 = vst.msk [vmem:[#allocation5 + $0x68] sm:$0xff] %vm3059, %v2990
  %3074 = vst.msk [vmem:[#allocation5 + $0x70] sm:$0xff] %vm3059, %v2992
  %3075 = vst.msk [vmem:[#allocation5 + $0x78] sm:$0xff] %vm3059, %v2994
  %3076 = vst.msk [vmem:[#allocation5 + $0x80] sm:$0xff] %vm3059, %v2996
  %3077 = vst.msk [vmem:[#allocation5 + $0x88] sm:$0xff] %vm3059, %v2998
  %3078 = vst.msk [vmem:[#allocation5 + $0x90] sm:$0xff] %vm3059, %v3000
  %3079 = vst.msk [vmem:[#allocation5 + $0x98] sm:$0xff] %vm3059, %v3002
  %3080 = vst.msk [vmem:[#allocation5 + $0xa0] sm:$0xff] %vm3059, %v3004
  %3081 = vst.msk [vmem:[#allocation5 + $0xa8] sm:$0xff] %vm3059, %v3006
  %3082 = vst.msk [vmem:[#allocation5 + $0xb0] sm:$0xff] %vm3059, %v3008
  %3083 = vst.msk [vmem:[#allocation5 + $0xb8] sm:$0xff] %vm3059, %v3010
  %3084 = vst.msk [vmem:[#allocation5 + $0xc0] sm:$0xff] %vm3059, %v3012
  %3085 = vst.msk [vmem:[#allocation5 + $0xc8] sm:$0xff] %vm3059, %v3014
  %3086 = vst.msk [vmem:[#allocation5 + $0xd0] sm:$0xff] %vm3059, %v3016
  %3087 = vst.msk [vmem:[#allocation5 + $0xd8] sm:$0xff] %vm3059, %v3018
  %3088 = vst.msk [vmem:[#allocation5 + $0xe0] sm:$0xff] %vm3059, %v3020
  %3089 = vst.msk [vmem:[#allocation5 + $0xe8] sm:$0xff] %vm3059, %v3022
  %3090 = vst.msk [vmem:[#allocation5 + $0xf0] sm:$0xff] %vm3059, %v3024
  %3091 = vst.msk [vmem:[#allocation5 + $0xf8] sm:$0xff] %vm3059, %v3026
  %v3092 = vld [vmem:[#allocation3 + $0x8] sm:$0xff]
  %v3093 = vld [vmem:[#allocation3 + $0x10] sm:$0xff]
  %v3094 = vld [vmem:[#allocation3 + $0x18] sm:$0xff]
  %v3095 = vld [vmem:[#allocation3 + $0x20] sm:$0xff]
  %v3096 = vld [vmem:[#allocation3 + $0x28] sm:$0xff]
  %v3097 = vld [vmem:[#allocation3 + $0x30] sm:$0xff]
  %v3098 = vld [vmem:[#allocation3 + $0x38] sm:$0xff]
  %v3099 = vld [vmem:[#allocation3 + $0x40] sm:$0xff]
  %v3100 = vld [vmem:[#allocation3 + $0x48] sm:$0xff]
  %v3101 = vld [vmem:[#allocation3 + $0x50] sm:$0xff]
  %v3102 = vld [vmem:[#allocation3 + $0x58] sm:$0xff]
  %v3103 = vld [vmem:[#allocation3 + $0x60] sm:$0xff]
  %v3104 = vld [vmem:[#allocation3 + $0x68] sm:$0xff]
  %v3105 = vld [vmem:[#allocation3 + $0x70] sm:$0xff]
  %v3106 = vld [vmem:[#allocation3 + $0x78] sm:$0xff]
  %v3107 = vld [vmem:[#allocation3 + $0x80] sm:$0xff]
  %v3108 = vld [vmem:[#allocation3 + $0x88] sm:$0xff]
  %v3109 = vld [vmem:[#allocation3 + $0x90] sm:$0xff]
  %v3110 = vld [vmem:[#allocation3 + $0x98] sm:$0xff]
  %v3111 = vld [vmem:[#allocation3 + $0xa0] sm:$0xff]
  %v3112 = vld [vmem:[#allocation3 + $0xb8] sm:$0xff]
  %v3113 = vld [vmem:[#allocation3 + $0xc0] sm:$0xff]
  %v3114 = vld [vmem:[#allocation3 + $0xc8] sm:$0xff]
  %v3115 = vld [vmem:[#allocation3 + $0xd0] sm:$0xff]
  %v3116 = vld [vmem:[#allocation3 + $0xd8] sm:$0xff]
  %v3117 = vld [vmem:[#allocation3 + $0xe0] sm:$0xff]
  %v3118 = vld [vmem:[#allocation3 + $0xe8] sm:$0xff]
  %v3119 = vld [vmem:[#allocation3 + $0xf0] sm:$0xff]
  %v3120 = vld [vmem:[#allocation3 + $0xf8] sm:$0xff]
  %v3121 = vld [vmem:[#allocation3 + $0x100] sm:$0xff]
  %v3122 = vld [vmem:[#allocation3 + $0x108] sm:$0xff]
  %v3123 = vld [vmem:[#allocation3 + $0x110] sm:$0xff]
  %v3124 = vld [vmem:[#allocation3 + $0x118] sm:$0xff]
  %v3125 = vld [vmem:[#allocation3 + $0x120] sm:$0xff]
  %v3126 = vld [vmem:[#allocation3 + $0x128] sm:$0xff]
  %v3127 = vld [vmem:[#allocation3 + $0x130] sm:$0xff]
  %v3128 = vld [vmem:[#allocation3 + $0x138] sm:$0xff]
  %v3129 = vld [vmem:[#allocation3 + $0x140] sm:$0xff]
  %v3130 = vld [vmem:[#allocation3 + $0x148] sm:$0xff]
  %v3131 = vld [vmem:[#allocation3 + $0x150] sm:$0xff]
  %3164 = vrot.lane.b32.xlu0 %v3092, 8
  %v3165 = vpop.permute.xlu0 %3164
  %3166 = vrot.lane.b32.xlu0 %v3093, 8
  %v3167 = vpop.permute.xlu0 %3166
  %3168 = vrot.lane.b32.xlu0 %v3094, 8
  %v3169 = vpop.permute.xlu0 %3168
  %3170 = vrot.lane.b32.xlu0 %v3095, 8
  %v3171 = vpop.permute.xlu0 %3170
  %3172 = vrot.lane.b32.xlu0 %v3096, 8
  %v3173 = vpop.permute.xlu0 %3172
  %3174 = vrot.lane.b32.xlu0 %v3097, 8
  %v3175 = vpop.permute.xlu0 %3174
  %3176 = vrot.lane.b32.xlu0 %v3098, 8
  %v3177 = vpop.permute.xlu0 %3176
  %3178 = vrot.lane.b32.xlu0 %v3099, 8
  %v3179 = vpop.permute.xlu0 %3178
  %3180 = vrot.lane.b32.xlu0 %v3100, 8
  %v3181 = vpop.permute.xlu0 %3180
  %3182 = vrot.lane.b32.xlu0 %v3101, 8
  %v3183 = vpop.permute.xlu0 %3182
  %3184 = vrot.lane.b32.xlu0 %v3102, 8
  %v3185 = vpop.permute.xlu0 %3184
  %3186 = vrot.lane.b32.xlu0 %v3103, 8
  %v3187 = vpop.permute.xlu0 %3186
  %3188 = vrot.lane.b32.xlu0 %v3104, 8
  %v3189 = vpop.permute.xlu0 %3188
  %3190 = vrot.lane.b32.xlu0 %v3105, 8
  %v3191 = vpop.permute.xlu0 %3190
  %3192 = vrot.lane.b32.xlu0 %v3106, 8
  %v3193 = vpop.permute.xlu0 %3192
  %3194 = vrot.lane.b32.xlu0 %v3107, 8
  %v3195 = vpop.permute.xlu0 %3194
  %3196 = vrot.lane.b32.xlu0 %v3112, 8
  %v3197 = vpop.permute.xlu0 %3196
  %3198 = vrot.lane.b32.xlu0 %v3113, 8
  %v3199 = vpop.permute.xlu0 %3198
  %3200 = vrot.lane.b32.xlu0 %v3114, 8
  %v3201 = vpop.permute.xlu0 %3200
  %3202 = vrot.lane.b32.xlu0 %v3115, 8
  %v3203 = vpop.permute.xlu0 %3202
  %3204 = vrot.lane.b32.xlu0 %v3116, 8
  %v3205 = vpop.permute.xlu0 %3204
  %3206 = vrot.lane.b32.xlu0 %v3117, 8
  %v3207 = vpop.permute.xlu0 %3206
  %3208 = vrot.lane.b32.xlu0 %v3118, 8
  %v3209 = vpop.permute.xlu0 %3208
  %3210 = vrot.lane.b32.xlu0 %v3119, 8
  %v3211 = vpop.permute.xlu0 %3210
  %3212 = vrot.lane.b32.xlu0 %v3120, 8
  %v3213 = vpop.permute.xlu0 %3212
  %3214 = vrot.lane.b32.xlu0 %v3121, 8
  %v3215 = vpop.permute.xlu0 %3214
  %3216 = vrot.lane.b32.xlu0 %v3122, 8
  %v3217 = vpop.permute.xlu0 %3216
  %3218 = vrot.lane.b32.xlu0 %v3123, 8
  %v3219 = vpop.permute.xlu0 %3218
  %3220 = vrot.lane.b32.xlu0 %v3124, 8
  %v3221 = vpop.permute.xlu0 %3220
  %3222 = vrot.lane.b32.xlu0 %v3125, 8
  %v3223 = vpop.permute.xlu0 %3222
  %3224 = vrot.lane.b32.xlu0 %v3126, 8
  %v3225 = vpop.permute.xlu0 %3224
  %3226 = vrot.lane.b32.xlu0 %v3127, 8
  %v3227 = vpop.permute.xlu0 %3226
  %vm3260 = vcmask 130112
  %3261 = vst.msk [vmem:[#allocation5] sm:$0xff] %vm3260, %v3165
  %3262 = vst.msk [vmem:[#allocation5 + $0x8] sm:$0xff] %vm3260, %v3167
  %3263 = vst.msk [vmem:[#allocation5 + $0x10] sm:$0xff] %vm3260, %v3169
  %3264 = vst.msk [vmem:[#allocation5 + $0x18] sm:$0xff] %vm3260, %v3171
  %3265 = vst.msk [vmem:[#allocation5 + $0x20] sm:$0xff] %vm3260, %v3173
  %3266 = vst.msk [vmem:[#allocation5 + $0x28] sm:$0xff] %vm3260, %v3175
  %3267 = vst.msk [vmem:[#allocation5 + $0x30] sm:$0xff] %vm3260, %v3177
  %3268 = vst.msk [vmem:[#allocation5 + $0x38] sm:$0xff] %vm3260, %v3179
  %3269 = vst.msk [vmem:[#allocation5 + $0x40] sm:$0xff] %vm3260, %v3181
  %3270 = vst.msk [vmem:[#allocation5 + $0x48] sm:$0xff] %vm3260, %v3183
  %3271 = vst.msk [vmem:[#allocation5 + $0x50] sm:$0xff] %vm3260, %v3185
  %3272 = vst.msk [vmem:[#allocation5 + $0x58] sm:$0xff] %vm3260, %v3187
  %3273 = vst.msk [vmem:[#allocation5 + $0x60] sm:$0xff] %vm3260, %v3189
  %3274 = vst.msk [vmem:[#allocation5 + $0x68] sm:$0xff] %vm3260, %v3191
  %3275 = vst.msk [vmem:[#allocation5 + $0x70] sm:$0xff] %vm3260, %v3193
  %3276 = vst.msk [vmem:[#allocation5 + $0x78] sm:$0xff] %vm3260, %v3195
  %3277 = vst.msk [vmem:[#allocation5 + $0x80] sm:$0xff] %vm3260, %v3197
  %3278 = vst.msk [vmem:[#allocation5 + $0x88] sm:$0xff] %vm3260, %v3199
  %3279 = vst.msk [vmem:[#allocation5 + $0x90] sm:$0xff] %vm3260, %v3201
  %3280 = vst.msk [vmem:[#allocation5 + $0x98] sm:$0xff] %vm3260, %v3203
  %3281 = vst.msk [vmem:[#allocation5 + $0xa0] sm:$0xff] %vm3260, %v3205
  %3282 = vst.msk [vmem:[#allocation5 + $0xa8] sm:$0xff] %vm3260, %v3207
  %3283 = vst.msk [vmem:[#allocation5 + $0xb0] sm:$0xff] %vm3260, %v3209
  %3284 = vst.msk [vmem:[#allocation5 + $0xb8] sm:$0xff] %vm3260, %v3211
  %3285 = vst.msk [vmem:[#allocation5 + $0xc0] sm:$0xff] %vm3260, %v3213
  %3286 = vst.msk [vmem:[#allocation5 + $0xc8] sm:$0xff] %vm3260, %v3215
  %3287 = vst.msk [vmem:[#allocation5 + $0xd0] sm:$0xff] %vm3260, %v3217
  %3288 = vst.msk [vmem:[#allocation5 + $0xd8] sm:$0xff] %vm3260, %v3219
  %3289 = vst.msk [vmem:[#allocation5 + $0xe0] sm:$0xff] %vm3260, %v3221
  %3290 = vst.msk [vmem:[#allocation5 + $0xe8] sm:$0xff] %vm3260, %v3223
  %3291 = vst.msk [vmem:[#allocation5 + $0xf0] sm:$0xff] %vm3260, %v3225
  %3292 = vst.msk [vmem:[#allocation5 + $0xf8] sm:$0xff] %vm3260, %v3227
  %3297 = vrot.lane.b32.xlu0 %v3094, 32
  %v3298 = vpop.permute.xlu0 %3297
  %3299 = vrot.lane.b32.xlu0 %v3095, 32
  %v3300 = vpop.permute.xlu0 %3299
  %3301 = vrot.lane.b32.xlu0 %v3096, 32
  %v3302 = vpop.permute.xlu0 %3301
  %3303 = vrot.lane.b32.xlu0 %v3097, 32
  %v3304 = vpop.permute.xlu0 %3303
  %3305 = vrot.lane.b32.xlu0 %v3098, 32
  %v3306 = vpop.permute.xlu0 %3305
  %3307 = vrot.lane.b32.xlu0 %v3099, 32
  %v3308 = vpop.permute.xlu0 %3307
  %3309 = vrot.lane.b32.xlu0 %v3100, 32
  %v3310 = vpop.permute.xlu0 %3309
  %3311 = vrot.lane.b32.xlu0 %v3101, 32
  %v3312 = vpop.permute.xlu0 %3311
  %3313 = vrot.lane.b32.xlu0 %v3102, 32
  %v3314 = vpop.permute.xlu0 %3313
  %3315 = vrot.lane.b32.xlu0 %v3103, 32
  %v3316 = vpop.permute.xlu0 %3315
  %3317 = vrot.lane.b32.xlu0 %v3104, 32
  %v3318 = vpop.permute.xlu0 %3317
  %3319 = vrot.lane.b32.xlu0 %v3105, 32
  %v3320 = vpop.permute.xlu0 %3319
  %3321 = vrot.lane.b32.xlu0 %v3106, 32
  %v3322 = vpop.permute.xlu0 %3321
  %3323 = vrot.lane.b32.xlu0 %v3107, 32
  %v3324 = vpop.permute.xlu0 %3323
  %3325 = vrot.lane.b32.xlu0 %v3108, 32
  %v3326 = vpop.permute.xlu0 %3325
  %3327 = vrot.lane.b32.xlu0 %v3109, 32
  %v3328 = vpop.permute.xlu0 %3327
  %3329 = vrot.lane.b32.xlu0 %v3114, 32
  %v3330 = vpop.permute.xlu0 %3329
  %3331 = vrot.lane.b32.xlu0 %v3115, 32
  %v3332 = vpop.permute.xlu0 %3331
  %3333 = vrot.lane.b32.xlu0 %v3116, 32
  %v3334 = vpop.permute.xlu0 %3333
  %3335 = vrot.lane.b32.xlu0 %v3117, 32
  %v3336 = vpop.permute.xlu0 %3335
  %3337 = vrot.lane.b32.xlu0 %v3118, 32
  %v3338 = vpop.permute.xlu0 %3337
  %3339 = vrot.lane.b32.xlu0 %v3119, 32
  %v3340 = vpop.permute.xlu0 %3339
  %3341 = vrot.lane.b32.xlu0 %v3120, 32
  %v3342 = vpop.permute.xlu0 %3341
  %3343 = vrot.lane.b32.xlu0 %v3121, 32
  %v3344 = vpop.permute.xlu0 %3343
  %3345 = vrot.lane.b32.xlu0 %v3122, 32
  %v3346 = vpop.permute.xlu0 %3345
  %3347 = vrot.lane.b32.xlu0 %v3123, 32
  %v3348 = vpop.permute.xlu0 %3347
  %3349 = vrot.lane.b32.xlu0 %v3124, 32
  %v3350 = vpop.permute.xlu0 %3349
  %3351 = vrot.lane.b32.xlu0 %v3125, 32
  %v3352 = vpop.permute.xlu0 %3351
  %3353 = vrot.lane.b32.xlu0 %v3126, 32
  %v3354 = vpop.permute.xlu0 %3353
  %3355 = vrot.lane.b32.xlu0 %v3127, 32
  %v3356 = vpop.permute.xlu0 %3355
  %3357 = vrot.lane.b32.xlu0 %v3128, 32
  %v3358 = vpop.permute.xlu0 %3357
  %3359 = vrot.lane.b32.xlu0 %v3129, 32
  %v3360 = vpop.permute.xlu0 %3359
  %vm3393 = vcmask 326912
  %3394 = vst.msk [vmem:[#allocation5] sm:$0xff] %vm3393, %v3298
  %3395 = vst.msk [vmem:[#allocation5 + $0x8] sm:$0xff] %vm3393, %v3300
  %3396 = vst.msk [vmem:[#allocation5 + $0x10] sm:$0xff] %vm3393, %v3302
  %3397 = vst.msk [vmem:[#allocation5 + $0x18] sm:$0xff] %vm3393, %v3304
  %3398 = vst.msk [vmem:[#allocation5 + $0x20] sm:$0xff] %vm3393, %v3306
  %3399 = vst.msk [vmem:[#allocation5 + $0x28] sm:$0xff] %vm3393, %v3308
  %3400 = vst.msk [vmem:[#allocation5 + $0x30] sm:$0xff] %vm3393, %v3310
  %3401 = vst.msk [vmem:[#allocation5 + $0x38] sm:$0xff] %vm3393, %v3312
  %3402 = vst.msk [vmem:[#allocation5 + $0x40] sm:$0xff] %vm3393, %v3314
  %3403 = vst.msk [vmem:[#allocation5 + $0x48] sm:$0xff] %vm3393, %v3316
  %3404 = vst.msk [vmem:[#allocation5 + $0x50] sm:$0xff] %vm3393, %v3318
  %3405 = vst.msk [vmem:[#allocation5 + $0x58] sm:$0xff] %vm3393, %v3320
  %3406 = vst.msk [vmem:[#allocation5 + $0x60] sm:$0xff] %vm3393, %v3322
  %3407 = vst.msk [vmem:[#allocation5 + $0x68] sm:$0xff] %vm3393, %v3324
  %3408 = vst.msk [vmem:[#allocation5 + $0x70] sm:$0xff] %vm3393, %v3326
  %3409 = vst.msk [vmem:[#allocation5 + $0x78] sm:$0xff] %vm3393, %v3328
  %3410 = vst.msk [vmem:[#allocation5 + $0x80] sm:$0xff] %vm3393, %v3330
  %3411 = vst.msk [vmem:[#allocation5 + $0x88] sm:$0xff] %vm3393, %v3332
  %3412 = vst.msk [vmem:[#allocation5 + $0x90] sm:$0xff] %vm3393, %v3334
  %3413 = vst.msk [vmem:[#allocation5 + $0x98] sm:$0xff] %vm3393, %v3336
  %3414 = vst.msk [vmem:[#allocation5 + $0xa0] sm:$0xff] %vm3393, %v3338
  %3415 = vst.msk [vmem:[#allocation5 + $0xa8] sm:$0xff] %vm3393, %v3340
  %3416 = vst.msk [vmem:[#allocation5 + $0xb0] sm:$0xff] %vm3393, %v3342
  %3417 = vst.msk [vmem:[#allocation5 + $0xb8] sm:$0xff] %vm3393, %v3344
  %3418 = vst.msk [vmem:[#allocation5 + $0xc0] sm:$0xff] %vm3393, %v3346
  %3419 = vst.msk [vmem:[#allocation5 + $0xc8] sm:$0xff] %vm3393, %v3348
  %3420 = vst.msk [vmem:[#allocation5 + $0xd0] sm:$0xff] %vm3393, %v3350
  %3421 = vst.msk [vmem:[#allocation5 + $0xd8] sm:$0xff] %vm3393, %v3352
  %3422 = vst.msk [vmem:[#allocation5 + $0xe0] sm:$0xff] %vm3393, %v3354
  %3423 = vst.msk [vmem:[#allocation5 + $0xe8] sm:$0xff] %vm3393, %v3356
  %3424 = vst.msk [vmem:[#allocation5 + $0xf0] sm:$0xff] %vm3393, %v3358
  %3425 = vst.msk [vmem:[#allocation5 + $0xf8] sm:$0xff] %vm3393, %v3360
  %3430 = vrot.lane.b32.xlu0 %v3096, 56
  %v3431 = vpop.permute.xlu0 %3430
  %3432 = vrot.lane.b32.xlu0 %v3097, 56
  %v3433 = vpop.permute.xlu0 %3432
  %3434 = vrot.lane.b32.xlu0 %v3098, 56
  %v3435 = vpop.permute.xlu0 %3434
  %3436 = vrot.lane.b32.xlu0 %v3099, 56
  %v3437 = vpop.permute.xlu0 %3436
  %3438 = vrot.lane.b32.xlu0 %v3100, 56
  %v3439 = vpop.permute.xlu0 %3438
  %3440 = vrot.lane.b32.xlu0 %v3101, 56
  %v3441 = vpop.permute.xlu0 %3440
  %3442 = vrot.lane.b32.xlu0 %v3102, 56
  %v3443 = vpop.permute.xlu0 %3442
  %3444 = vrot.lane.b32.xlu0 %v3103, 56
  %v3445 = vpop.permute.xlu0 %3444
  %3446 = vrot.lane.b32.xlu0 %v3104, 56
  %v3447 = vpop.permute.xlu0 %3446
  %3448 = vrot.lane.b32.xlu0 %v3105, 56
  %v3449 = vpop.permute.xlu0 %3448
  %3450 = vrot.lane.b32.xlu0 %v3106, 56
  %v3451 = vpop.permute.xlu0 %3450
  %3452 = vrot.lane.b32.xlu0 %v3107, 56
  %v3453 = vpop.permute.xlu0 %3452
  %3454 = vrot.lane.b32.xlu0 %v3108, 56
  %v3455 = vpop.permute.xlu0 %3454
  %3456 = vrot.lane.b32.xlu0 %v3109, 56
  %v3457 = vpop.permute.xlu0 %3456
  %3458 = vrot.lane.b32.xlu0 %v3110, 56
  %v3459 = vpop.permute.xlu0 %3458
  %3460 = vrot.lane.b32.xlu0 %v3111, 56
  %v3461 = vpop.permute.xlu0 %3460
  %3462 = vrot.lane.b32.xlu0 %v3116, 56
  %v3463 = vpop.permute.xlu0 %3462
  %3464 = vrot.lane.b32.xlu0 %v3117, 56
  %v3465 = vpop.permute.xlu0 %3464
  %3466 = vrot.lane.b32.xlu0 %v3118, 56
  %v3467 = vpop.permute.xlu0 %3466
  %3468 = vrot.lane.b32.xlu0 %v3119, 56
  %v3469 = vpop.permute.xlu0 %3468
  %3470 = vrot.lane.b32.xlu0 %v3120, 56
  %v3471 = vpop.permute.xlu0 %3470
  %3472 = vrot.lane.b32.xlu0 %v3121, 56
  %v3473 = vpop.permute.xlu0 %3472
  %3474 = vrot.lane.b32.xlu0 %v3122, 56
  %v3475 = vpop.permute.xlu0 %3474
  %3476 = vrot.lane.b32.xlu0 %v3123, 56
  %v3477 = vpop.permute.xlu0 %3476
  %3478 = vrot.lane.b32.xlu0 %v3124, 56
  %v3479 = vpop.permute.xlu0 %3478
  %3480 = vrot.lane.b32.xlu0 %v3125, 56
  %v3481 = vpop.permute.xlu0 %3480
  %3482 = vrot.lane.b32.xlu0 %v3126, 56
  %v3483 = vpop.permute.xlu0 %3482
  %3484 = vrot.lane.b32.xlu0 %v3127, 56
  %v3485 = vpop.permute.xlu0 %3484
  %3486 = vrot.lane.b32.xlu0 %v3128, 56
  %v3487 = vpop.permute.xlu0 %3486
  %3488 = vrot.lane.b32.xlu0 %v3129, 56
  %v3489 = vpop.permute.xlu0 %3488
  %3490 = vrot.lane.b32.xlu0 %v3130, 56
  %v3491 = vpop.permute.xlu0 %3490
  %3492 = vrot.lane.b32.xlu0 %v3131, 56
  %v3493 = vpop.permute.xlu0 %3492
  %vm3526 = vcmask 523712
  %3527 = vst.msk [vmem:[#allocation5] sm:$0xff] %vm3526, %v3431
  %3528 = vst.msk [vmem:[#allocation5 + $0x8] sm:$0xff] %vm3526, %v3433
  %3529 = vst.msk [vmem:[#allocation5 + $0x10] sm:$0xff] %vm3526, %v3435
  %3530 = vst.msk [vmem:[#allocation5 + $0x18] sm:$0xff] %vm3526, %v3437
  %3531 = vst.msk [vmem:[#allocation5 + $0x20] sm:$0xff] %vm3526, %v3439
  %3532 = vst.msk [vmem:[#allocation5 + $0x28] sm:$0xff] %vm3526, %v3441
  %3533 = vst.msk [vmem:[#allocation5 + $0x30] sm:$0xff] %vm3526, %v3443
  %3534 = vst.msk [vmem:[#allocation5 + $0x38] sm:$0xff] %vm3526, %v3445
  %3535 = vst.msk [vmem:[#allocation5 + $0x40] sm:$0xff] %vm3526, %v3447
  %3536 = vst.msk [vmem:[#allocation5 + $0x48] sm:$0xff] %vm3526, %v3449
  %3537 = vst.msk [vmem:[#allocation5 + $0x50] sm:$0xff] %vm3526, %v3451
  %3538 = vst.msk [vmem:[#allocation5 + $0x58] sm:$0xff] %vm3526, %v3453
  %3539 = vst.msk [vmem:[#allocation5 + $0x60] sm:$0xff] %vm3526, %v3455
  %3540 = vst.msk [vmem:[#allocation5 + $0x68] sm:$0xff] %vm3526, %v3457
  %3541 = vst.msk [vmem:[#allocation5 + $0x70] sm:$0xff] %vm3526, %v3459
  %3542 = vst.msk [vmem:[#allocation5 + $0x78] sm:$0xff] %vm3526, %v3461
  %3543 = vst.msk [vmem:[#allocation5 + $0x80] sm:$0xff] %vm3526, %v3463
  %3544 = vst.msk [vmem:[#allocation5 + $0x88] sm:$0xff] %vm3526, %v3465
  %3545 = vst.msk [vmem:[#allocation5 + $0x90] sm:$0xff] %vm3526, %v3467
  %3546 = vst.msk [vmem:[#allocation5 + $0x98] sm:$0xff] %vm3526, %v3469
  %3547 = vst.msk [vmem:[#allocation5 + $0xa0] sm:$0xff] %vm3526, %v3471
  %3548 = vst.msk [vmem:[#allocation5 + $0xa8] sm:$0xff] %vm3526, %v3473
  %3549 = vst.msk [vmem:[#allocation5 + $0xb0] sm:$0xff] %vm3526, %v3475
  %3550 = vst.msk [vmem:[#allocation5 + $0xb8] sm:$0xff] %vm3526, %v3477
  %3551 = vst.msk [vmem:[#allocation5 + $0xc0] sm:$0xff] %vm3526, %v3479
  %3552 = vst.msk [vmem:[#allocation5 + $0xc8] sm:$0xff] %vm3526, %v3481
  %3553 = vst.msk [vmem:[#allocation5 + $0xd0] sm:$0xff] %vm3526, %v3483
  %3554 = vst.msk [vmem:[#allocation5 + $0xd8] sm:$0xff] %vm3526, %v3485
  %3555 = vst.msk [vmem:[#allocation5 + $0xe0] sm:$0xff] %vm3526, %v3487
  %3556 = vst.msk [vmem:[#allocation5 + $0xe8] sm:$0xff] %vm3526, %v3489
  %3557 = vst.msk [vmem:[#allocation5 + $0xf0] sm:$0xff] %vm3526, %v3491
  %3558 = vst.msk [vmem:[#allocation5 + $0xf8] sm:$0xff] %vm3526, %v3493
  %v3559 = vld [vmem:[#allocation3 + $0x9] sm:$0xff]
  %v3560 = vld [vmem:[#allocation3 + $0x11] sm:$0xff]
  %v3561 = vld [vmem:[#allocation3 + $0x19] sm:$0xff]
  %v3562 = vld [vmem:[#allocation3 + $0x21] sm:$0xff]
  %v3563 = vld [vmem:[#allocation3 + $0x29] sm:$0xff]
  %v3564 = vld [vmem:[#allocation3 + $0x31] sm:$0xff]
  %v3565 = vld [vmem:[#allocation3 + $0x39] sm:$0xff]
  %v3566 = vld [vmem:[#allocation3 + $0x41] sm:$0xff]
  %v3567 = vld [vmem:[#allocation3 + $0x49] sm:$0xff]
  %v3568 = vld [vmem:[#allocation3 + $0x51] sm:$0xff]
  %v3569 = vld [vmem:[#allocation3 + $0x59] sm:$0xff]
  %v3570 = vld [vmem:[#allocation3 + $0x61] sm:$0xff]
  %v3571 = vld [vmem:[#allocation3 + $0x69] sm:$0xff]
  %v3572 = vld [vmem:[#allocation3 + $0x71] sm:$0xff]
  %v3573 = vld [vmem:[#allocation3 + $0x79] sm:$0xff]
  %v3574 = vld [vmem:[#allocation3 + $0x81] sm:$0xff]
  %v3575 = vld [vmem:[#allocation3 + $0x89] sm:$0xff]
  %v3576 = vld [vmem:[#allocation3 + $0x91] sm:$0xff]
  %v3577 = vld [vmem:[#allocation3 + $0x99] sm:$0xff]
  %v3578 = vld [vmem:[#allocation3 + $0xa1] sm:$0xff]
  %v3579 = vld [vmem:[#allocation3 + $0xb9] sm:$0xff]
  %v3580 = vld [vmem:[#allocation3 + $0xc1] sm:$0xff]
  %v3581 = vld [vmem:[#allocation3 + $0xc9] sm:$0xff]
  %v3582 = vld [vmem:[#allocation3 + $0xd1] sm:$0xff]
  %v3583 = vld [vmem:[#allocation3 + $0xd9] sm:$0xff]
  %v3584 = vld [vmem:[#allocation3 + $0xe1] sm:$0xff]
  %v3585 = vld [vmem:[#allocation3 + $0xe9] sm:$0xff]
  %v3586 = vld [vmem:[#allocation3 + $0xf1] sm:$0xff]
  %v3587 = vld [vmem:[#allocation3 + $0xf9] sm:$0xff]
  %v3588 = vld [vmem:[#allocation3 + $0x101] sm:$0xff]
  %v3589 = vld [vmem:[#allocation3 + $0x109] sm:$0xff]
  %v3590 = vld [vmem:[#allocation3 + $0x111] sm:$0xff]
  %v3591 = vld [vmem:[#allocation3 + $0x119] sm:$0xff]
  %v3592 = vld [vmem:[#allocation3 + $0x121] sm:$0xff]
  %v3593 = vld [vmem:[#allocation3 + $0x129] sm:$0xff]
  %v3594 = vld [vmem:[#allocation3 + $0x131] sm:$0xff]
  %v3595 = vld [vmem:[#allocation3 + $0x139] sm:$0xff]
  %v3596 = vld [vmem:[#allocation3 + $0x141] sm:$0xff]
  %v3597 = vld [vmem:[#allocation3 + $0x149] sm:$0xff]
  %v3598 = vld [vmem:[#allocation3 + $0x151] sm:$0xff]
  %3631 = vrot.lane.b32.xlu0 %v3559, 16
  %v3632 = vpop.permute.xlu0 %3631
  %3633 = vrot.lane.b32.xlu0 %v3560, 16
  %v3634 = vpop.permute.xlu0 %3633
  %3635 = vrot.lane.b32.xlu0 %v3561, 16
  %v3636 = vpop.permute.xlu0 %3635
  %3637 = vrot.lane.b32.xlu0 %v3562, 16
  %v3638 = vpop.permute.xlu0 %3637
  %3639 = vrot.lane.b32.xlu0 %v3563, 16
  %v3640 = vpop.permute.xlu0 %3639
  %3641 = vrot.lane.b32.xlu0 %v3564, 16
  %v3642 = vpop.permute.xlu0 %3641
  %3643 = vrot.lane.b32.xlu0 %v3565, 16
  %v3644 = vpop.permute.xlu0 %3643
  %3645 = vrot.lane.b32.xlu0 %v3566, 16
  %v3646 = vpop.permute.xlu0 %3645
  %3647 = vrot.lane.b32.xlu0 %v3567, 16
  %v3648 = vpop.permute.xlu0 %3647
  %3649 = vrot.lane.b32.xlu0 %v3568, 16
  %v3650 = vpop.permute.xlu0 %3649
  %3651 = vrot.lane.b32.xlu0 %v3569, 16
  %v3652 = vpop.permute.xlu0 %3651
  %3653 = vrot.lane.b32.xlu0 %v3570, 16
  %v3654 = vpop.permute.xlu0 %3653
  %3655 = vrot.lane.b32.xlu0 %v3571, 16
  %v3656 = vpop.permute.xlu0 %3655
  %3657 = vrot.lane.b32.xlu0 %v3572, 16
  %v3658 = vpop.permute.xlu0 %3657
  %3659 = vrot.lane.b32.xlu0 %v3573, 16
  %v3660 = vpop.permute.xlu0 %3659
  %3661 = vrot.lane.b32.xlu0 %v3574, 16
  %v3662 = vpop.permute.xlu0 %3661
  %3663 = vrot.lane.b32.xlu0 %v3579, 16
  %v3664 = vpop.permute.xlu0 %3663
  %3665 = vrot.lane.b32.xlu0 %v3580, 16
  %v3666 = vpop.permute.xlu0 %3665
  %3667 = vrot.lane.b32.xlu0 %v3581, 16
  %v3668 = vpop.permute.xlu0 %3667
  %3669 = vrot.lane.b32.xlu0 %v3582, 16
  %v3670 = vpop.permute.xlu0 %3669
  %3671 = vrot.lane.b32.xlu0 %v3583, 16
  %v3672 = vpop.permute.xlu0 %3671
  %3673 = vrot.lane.b32.xlu0 %v3584, 16
  %v3674 = vpop.permute.xlu0 %3673
  %3675 = vrot.lane.b32.xlu0 %v3585, 16
  %v3676 = vpop.permute.xlu0 %3675
  %3677 = vrot.lane.b32.xlu0 %v3586, 16
  %v3678 = vpop.permute.xlu0 %3677
  %3679 = vrot.lane.b32.xlu0 %v3587, 16
  %v3680 = vpop.permute.xlu0 %3679
  %3681 = vrot.lane.b32.xlu0 %v3588, 16
  %v3682 = vpop.permute.xlu0 %3681
  %3683 = vrot.lane.b32.xlu0 %v3589, 16
  %v3684 = vpop.permute.xlu0 %3683
  %3685 = vrot.lane.b32.xlu0 %v3590, 16
  %v3686 = vpop.permute.xlu0 %3685
  %3687 = vrot.lane.b32.xlu0 %v3591, 16
  %v3688 = vpop.permute.xlu0 %3687
  %3689 = vrot.lane.b32.xlu0 %v3592, 16
  %v3690 = vpop.permute.xlu0 %3689
  %3691 = vrot.lane.b32.xlu0 %v3593, 16
  %v3692 = vpop.permute.xlu0 %3691
  %3693 = vrot.lane.b32.xlu0 %v3594, 16
  %v3694 = vpop.permute.xlu0 %3693
  %vm3727 = vcmask 195712
  %3728 = vst.msk [vmem:[#allocation5] sm:$0xff] %vm3727, %v3632
  %3729 = vst.msk [vmem:[#allocation5 + $0x8] sm:$0xff] %vm3727, %v3634
  %3730 = vst.msk [vmem:[#allocation5 + $0x10] sm:$0xff] %vm3727, %v3636
  %3731 = vst.msk [vmem:[#allocation5 + $0x18] sm:$0xff] %vm3727, %v3638
  %3732 = vst.msk [vmem:[#allocation5 + $0x20] sm:$0xff] %vm3727, %v3640
  %3733 = vst.msk [vmem:[#allocation5 + $0x28] sm:$0xff] %vm3727, %v3642
  %3734 = vst.msk [vmem:[#allocation5 + $0x30] sm:$0xff] %vm3727, %v3644
  %3735 = vst.msk [vmem:[#allocation5 + $0x38] sm:$0xff] %vm3727, %v3646
  %3736 = vst.msk [vmem:[#allocation5 + $0x40] sm:$0xff] %vm3727, %v3648
  %3737 = vst.msk [vmem:[#allocation5 + $0x48] sm:$0xff] %vm3727, %v3650
  %3738 = vst.msk [vmem:[#allocation5 + $0x50] sm:$0xff] %vm3727, %v3652
  %3739 = vst.msk [vmem:[#allocation5 + $0x58] sm:$0xff] %vm3727, %v3654
  %3740 = vst.msk [vmem:[#allocation5 + $0x60] sm:$0xff] %vm3727, %v3656
  %3741 = vst.msk [vmem:[#allocation5 + $0x68] sm:$0xff] %vm3727, %v3658
  %3742 = vst.msk [vmem:[#allocation5 + $0x70] sm:$0xff] %vm3727, %v3660
  %3743 = vst.msk [vmem:[#allocation5 + $0x78] sm:$0xff] %vm3727, %v3662
  %3744 = vst.msk [vmem:[#allocation5 + $0x80] sm:$0xff] %vm3727, %v3664
  %3745 = vst.msk [vmem:[#allocation5 + $0x88] sm:$0xff] %vm3727, %v3666
  %3746 = vst.msk [vmem:[#allocation5 + $0x90] sm:$0xff] %vm3727, %v3668
  %3747 = vst.msk [vmem:[#allocation5 + $0x98] sm:$0xff] %vm3727, %v3670
  %3748 = vst.msk [vmem:[#allocation5 + $0xa0] sm:$0xff] %vm3727, %v3672
  %3749 = vst.msk [vmem:[#allocation5 + $0xa8] sm:$0xff] %vm3727, %v3674
  %3750 = vst.msk [vmem:[#allocation5 + $0xb0] sm:$0xff] %vm3727, %v3676
  %3751 = vst.msk [vmem:[#allocation5 + $0xb8] sm:$0xff] %vm3727, %v3678
  %3752 = vst.msk [vmem:[#allocation5 + $0xc0] sm:$0xff] %vm3727, %v3680
  %3753 = vst.msk [vmem:[#allocation5 + $0xc8] sm:$0xff] %vm3727, %v3682
  %3754 = vst.msk [vmem:[#allocation5 + $0xd0] sm:$0xff] %vm3727, %v3684
  %3755 = vst.msk [vmem:[#allocation5 + $0xd8] sm:$0xff] %vm3727, %v3686
  %3756 = vst.msk [vmem:[#allocation5 + $0xe0] sm:$0xff] %vm3727, %v3688
  %3757 = vst.msk [vmem:[#allocation5 + $0xe8] sm:$0xff] %vm3727, %v3690
  %3758 = vst.msk [vmem:[#allocation5 + $0xf0] sm:$0xff] %vm3727, %v3692
  %3759 = vst.msk [vmem:[#allocation5 + $0xf8] sm:$0xff] %vm3727, %v3694
  %3764 = vrot.lane.b32.xlu0 %v3561, 40
  %v3765 = vpop.permute.xlu0 %3764
  %3766 = vrot.lane.b32.xlu0 %v3562, 40
  %v3767 = vpop.permute.xlu0 %3766
  %3768 = vrot.lane.b32.xlu0 %v3563, 40
  %v3769 = vpop.permute.xlu0 %3768
  %3770 = vrot.lane.b32.xlu0 %v3564, 40
  %v3771 = vpop.permute.xlu0 %3770
  %3772 = vrot.lane.b32.xlu0 %v3565, 40
  %v3773 = vpop.permute.xlu0 %3772
  %3774 = vrot.lane.b32.xlu0 %v3566, 40
  %v3775 = vpop.permute.xlu0 %3774
  %3776 = vrot.lane.b32.xlu0 %v3567, 40
  %v3777 = vpop.permute.xlu0 %3776
  %3778 = vrot.lane.b32.xlu0 %v3568, 40
  %v3779 = vpop.permute.xlu0 %3778
  %3780 = vrot.lane.b32.xlu0 %v3569, 40
  %v3781 = vpop.permute.xlu0 %3780
  %3782 = vrot.lane.b32.xlu0 %v3570, 40
  %v3783 = vpop.permute.xlu0 %3782
  %3784 = vrot.lane.b32.xlu0 %v3571, 40
  %v3785 = vpop.permute.xlu0 %3784
  %3786 = vrot.lane.b32.xlu0 %v3572, 40
  %v3787 = vpop.permute.xlu0 %3786
  %3788 = vrot.lane.b32.xlu0 %v3573, 40
  %v3789 = vpop.permute.xlu0 %3788
  %3790 = vrot.lane.b32.xlu0 %v3574, 40
  %v3791 = vpop.permute.xlu0 %3790
  %3792 = vrot.lane.b32.xlu0 %v3575, 40
  %v3793 = vpop.permute.xlu0 %3792
  %3794 = vrot.lane.b32.xlu0 %v3576, 40
  %v3795 = vpop.permute.xlu0 %3794
  %3796 = vrot.lane.b32.xlu0 %v3581, 40
  %v3797 = vpop.permute.xlu0 %3796
  %3798 = vrot.lane.b32.xlu0 %v3582, 40
  %v3799 = vpop.permute.xlu0 %3798
  %3800 = vrot.lane.b32.xlu0 %v3583, 40
  %v3801 = vpop.permute.xlu0 %3800
  %3802 = vrot.lane.b32.xlu0 %v3584, 40
  %v3803 = vpop.permute.xlu0 %3802
  %3804 = vrot.lane.b32.xlu0 %v3585, 40
  %v3805 = vpop.permute.xlu0 %3804
  %3806 = vrot.lane.b32.xlu0 %v3586, 40
  %v3807 = vpop.permute.xlu0 %3806
  %3808 = vrot.lane.b32.xlu0 %v3587, 40
  %v3809 = vpop.permute.xlu0 %3808
  %3810 = vrot.lane.b32.xlu0 %v3588, 40
  %v3811 = vpop.permute.xlu0 %3810
  %3812 = vrot.lane.b32.xlu0 %v3589, 40
  %v3813 = vpop.permute.xlu0 %3812
  %3814 = vrot.lane.b32.xlu0 %v3590, 40
  %v3815 = vpop.permute.xlu0 %3814
  %3816 = vrot.lane.b32.xlu0 %v3591, 40
  %v3817 = vpop.permute.xlu0 %3816
  %3818 = vrot.lane.b32.xlu0 %v3592, 40
  %v3819 = vpop.permute.xlu0 %3818
  %3820 = vrot.lane.b32.xlu0 %v3593, 40
  %v3821 = vpop.permute.xlu0 %3820
  %3822 = vrot.lane.b32.xlu0 %v3594, 40
  %v3823 = vpop.permute.xlu0 %3822
  %3824 = vrot.lane.b32.xlu0 %v3595, 40
  %v3825 = vpop.permute.xlu0 %3824
  %3826 = vrot.lane.b32.xlu0 %v3596, 40
  %v3827 = vpop.permute.xlu0 %3826
  %vm3860 = vcmask 392512
  %3861 = vst.msk [vmem:[#allocation5] sm:$0xff] %vm3860, %v3765
  %3862 = vst.msk [vmem:[#allocation5 + $0x8] sm:$0xff] %vm3860, %v3767
  %3863 = vst.msk [vmem:[#allocation5 + $0x10] sm:$0xff] %vm3860, %v3769
  %3864 = vst.msk [vmem:[#allocation5 + $0x18] sm:$0xff] %vm3860, %v3771
  %3865 = vst.msk [vmem:[#allocation5 + $0x20] sm:$0xff] %vm3860, %v3773
  %3866 = vst.msk [vmem:[#allocation5 + $0x28] sm:$0xff] %vm3860, %v3775
  %3867 = vst.msk [vmem:[#allocation5 + $0x30] sm:$0xff] %vm3860, %v3777
  %3868 = vst.msk [vmem:[#allocation5 + $0x38] sm:$0xff] %vm3860, %v3779
  %3869 = vst.msk [vmem:[#allocation5 + $0x40] sm:$0xff] %vm3860, %v3781
  %3870 = vst.msk [vmem:[#allocation5 + $0x48] sm:$0xff] %vm3860, %v3783
  %3871 = vst.msk [vmem:[#allocation5 + $0x50] sm:$0xff] %vm3860, %v3785
  %3872 = vst.msk [vmem:[#allocation5 + $0x58] sm:$0xff] %vm3860, %v3787
  %3873 = vst.msk [vmem:[#allocation5 + $0x60] sm:$0xff] %vm3860, %v3789
  %3874 = vst.msk [vmem:[#allocation5 + $0x68] sm:$0xff] %vm3860, %v3791
  %3875 = vst.msk [vmem:[#allocation5 + $0x70] sm:$0xff] %vm3860, %v3793
  %3876 = vst.msk [vmem:[#allocation5 + $0x78] sm:$0xff] %vm3860, %v3795
  %3877 = vst.msk [vmem:[#allocation5 + $0x80] sm:$0xff] %vm3860, %v3797
  %3878 = vst.msk [vmem:[#allocation5 + $0x88] sm:$0xff] %vm3860, %v3799
  %3879 = vst.msk [vmem:[#allocation5 + $0x90] sm:$0xff] %vm3860, %v3801
  %3880 = vst.msk [vmem:[#allocation5 + $0x98] sm:$0xff] %vm3860, %v3803
  %3881 = vst.msk [vmem:[#allocation5 + $0xa0] sm:$0xff] %vm3860, %v3805
  %3882 = vst.msk [vmem:[#allocation5 + $0xa8] sm:$0xff] %vm3860, %v3807
  %3883 = vst.msk [vmem:[#allocation5 + $0xb0] sm:$0xff] %vm3860, %v3809
  %3884 = vst.msk [vmem:[#allocation5 + $0xb8] sm:$0xff] %vm3860, %v3811
  %3885 = vst.msk [vmem:[#allocation5 + $0xc0] sm:$0xff] %vm3860, %v3813
  %3886 = vst.msk [vmem:[#allocation5 + $0xc8] sm:$0xff] %vm3860, %v3815
  %3887 = vst.msk [vmem:[#allocation5 + $0xd0] sm:$0xff] %vm3860, %v3817
  %3888 = vst.msk [vmem:[#allocation5 + $0xd8] sm:$0xff] %vm3860, %v3819
  %3889 = vst.msk [vmem:[#allocation5 + $0xe0] sm:$0xff] %vm3860, %v3821
  %3890 = vst.msk [vmem:[#allocation5 + $0xe8] sm:$0xff] %vm3860, %v3823
  %3891 = vst.msk [vmem:[#allocation5 + $0xf0] sm:$0xff] %vm3860, %v3825
  %3892 = vst.msk [vmem:[#allocation5 + $0xf8] sm:$0xff] %vm3860, %v3827
  %3897 = vrot.lane.b32.xlu0 %v3563, 64
  %v3898 = vpop.permute.xlu0 %3897
  %3899 = vrot.lane.b32.xlu0 %v3564, 64
  %v3900 = vpop.permute.xlu0 %3899
  %3901 = vrot.lane.b32.xlu0 %v3565, 64
  %v3902 = vpop.permute.xlu0 %3901
  %3903 = vrot.lane.b32.xlu0 %v3566, 64
  %v3904 = vpop.permute.xlu0 %3903
  %3905 = vrot.lane.b32.xlu0 %v3567, 64
  %v3906 = vpop.permute.xlu0 %3905
  %3907 = vrot.lane.b32.xlu0 %v3568, 64
  %v3908 = vpop.permute.xlu0 %3907
  %3909 = vrot.lane.b32.xlu0 %v3569, 64
  %v3910 = vpop.permute.xlu0 %3909
  %3911 = vrot.lane.b32.xlu0 %v3570, 64
  %v3912 = vpop.permute.xlu0 %3911
  %3913 = vrot.lane.b32.xlu0 %v3571, 64
  %v3914 = vpop.permute.xlu0 %3913
  %3915 = vrot.lane.b32.xlu0 %v3572, 64
  %v3916 = vpop.permute.xlu0 %3915
  %3917 = vrot.lane.b32.xlu0 %v3573, 64
  %v3918 = vpop.permute.xlu0 %3917
  %3919 = vrot.lane.b32.xlu0 %v3574, 64
  %v3920 = vpop.permute.xlu0 %3919
  %3921 = vrot.lane.b32.xlu0 %v3575, 64
  %v3922 = vpop.permute.xlu0 %3921
  %3923 = vrot.lane.b32.xlu0 %v3576, 64
  %v3924 = vpop.permute.xlu0 %3923
  %3925 = vrot.lane.b32.xlu0 %v3577, 64
  %v3926 = vpop.permute.xlu0 %3925
  %3927 = vrot.lane.b32.xlu0 %v3578, 64
  %v3928 = vpop.permute.xlu0 %3927
  %3929 = vrot.lane.b32.xlu0 %v3583, 64
  %v3930 = vpop.permute.xlu0 %3929
  %3931 = vrot.lane.b32.xlu0 %v3584, 64
  %v3932 = vpop.permute.xlu0 %3931
  %3933 = vrot.lane.b32.xlu0 %v3585, 64
  %v3934 = vpop.permute.xlu0 %3933
  %3935 = vrot.lane.b32.xlu0 %v3586, 64
  %v3936 = vpop.permute.xlu0 %3935
  %3937 = vrot.lane.b32.xlu0 %v3587, 64
  %v3938 = vpop.permute.xlu0 %3937
  %3939 = vrot.lane.b32.xlu0 %v3588, 64
  %v3940 = vpop.permute.xlu0 %3939
  %3941 = vrot.lane.b32.xlu0 %v3589, 64
  %v3942 = vpop.permute.xlu0 %3941
  %3943 = vrot.lane.b32.xlu0 %v3590, 64
  %v3944 = vpop.permute.xlu0 %3943
  %3945 = vrot.lane.b32.xlu0 %v3591, 64
  %v3946 = vpop.permute.xlu0 %3945
  %3947 = vrot.lane.b32.xlu0 %v3592, 64
  %v3948 = vpop.permute.xlu0 %3947
  %3949 = vrot.lane.b32.xlu0 %v3593, 64
  %v3950 = vpop.permute.xlu0 %3949
  %3951 = vrot.lane.b32.xlu0 %v3594, 64
  %v3952 = vpop.permute.xlu0 %3951
  %3953 = vrot.lane.b32.xlu0 %v3595, 64
  %v3954 = vpop.permute.xlu0 %3953
  %3955 = vrot.lane.b32.xlu0 %v3596, 64
  %v3956 = vpop.permute.xlu0 %3955
  %3957 = vrot.lane.b32.xlu0 %v3597, 64
  %v3958 = vpop.permute.xlu0 %3957
  %3959 = vrot.lane.b32.xlu0 %v3598, 64
  %v3960 = vpop.permute.xlu0 %3959
  %vm3993 = vcmask 589312
  %3994 = vst.msk [vmem:[#allocation5] sm:$0xff] %vm3993, %v3898
  %3995 = vst.msk [vmem:[#allocation5 + $0x8] sm:$0xff] %vm3993, %v3900
  %3996 = vst.msk [vmem:[#allocation5 + $0x10] sm:$0xff] %vm3993, %v3902
  %3997 = vst.msk [vmem:[#allocation5 + $0x18] sm:$0xff] %vm3993, %v3904
  %3998 = vst.msk [vmem:[#allocation5 + $0x20] sm:$0xff] %vm3993, %v3906
  %3999 = vst.msk [vmem:[#allocation5 + $0x28] sm:$0xff] %vm3993, %v3908
  %4000 = vst.msk [vmem:[#allocation5 + $0x30] sm:$0xff] %vm3993, %v3910
  %4001 = vst.msk [vmem:[#allocation5 + $0x38] sm:$0xff] %vm3993, %v3912
  %4002 = vst.msk [vmem:[#allocation5 + $0x40] sm:$0xff] %vm3993, %v3914
  %4003 = vst.msk [vmem:[#allocation5 + $0x48] sm:$0xff] %vm3993, %v3916
  %4004 = vst.msk [vmem:[#allocation5 + $0x50] sm:$0xff] %vm3993, %v3918
  %4005 = vst.msk [vmem:[#allocation5 + $0x58] sm:$0xff] %vm3993, %v3920
  %4006 = vst.msk [vmem:[#allocation5 + $0x60] sm:$0xff] %vm3993, %v3922
  %4007 = vst.msk [vmem:[#allocation5 + $0x68] sm:$0xff] %vm3993, %v3924
  %4008 = vst.msk [vmem:[#allocation5 + $0x70] sm:$0xff] %vm3993, %v3926
  %4009 = vst.msk [vmem:[#allocation5 + $0x78] sm:$0xff] %vm3993, %v3928
  %4010 = vst.msk [vmem:[#allocation5 + $0x80] sm:$0xff] %vm3993, %v3930
  %4011 = vst.msk [vmem:[#allocation5 + $0x88] sm:$0xff] %vm3993, %v3932
  %4012 = vst.msk [vmem:[#allocation5 + $0x90] sm:$0xff] %vm3993, %v3934
  %4013 = vst.msk [vmem:[#allocation5 + $0x98] sm:$0xff] %vm3993, %v3936
  %4014 = vst.msk [vmem:[#allocation5 + $0xa0] sm:$0xff] %vm3993, %v3938
  %4015 = vst.msk [vmem:[#allocation5 + $0xa8] sm:$0xff] %vm3993, %v3940
  %4016 = vst.msk [vmem:[#allocation5 + $0xb0] sm:$0xff] %vm3993, %v3942
  %4017 = vst.msk [vmem:[#allocation5 + $0xb8] sm:$0xff] %vm3993, %v3944
  %4018 = vst.msk [vmem:[#allocation5 + $0xc0] sm:$0xff] %vm3993, %v3946
  %4019 = vst.msk [vmem:[#allocation5 + $0xc8] sm:$0xff] %vm3993, %v3948
  %4020 = vst.msk [vmem:[#allocation5 + $0xd0] sm:$0xff] %vm3993, %v3950
  %4021 = vst.msk [vmem:[#allocation5 + $0xd8] sm:$0xff] %vm3993, %v3952
  %4022 = vst.msk [vmem:[#allocation5 + $0xe0] sm:$0xff] %vm3993, %v3954
  %4023 = vst.msk [vmem:[#allocation5 + $0xe8] sm:$0xff] %vm3993, %v3956
  %4024 = vst.msk [vmem:[#allocation5 + $0xf0] sm:$0xff] %vm3993, %v3958
  %4025 = vst.msk [vmem:[#allocation5 + $0xf8] sm:$0xff] %vm3993, %v3960
  %v4026 = vld [vmem:[#allocation5] sm:$0xff]
  %v4027 = vld [vmem:[#allocation5 + $0x8] sm:$0xff]
  %v4028 = vld [vmem:[#allocation5 + $0x10] sm:$0xff]
  %v4029 = vld [vmem:[#allocation5 + $0x18] sm:$0xff]
  %v4030 = vld [vmem:[#allocation5 + $0x20] sm:$0xff]
  %v4031 = vld [vmem:[#allocation5 + $0x28] sm:$0xff]
  %v4032 = vld [vmem:[#allocation5 + $0x30] sm:$0xff]
  %v4033 = vld [vmem:[#allocation5 + $0x38] sm:$0xff]
  %v4034 = vld [vmem:[#allocation5 + $0x40] sm:$0xff]
  %v4035 = vld [vmem:[#allocation5 + $0x48] sm:$0xff]
  %v4036 = vld [vmem:[#allocation5 + $0x50] sm:$0xff]
  %v4037 = vld [vmem:[#allocation5 + $0x58] sm:$0xff]
  %v4038 = vld [vmem:[#allocation5 + $0x60] sm:$0xff]
  %v4039 = vld [vmem:[#allocation5 + $0x68] sm:$0xff]
  %v4040 = vld [vmem:[#allocation5 + $0x70] sm:$0xff]
  %v4041 = vld [vmem:[#allocation5 + $0x78] sm:$0xff]
  %v4042 = vld [vmem:[#allocation5 + $0x80] sm:$0xff]
  %v4043 = vld [vmem:[#allocation5 + $0x88] sm:$0xff]
  %v4044 = vld [vmem:[#allocation5 + $0x90] sm:$0xff]
  %v4045 = vld [vmem:[#allocation5 + $0x98] sm:$0xff]
  %v4046 = vld [vmem:[#allocation5 + $0xa0] sm:$0xff]
  %v4047 = vld [vmem:[#allocation5 + $0xa8] sm:$0xff]
  %v4048 = vld [vmem:[#allocation5 + $0xb0] sm:$0xff]
  %v4049 = vld [vmem:[#allocation5 + $0xb8] sm:$0xff]
  %v4050 = vld [vmem:[#allocation5 + $0xc0] sm:$0xff]
  %v4051 = vld [vmem:[#allocation5 + $0xc8] sm:$0xff]
  %v4052 = vld [vmem:[#allocation5 + $0xd0] sm:$0xff]
  %v4053 = vld [vmem:[#allocation5 + $0xd8] sm:$0xff]
  %v4054 = vld [vmem:[#allocation5 + $0xe0] sm:$0xff]
  %v4055 = vld [vmem:[#allocation5 + $0xe8] sm:$0xff]
  %v4056 = vld [vmem:[#allocation5 + $0xf0] sm:$0xff]
  %v4057 = vld [vmem:[#allocation5 + $0xf8] sm:$0xff]
  %v4058 = vld [vmem:[%s3] sm:$0xff]
  %v4059 = vld [vmem:[%s3 + $0x8] sm:$0xff]
  %v4060 = vld [vmem:[%s3 + $0x10] sm:$0xff]
  %v4061 = vld [vmem:[%s3 + $0x18] sm:$0xff]
  %v4062 = vld [vmem:[%s3 + $0x20] sm:$0xff]
  %v4063 = vld [vmem:[%s3 + $0x28] sm:$0xff]
  %v4064 = vld [vmem:[%s3 + $0x30] sm:$0xff]
  %v4065 = vld [vmem:[%s3 + $0x38] sm:$0xff]
  %v4066 = vld [vmem:[%s3 + $0x40] sm:$0xff]
  %v4067 = vld [vmem:[%s4] sm:$0x1]
  %v4069 = vperm.slane %v4067, 0
  %vm4071 = vcmask 588800
  %v4073 = vsel %vm4071, %v4026, 0
  %v4076 = vsel %vm4071, %v4027, 0
  %v4079 = vsel %vm4071, %v4028, 0
  %v4082 = vsel %vm4071, %v4029, 0
  %v4085 = vsel %vm4071, %v4030, 0
  %v4088 = vsel %vm4071, %v4031, 0
  %v4091 = vsel %vm4071, %v4032, 0
  %v4094 = vsel %vm4071, %v4033, 0
  %v4097 = vsel %vm4071, %v4034, 0
  %v4100 = vsel %vm4071, %v4035, 0
  %v4103 = vsel %vm4071, %v4036, 0
  %v4106 = vsel %vm4071, %v4037, 0
  %v4109 = vsel %vm4071, %v4038, 0
  %v4112 = vsel %vm4071, %v4039, 0
  %v4115 = vsel %vm4071, %v4040, 0
  %v4118 = vsel %vm4071, %v4041, 0
  %v4121 = vsel %vm4071, %v4042, 0
  %v4124 = vsel %vm4071, %v4043, 0
  %v4127 = vsel %vm4071, %v4044, 0
  %v4130 = vsel %vm4071, %v4045, 0
  %v4133 = vsel %vm4071, %v4046, 0
  %v4136 = vsel %vm4071, %v4047, 0
  %v4139 = vsel %vm4071, %v4048, 0
  %v4142 = vsel %vm4071, %v4049, 0
  %v4145 = vsel %vm4071, %v4050, 0
  %v4148 = vsel %vm4071, %v4051, 0
  %v4151 = vsel %vm4071, %v4052, 0
  %v4154 = vsel %vm4071, %v4053, 0
  %v4157 = vsel %vm4071, %v4054, 0
  %v4160 = vsel %vm4071, %v4055, 0
  %v4163 = vsel %vm4071, %v4056, 0
  %v4166 = vsel %vm4071, %v4057, 0
  %4168 = vmatpush.msra.mxu0 0.0
  %4169 = vmatpush.msra.mxu0 0.0
  %4170 = vmatpush.msra.mxu0 0.0
  %4171 = vmatpush.msra.mxu0 0.0
  %4172 = vmatpush.msra.mxu0 0.0
  %4173 = vmatpush.msra.mxu0 0.0
  %4174 = vmatpush.msra.mxu0 0.0
  %4175 = vmatpush.msra.mxu0 %v4066
  %4176 = vmatpush.msra.mxu0 %v4065
  %4177 = vmatpush.msra.mxu0 %v4064
  %4178 = vmatpush.msra.mxu0 %v4063
  %4179 = vmatpush.msra.mxu0 %v4062
  %4180 = vmatpush.msra.mxu0 %v4061
  %4181 = vmatpush.msra.mxu0 %v4060
  %4182 = vmatpush.msra.mxu0 %v4059
  %4183 = vmatpush.msra.mxu0 %v4058
  %4184 = vmatmul.f32.gmra.mxu0 %v4073
  %v4185 = vpop.f32.mrf.mxu0
  %v4186 = vadd.f32 %v4069, %v4185
  %4187 = vmatmul.f32.gmra.mxu0 %v4076
  %v4188 = vpop.f32.mrf.mxu0
  %v4189 = vadd.f32 %v4069, %v4188
  %4190 = vmatmul.f32.gmra.mxu0 %v4079
  %v4191 = vpop.f32.mrf.mxu0
  %v4192 = vadd.f32 %v4069, %v4191
  %4193 = vmatmul.f32.gmra.mxu0 %v4082
  %v4194 = vpop.f32.mrf.mxu0
  %v4195 = vadd.f32 %v4069, %v4194
  %4196 = vmatmul.f32.gmra.mxu0 %v4085
  %v4197 = vpop.f32.mrf.mxu0
  %v4198 = vadd.f32 %v4069, %v4197
  %4199 = vmatmul.f32.gmra.mxu0 %v4088
  %v4200 = vpop.f32.mrf.mxu0
  %v4201 = vadd.f32 %v4069, %v4200
  %4202 = vmatmul.f32.gmra.mxu0 %v4091
  %v4203 = vpop.f32.mrf.mxu0
  %v4204 = vadd.f32 %v4069, %v4203
  %4205 = vmatmul.f32.gmra.mxu0 %v4094
  %v4206 = vpop.f32.mrf.mxu0
  %v4207 = vadd.f32 %v4069, %v4206
  %4208 = vmatmul.f32.gmra.mxu0 %v4097
  %v4209 = vpop.f32.mrf.mxu0
  %v4210 = vadd.f32 %v4069, %v4209
  %4211 = vmatmul.f32.gmra.mxu0 %v4100
  %v4212 = vpop.f32.mrf.mxu0
  %v4213 = vadd.f32 %v4069, %v4212
  %4214 = vmatmul.f32.gmra.mxu0 %v4103
  %v4215 = vpop.f32.mrf.mxu0
  %v4216 = vadd.f32 %v4069, %v4215
  %4217 = vmatmul.f32.gmra.mxu0 %v4106
  %v4218 = vpop.f32.mrf.mxu0
  %v4219 = vadd.f32 %v4069, %v4218
  %4220 = vmatmul.f32.gmra.mxu0 %v4109
  %v4221 = vpop.f32.mrf.mxu0
  %v4222 = vadd.f32 %v4069, %v4221
  %4223 = vmatmul.f32.gmra.mxu0 %v4112
  %v4224 = vpop.f32.mrf.mxu0
  %v4225 = vadd.f32 %v4069, %v4224
  %4226 = vmatmul.f32.gmra.mxu0 %v4115
  %v4227 = vpop.f32.mrf.mxu0
  %v4228 = vadd.f32 %v4069, %v4227
  %4229 = vmatmul.f32.gmra.mxu0 %v4118
  %v4230 = vpop.f32.mrf.mxu0
  %v4231 = vadd.f32 %v4069, %v4230
  %4232 = vmatmul.f32.gmra.mxu0 %v4121
  %v4233 = vpop.f32.mrf.mxu0
  %v4234 = vadd.f32 %v4069, %v4233
  %4235 = vmatmul.f32.gmra.mxu0 %v4124
  %v4236 = vpop.f32.mrf.mxu0
  %v4237 = vadd.f32 %v4069, %v4236
  %4238 = vmatmul.f32.gmra.mxu0 %v4127
  %v4239 = vpop.f32.mrf.mxu0
  %v4240 = vadd.f32 %v4069, %v4239
  %4241 = vmatmul.f32.gmra.mxu0 %v4130
  %v4242 = vpop.f32.mrf.mxu0
  %v4243 = vadd.f32 %v4069, %v4242
  %4244 = vmatmul.f32.gmra.mxu0 %v4133
  %v4245 = vpop.f32.mrf.mxu0
  %v4246 = vadd.f32 %v4069, %v4245
  %4247 = vmatmul.f32.gmra.mxu0 %v4136
  %v4248 = vpop.f32.mrf.mxu0
  %v4249 = vadd.f32 %v4069, %v4248
  %4250 = vmatmul.f32.gmra.mxu0 %v4139
  %v4251 = vpop.f32.mrf.mxu0
  %v4252 = vadd.f32 %v4069, %v4251
  %4253 = vmatmul.f32.gmra.mxu0 %v4142
  %v4254 = vpop.f32.mrf.mxu0
  %v4255 = vadd.f32 %v4069, %v4254
  %4256 = vmatmul.f32.gmra.mxu0 %v4145
  %v4257 = vpop.f32.mrf.mxu0
  %v4258 = vadd.f32 %v4069, %v4257
  %4259 = vmatmul.f32.gmra.mxu0 %v4148
  %v4260 = vpop.f32.mrf.mxu0
  %v4261 = vadd.f32 %v4069, %v4260
  %4262 = vmatmul.f32.gmra.mxu0 %v4151
  %v4263 = vpop.f32.mrf.mxu0
  %v4264 = vadd.f32 %v4069, %v4263
  %4265 = vmatmul.f32.gmra.mxu0 %v4154
  %v4266 = vpop.f32.mrf.mxu0
  %v4267 = vadd.f32 %v4069, %v4266
  %4268 = vmatmul.f32.gmra.mxu0 %v4157
  %v4269 = vpop.f32.mrf.mxu0
  %v4270 = vadd.f32 %v4069, %v4269
  %4271 = vmatmul.f32.gmra.mxu0 %v4160
  %v4272 = vpop.f32.mrf.mxu0
  %v4273 = vadd.f32 %v4069, %v4272
  %4274 = vmatmul.f32.gmra.mxu0 %v4163
  %v4275 = vpop.f32.mrf.mxu0
  %v4276 = vadd.f32 %v4069, %v4275
  %4277 = vmatmul.f32.gmra.mxu0 %v4166
  %v4278 = vpop.f32.mrf.mxu0
  %v4279 = vadd.f32 %v4069, %v4278
  %4280 = vdwg.mxu0
  %v4281 = vmax.f32 %v4186, 0.0
  %v4282 = vmax.f32 %v4189, 0.0
  %v4283 = vmax.f32 %v4192, 0.0
  %v4284 = vmax.f32 %v4195, 0.0
  %v4285 = vmax.f32 %v4198, 0.0
  %v4286 = vmax.f32 %v4201, 0.0
  %v4287 = vmax.f32 %v4204, 0.0
  %v4288 = vmax.f32 %v4207, 0.0
  %v4289 = vmax.f32 %v4210, 0.0
  %v4290 = vmax.f32 %v4213, 0.0
  %v4291 = vmax.f32 %v4216, 0.0
  %v4292 = vmax.f32 %v4219, 0.0
  %v4293 = vmax.f32 %v4222, 0.0
  %v4294 = vmax.f32 %v4225, 0.0
  %v4295 = vmax.f32 %v4228, 0.0
  %v4296 = vmax.f32 %v4231, 0.0
  %v4297 = vmax.f32 %v4234, 0.0
  %v4298 = vmax.f32 %v4237, 0.0
  %v4299 = vmax.f32 %v4240, 0.0
  %v4300 = vmax.f32 %v4243, 0.0
  %v4301 = vmax.f32 %v4246, 0.0
  %v4302 = vmax.f32 %v4249, 0.0
  %v4303 = vmax.f32 %v4252, 0.0
  %v4304 = vmax.f32 %v4255, 0.0
  %v4305 = vmax.f32 %v4258, 0.0
  %v4306 = vmax.f32 %v4261, 0.0
  %v4307 = vmax.f32 %v4264, 0.0
  %v4308 = vmax.f32 %v4267, 0.0
  %v4309 = vmax.f32 %v4270, 0.0
  %v4310 = vmax.f32 %v4273, 0.0
  %v4311 = vmax.f32 %v4276, 0.0
  %v4312 = vmax.f32 %v4279, 0.0
  %4313 = vst.msk [vmem:[%s5] sm:$0xff] %vm2681, %v4281
  %4314 = vst.msk [vmem:[%s5 + $0x8] sm:$0xff] %vm2681, %v4282
  %4315 = vst.msk [vmem:[%s5 + $0x10] sm:$0xff] %vm2681, %v4283
  %4316 = vst.msk [vmem:[%s5 + $0x18] sm:$0xff] %vm2681, %v4284
  %4317 = vst.msk [vmem:[%s5 + $0x20] sm:$0xff] %vm2681, %v4285
  %4318 = vst.msk [vmem:[%s5 + $0x28] sm:$0xff] %vm2681, %v4286
  %4319 = vst.msk [vmem:[%s5 + $0x30] sm:$0xff] %vm2681, %v4287
  %4320 = vst.msk [vmem:[%s5 + $0x38] sm:$0xff] %vm2681, %v4288
  %4321 = vst.msk [vmem:[%s5 + $0x40] sm:$0xff] %vm2681, %v4289
  %4322 = vst.msk [vmem:[%s5 + $0x48] sm:$0xff] %vm2681, %v4290
  %4323 = vst.msk [vmem:[%s5 + $0x50] sm:$0xff] %vm2681, %v4291
  %4324 = vst.msk [vmem:[%s5 + $0x58] sm:$0xff] %vm2681, %v4292
  %4325 = vst.msk [vmem:[%s5 + $0x60] sm:$0xff] %vm2681, %v4293
  %4326 = vst.msk [vmem:[%s5 + $0x68] sm:$0xff] %vm2681, %v4294
  %4327 = vst.msk [vmem:[%s5 + $0x70] sm:$0xff] %vm2681, %v4295
  %4328 = vst.msk [vmem:[%s5 + $0x78] sm:$0xff] %vm2681, %v4296
  %4329 = vst.msk [vmem:[%s5 + $0x80] sm:$0xff] %vm2681, %v4297
  %4330 = vst.msk [vmem:[%s5 + $0x88] sm:$0xff] %vm2681, %v4298
  %4331 = vst.msk [vmem:[%s5 + $0x90] sm:$0xff] %vm2681, %v4299
  %4332 = vst.msk [vmem:[%s5 + $0x98] sm:$0xff] %vm2681, %v4300
  %4333 = vst.msk [vmem:[%s5 + $0xa0] sm:$0xff] %vm2681, %v4301
  %4334 = vst.msk [vmem:[%s5 + $0xa8] sm:$0xff] %vm2681, %v4302
  %4335 = vst.msk [vmem:[%s5 + $0xb0] sm:$0xff] %vm2681, %v4303
  %4336 = vst.msk [vmem:[%s5 + $0xb8] sm:$0xff] %vm2681, %v4304
  %4337 = vst.msk [vmem:[%s5 + $0xc0] sm:$0xff] %vm2681, %v4305
  %4338 = vst.msk [vmem:[%s5 + $0xc8] sm:$0xff] %vm2681, %v4306
  %4339 = vst.msk [vmem:[%s5 + $0xd0] sm:$0xff] %vm2681, %v4307
  %4340 = vst.msk [vmem:[%s5 + $0xd8] sm:$0xff] %vm2681, %v4308
  %4341 = vst.msk [vmem:[%s5 + $0xe0] sm:$0xff] %vm2681, %v4309
  %4342 = vst.msk [vmem:[%s5 + $0xe8] sm:$0xff] %vm2681, %v4310
  %4343 = vst.msk [vmem:[%s5 + $0xf0] sm:$0xff] %vm2681, %v4311
  %4344 = vst.msk [vmem:[%s5 + $0xf8] sm:$0xff] %vm2681, %v4312
  // Predicated region
  $region22: #{down_conv_forward.1} parent=0 // pred_check
    _
  $region23: #{down_conv_forward.1} parent=0 // pred_check_branch
    %4346 = sbr.rel (0) target = $region25
  $region24: #{down_conv_forward.1} parent=0 // pred_region
    _
  $region25: #{down_conv_forward.1} parent=0 // pred_fallthru
    _
  // Predicated region
  $region26: #{down_conv_forward.1} parent=0 // pred_check
    _
  $region27: #{down_conv_forward.1} parent=0 // pred_check_branch
    %4348 = sbr.rel (0) target = $region29
  $region28: #{down_conv_forward.1} parent=0 // pred_region
    _
  $region29: #{down_conv_forward.1} parent=0 // pred_fallthru
    _

</llo_original>
